<compile_context>
chip_gen: v7x
topology: tpu7x:2x2x1
jax: 0.10.0
libtpu: 0.0.40
codegen_flags: <defaults>
</compile_context>

<pallas_src>
import functools
import math

import jax
import jax.numpy as jnp
from jax import lax
from jax.experimental import pallas as pl
from jax.experimental.pallas import tpu as pltpu  # noqa: F401  (kept for TPU-specific tuning hooks)


# -----------------------------------------------------------------------------
# Fused Pallas kernel: entire forward pass
# -----------------------------------------------------------------------------
def _fused_kernel(x_ref, feat_ref,
                  wi1f_ref, wh1f_ref, b1f_ref,
                  wi1b_ref, wh1b_ref, b1b_ref,
                  wi2f_ref, wh2f_ref, b2f_ref,
                  wi2b_ref, wh2b_ref, b2b_ref,
                  gs_ref, bs_ref, ms_ref, vs_ref, ws_ref,
                  gf_ref, bf_ref, mf_ref, vf_ref, wf_ref,
                  fcb_ref,
                  out_ref,
                  *, T, B, H):
    """x_ref: (T*B, Din) time-major rows (row = t*B + b); out_ref: (B, T)."""

    def lstm_direction(x2d, wi, wh, b, reverse):
        # Hoisted input projection: one (T*B, Din) @ (Din, 4H) matmul, bias folded in.
        xp = jnp.dot(x2d, wi, preferred_element_type=jnp.float32) + b      # (T*B, 4H)
        h = jnp.zeros((B, H), jnp.float32)
        c = jnp.zeros((B, H), jnp.float32)
        outs = [None] * T
        steps = range(T - 1, -1, -1) if reverse else range(T)
        for t in steps:                      # fully unrolled; h/c stay in vregs
            gates = xp[t * B:(t + 1) * B, :] + jnp.dot(
                h, wh, preferred_element_type=jnp.float32)                 # (B, 4H)
            i_g = jax.nn.sigmoid(gates[:, 0:H])
            f_g = jax.nn.sigmoid(gates[:, H:2 * H])
            g_g = jnp.tanh(gates[:, 2 * H:3 * H])
            o_g = jax.nn.sigmoid(gates[:, 3 * H:4 * H])
            c = f_g * c + i_g * g_g
            h = o_g * jnp.tanh(c)
            outs[t] = h
        return outs                          # list of (B, H), time-ordered

    x2d = x_ref[...]                                                        # (T*B, Din)

    # ---- LSTM layer 1 (bidirectional) ----
    f1 = lstm_direction(x2d, wi1f_ref[...], wh1f_ref[...], b1f_ref[...], reverse=False)
    r1 = lstm_direction(x2d, wi1b_ref[...], wh1b_ref[...], b1b_ref[...], reverse=True)
    h1 = jnp.concatenate(
        [jnp.concatenate([f1[t], r1[t]], axis=1) for t in range(T)], axis=0)  # (T*B, 2H)

    # ---- LSTM layer 2 (bidirectional) ----
    f2 = lstm_direction(h1, wi2f_ref[...], wh2f_ref[...], b2f_ref[...], reverse=False)
    r2 = lstm_direction(h1, wi2b_ref[...], wh2b_ref[...], b2b_ref[...], reverse=True)
    seq = jnp.concatenate(
        [jnp.concatenate([f2[t], r2[t]], axis=1) for t in range(T)], axis=0)  # (T*B, 2H)

    # ---- Head: BatchNorm1d (eval) -> ReLU -> Linear(., 1) -> ReLU, per timestep ----
    eps = 1e-5
    scale_s = gs_ref[...] * lax.rsqrt(vs_ref[...] + eps)                    # (1, 2H)
    shift_s = bs_ref[...] - ms_ref[...] * scale_s
    a_s = jnp.maximum(seq * scale_s + shift_s, 0.0)                         # (T*B, 2H)
    part_s = jnp.dot(a_s, ws_ref[...], preferred_element_type=jnp.float32)  # (T*B, 1)

    scale_f = gf_ref[...] * lax.rsqrt(vf_ref[...] + eps)                    # (1, F)
    shift_f = bf_ref[...] - mf_ref[...] * scale_f
    a_f = jnp.maximum(feat_ref[...] * scale_f + shift_f, 0.0)               # (B, F)
    part_f = jnp.dot(a_f, wf_ref[...], preferred_element_type=jnp.float32)  # (B, 1)

    cols = [jnp.maximum(part_s[t * B:(t + 1) * B, :] + part_f + fcb_ref[...], 0.0)
            for t in range(T)]                                              # T x (B, 1)
    out_ref[...] = jnp.concatenate(cols, axis=1)                            # (B, T)


# -----------------------------------------------------------------------------
# Wrapper: pack parameters + single pallas_call
# -----------------------------------------------------------------------------
def respiratory_regression_forward(x_bdt, feature, params):
    """x_bdt: (B, input_dim, T)  [PyTorch NCL], feature: (B, feature_dim) -> (B, T)."""
    B, D, T = x_bdt.shape
    H = params["l1_fwd"][1][0].shape[0]
    H2 = 2 * H
    F = feature.shape[1]

    # time-major rows (row = t*B + b); the raw input is only consumed by the hoisted projection.
    x2d = jnp.transpose(x_bdt, (2, 0, 1)).reshape(T * B, D)

    def pack(direction):
        wi, wh, b = direction
        return (jnp.concatenate(wi, axis=1),       # (Din, 4H)  gate order i,f,g,o
                jnp.concatenate(wh, axis=1),       # (H, 4H)
                jnp.concatenate(b, axis=1))        # (1, 4H)    (b_ih + b_hh folded)

    packed = []
    for name in ("l1_fwd", "l1_bwd", "l2_fwd", "l2_bwd"):
        packed.extend(pack(params[name]))

    gamma, beta, mean, var = params["bn"]
    w, bias = params["fc"]

    def split_row(p):
        return p[:H2].reshape(1, H2), p[H2:].reshape(1, F)

    g_s, g_f = split_row(gamma)
    b_s, b_f = split_row(beta)
    m_s, m_f = split_row(mean)
    v_s, v_f = split_row(var)
    w_s = w[:H2].reshape(H2, 1)
    w_f = w[H2:].reshape(F, 1)
    fcb = bias.reshape(1, 1)

    kernel = functools.partial(_fused_kernel, T=T, B=B, H=H)
    return pl.pallas_call(
        kernel,
        out_shape=jax.ShapeDtypeStruct((B, T), jnp.float32),
    )(x2d, feature, *packed,
      g_s, b_s, m_s, v_s, w_s, g_f, b_f, m_f, v_f, w_f, fcb)


# -----------------------------------------------------------------------------
# Pure-JAX reference (for correctness check)
# -----------------------------------------------------------------------------
def _lstm_dir_ref(x, wi, wh, b, reverse):
    T, B, _ = x.shape
    H = wh[0].shape[0]
    h = jnp.zeros((B, H), jnp.float32)
    c = jnp.zeros((B, H), jnp.float32)
    out = [None] * T
    order = range(T - 1, -1, -1) if reverse else range(T)
    for t in order:
        xt = x[t]
        i = jax.nn.sigmoid(xt @ wi[0] + h @ wh[0] + b[0])
        f = jax.nn.sigmoid(xt @ wi[1] + h @ wh[1] + b[1])
        g = jnp.tanh(xt @ wi[2] + h @ wh[2] + b[2])
        o = jax.nn.sigmoid(xt @ wi[3] + h @ wh[3] + b[3])
        c = f * c + i * g
        h = o * jnp.tanh(c)
        out[t] = h
    return jnp.stack(out, axis=0)


def _forward_ref(x_bdt, feature, params):
    x = jnp.transpose(x_bdt, (2, 0, 1))
    l1f = _lstm_dir_ref(x, *params["l1_fwd"], reverse=False)
    l1b = _lstm_dir_ref(x, *params["l1_bwd"], reverse=True)
    h1 = jnp.concatenate([l1f, l1b], axis=-1)
    l2f = _lstm_dir_ref(h1, *params["l2_fwd"], reverse=False)
    l2b = _lstm_dir_ref(h1, *params["l2_bwd"], reverse=True)
    seq = jnp.concatenate([l2f, l2b], axis=-1)               # (T, B, 2H)
    gamma, beta, mean, var = params["bn"]
    w, bias = params["fc"]
    T, B, _ = seq.shape
    featb = jnp.broadcast_to(feature[None], (T, B, feature.shape[1]))
    z = jnp.concatenate([seq, featb], axis=-1)
    zn = (z - mean) / jnp.sqrt(var + 1e-5) * gamma + beta
    a = jnp.maximum(zn, 0.0)
    out = jnp.maximum(jnp.sum(a * w, axis=-1) + bias, 0.0)   # (T, B)
    return out.T


# -----------------------------------------------------------------------------
# Deterministic parameter init (shapes follow nn.LSTM/BatchNorm1d/Linear in __init__)
# -----------------------------------------------------------------------------
def _init_lstm_dir(key, din, h):
    ks = jax.random.split(key, 12)
    k = 1.0 / math.sqrt(h)
    u = lambda kk, shape: jax.random.uniform(kk, shape, jnp.float32, -k, k)
    wi = tuple(u(ks[i], (din, h)) for i in range(4))          # per-gate W_i{i,f,g,o}^T
    wh = tuple(u(ks[4 + i], (h, h)) for i in range(4))        # per-gate W_h{i,f,g,o}^T
    b = tuple(u(ks[8 + i], (1, h)) for i in range(4))         # b_ih + b_hh folded
    return (wi, wh, b)


def init_params(key, input_dim, hidden, feature_dim):
    keys = jax.random.split(key, 8)
    c = 2 * hidden + feature_dim
    kf = 1.0 / math.sqrt(c)
    params = {
        "l1_fwd": _init_lstm_dir(keys[0], input_dim, hidden),
        "l1_bwd": _init_lstm_dir(keys[1], input_dim, hidden),
        "l2_fwd": _init_lstm_dir(keys[2], 2 * hidden, hidden),
        "l2_bwd": _init_lstm_dir(keys[3], 2 * hidden, hidden),
        "bn": (
            jax.random.uniform(keys[4], (c,), jnp.float32, 0.5, 1.5),    # gamma
            0.1 * jax.random.normal(keys[5], (c,), jnp.float32),          # beta
            0.1 * jax.random.normal(keys[6], (c,), jnp.float32),          # running_mean
            jax.random.uniform(keys[7], (c,), jnp.float32, 0.5, 1.5),     # running_var
        ),
        "fc": (
            jax.random.uniform(jax.random.fold_in(key, 100), (c,), jnp.float32, -kf, kf),
            jax.random.uniform(jax.random.fold_in(key, 101), (1,), jnp.float32, -kf, kf),
        ),
    }
    return params


# -----------------------------------------------------------------------------
if __name__ == "__main__":
    B, D, T = 2, 16, 8          # batch, input_dim, sequence length
    H = 10                      # hidden_size fixed by the module
    F = 4                       # feature_dim

    key = jax.random.PRNGKey(0)
    kx, kf, kp = jax.random.split(key, 3)
    x = jax.random.normal(kx, (B, D, T), jnp.float32)        # PyTorch (N, C, L)
    feature = jax.random.normal(kf, (B, F), jnp.float32)
    params = init_params(kp, D, H, F)

    out = respiratory_regression_forward(x, feature, params)  # (B, T)
    out = jax.block_until_ready(out)

    ref = _forward_ref(x, feature, params)
    assert out.shape == (B, T), out.shape
    assert jnp.allclose(out, ref, atol=1e-3, rtol=1e-3), float(jnp.max(jnp.abs(out - ref)))

    print("KERNEL_OK")
</pallas_src>

<mosaic_0001>
module attributes {stable_mosaic.version = 11 : i64} {
  func.func @_fused_kernel(%arg0: memref<16x16xf32, #tpu.memory_space<vmem>>, %arg1: memref<2x4xf32, #tpu.memory_space<vmem>>, %arg2: memref<16x40xf32, #tpu.memory_space<vmem>>, %arg3: memref<10x40xf32, #tpu.memory_space<vmem>>, %arg4: memref<1x40xf32, #tpu.memory_space<vmem>>, %arg5: memref<16x40xf32, #tpu.memory_space<vmem>>, %arg6: memref<10x40xf32, #tpu.memory_space<vmem>>, %arg7: memref<1x40xf32, #tpu.memory_space<vmem>>, %arg8: memref<20x40xf32, #tpu.memory_space<vmem>>, %arg9: memref<10x40xf32, #tpu.memory_space<vmem>>, %arg10: memref<1x40xf32, #tpu.memory_space<vmem>>, %arg11: memref<20x40xf32, #tpu.memory_space<vmem>>, %arg12: memref<10x40xf32, #tpu.memory_space<vmem>>, %arg13: memref<1x40xf32, #tpu.memory_space<vmem>>, %arg14: memref<1x20xf32, #tpu.memory_space<vmem>>, %arg15: memref<1x20xf32, #tpu.memory_space<vmem>>, %arg16: memref<1x20xf32, #tpu.memory_space<vmem>>, %arg17: memref<1x20xf32, #tpu.memory_space<vmem>>, %arg18: memref<20x1xf32, #tpu.memory_space<vmem>>, %arg19: memref<1x4xf32, #tpu.memory_space<vmem>>, %arg20: memref<1x4xf32, #tpu.memory_space<vmem>>, %arg21: memref<1x4xf32, #tpu.memory_space<vmem>>, %arg22: memref<1x4xf32, #tpu.memory_space<vmem>>, %arg23: memref<4x1xf32, #tpu.memory_space<vmem>>, %arg24: memref<1x1xf32, #tpu.memory_space<vmem>>, %arg25: memref<2x8xf32, #tpu.memory_space<vmem>>) attributes {dimension_semantics = [], scalar_prefetch = 0 : i64, scratch_operands = 0 : i64, tpu.core_type = #tpu.core_type<tc>} {
    %c0 = arith.constant 0 : index
    %c0_0 = arith.constant 0 : index
    %0 = vector.load %arg0[%c0, %c0_0] : memref<16x16xf32, #tpu.memory_space<vmem>>, vector<16x16xf32>
    %c0_1 = arith.constant 0 : index
    %c0_2 = arith.constant 0 : index
    %1 = vector.load %arg2[%c0_1, %c0_2] : memref<16x40xf32, #tpu.memory_space<vmem>>, vector<16x40xf32>
    %c0_3 = arith.constant 0 : index
    %c0_4 = arith.constant 0 : index
    %2 = vector.load %arg3[%c0_3, %c0_4] : memref<10x40xf32, #tpu.memory_space<vmem>>, vector<10x40xf32>
    %c0_5 = arith.constant 0 : index
    %c0_6 = arith.constant 0 : index
    %3 = vector.load %arg4[%c0_5, %c0_6] : memref<1x40xf32, #tpu.memory_space<vmem>>, vector<1x40xf32>
    %cst = arith.constant dense<0.000000e+00> : vector<16x40xf32>
    %4 = tpu.matmul %0, %1, %cst {dimension_numbers = #tpu.dot_dimension_numbers<[1], [0], [0], [1], [0, 0, 1, 1], [], []>} : vector<16x16xf32>, vector<16x40xf32>, vector<16x40xf32> -> vector<16x40xf32>
    %5 = vector.broadcast %3 : vector<1x40xf32> to vector<16x40xf32>
    %6 = arith.addf %4, %5 : vector<16x40xf32>
    %cst_7 = arith.constant 0.000000e+00 : f32
    %7 = vector.broadcast %cst_7 : f32 to vector<2x10xf32>
    %cst_8 = arith.constant 0.000000e+00 : f32
    %8 = vector.broadcast %cst_8 : f32 to vector<2x10xf32>
    %9 = vector.extract_strided_slice %6 {offsets = [0, 0], sizes = [2, 40], strides = [1, 1]} : vector<16x40xf32> to vector<2x40xf32>
    %cst_9 = arith.constant dense<0.000000e+00> : vector<2x40xf32>
    %10 = tpu.matmul %7, %2, %cst_9 {dimension_numbers = #tpu.dot_dimension_numbers<[1], [0], [0], [1], [0, 0, 1, 1], [], []>} : vector<2x10xf32>, vector<10x40xf32>, vector<2x40xf32> -> vector<2x40xf32>
    %11 = arith.addf %9, %10 : vector<2x40xf32>
    %12 = vector.extract_strided_slice %11 {offsets = [0, 0], sizes = [2, 10], strides = [1, 1]} : vector<2x40xf32> to vector<2x10xf32>
    %13 = arith.negf %12 : vector<2x10xf32>
    %14 = math.exp %13 : vector<2x10xf32>
    %cst_10 = arith.constant 1.000000e+00 : f32
    %15 = vector.broadcast %cst_10 : f32 to vector<2x10xf32>
    %16 = arith.addf %15, %14 : vector<2x10xf32>
    %17 = arith.divf %15, %16 : vector<2x10xf32>
    %18 = vector.extract_strided_slice %11 {offsets = [0, 10], sizes = [2, 10], strides = [1, 1]} : vector<2x40xf32> to vector<2x10xf32>
    %19 = arith.negf %18 : vector<2x10xf32>
    %20 = math.exp %19 : vector<2x10xf32>
    %cst_11 = arith.constant 1.000000e+00 : f32
    %21 = vector.broadcast %cst_11 : f32 to vector<2x10xf32>
    %22 = arith.addf %21, %20 : vector<2x10xf32>
    %23 = arith.divf %21, %22 : vector<2x10xf32>
    %24 = vector.extract_strided_slice %11 {offsets = [0, 20], sizes = [2, 10], strides = [1, 1]} : vector<2x40xf32> to vector<2x10xf32>
    %25 = math.tanh %24 : vector<2x10xf32>
    %26 = vector.extract_strided_slice %11 {offsets = [0, 30], sizes = [2, 10], strides = [1, 1]} : vector<2x40xf32> to vector<2x10xf32>
    %27 = arith.negf %26 : vector<2x10xf32>
    %28 = math.exp %27 : vector<2x10xf32>
    %cst_12 = arith.constant 1.000000e+00 : f32
    %29 = vector.broadcast %cst_12 : f32 to vector<2x10xf32>
    %30 = arith.addf %29, %28 : vector<2x10xf32>
    %31 = arith.divf %29, %30 : vector<2x10xf32>
    %32 = arith.mulf %23, %8 : vector<2x10xf32>
    %33 = arith.mulf %17, %25 : vector<2x10xf32>
    %34 = arith.addf %32, %33 : vector<2x10xf32>
    %35 = math.tanh %34 : vector<2x10xf32>
    %36 = arith.mulf %31, %35 : vector<2x10xf32>
    %37 = vector.extract_strided_slice %6 {offsets = [2, 0], sizes = [2, 40], strides = [1, 1]} : vector<16x40xf32> to vector<2x40xf32>
    %cst_13 = arith.constant dense<0.000000e+00> : vector<2x40xf32>
    %38 = tpu.matmul %36, %2, %cst_13 {dimension_numbers = #tpu.dot_dimension_numbers<[1], [0], [0], [1], [0, 0, 1, 1], [], []>} : vector<2x10xf32>, vector<10x40xf32>, vector<2x40xf32> -> vector<2x40xf32>
    %39 = arith.addf %37, %38 : vector<2x40xf32>
    %40 = vector.extract_strided_slice %39 {offsets = [0, 0], sizes = [2, 10], strides = [1, 1]} : vector<2x40xf32> to vector<2x10xf32>
    %41 = arith.negf %40 : vector<2x10xf32>
    %42 = math.exp %41 : vector<2x10xf32>
    %cst_14 = arith.constant 1.000000e+00 : f32
    %43 = vector.broadcast %cst_14 : f32 to vector<2x10xf32>
    %44 = arith.addf %43, %42 : vector<2x10xf32>
    %45 = arith.divf %43, %44 : vector<2x10xf32>
    %46 = vector.extract_strided_slice %39 {offsets = [0, 10], sizes = [2, 10], strides = [1, 1]} : vector<2x40xf32> to vector<2x10xf32>
    %47 = arith.negf %46 : vector<2x10xf32>
    %48 = math.exp %47 : vector<2x10xf32>
    %cst_15 = arith.constant 1.000000e+00 : f32
    %49 = vector.broadcast %cst_15 : f32 to vector<2x10xf32>
    %50 = arith.addf %49, %48 : vector<2x10xf32>
    %51 = arith.divf %49, %50 : vector<2x10xf32>
    %52 = vector.extract_strided_slice %39 {offsets = [0, 20], sizes = [2, 10], strides = [1, 1]} : vector<2x40xf32> to vector<2x10xf32>
    %53 = math.tanh %52 : vector<2x10xf32>
    %54 = vector.extract_strided_slice %39 {offsets = [0, 30], sizes = [2, 10], strides = [1, 1]} : vector<2x40xf32> to vector<2x10xf32>
    %55 = arith.negf %54 : vector<2x10xf32>
    %56 = math.exp %55 : vector<2x10xf32>
    %cst_16 = arith.constant 1.000000e+00 : f32
    %57 = vector.broadcast %cst_16 : f32 to vector<2x10xf32>
    %58 = arith.addf %57, %56 : vector<2x10xf32>
    %59 = arith.divf %57, %58 : vector<2x10xf32>
    %60 = arith.mulf %51, %34 : vector<2x10xf32>
    %61 = arith.mulf %45, %53 : vector<2x10xf32>
    %62 = arith.addf %60, %61 : vector<2x10xf32>
    %63 = math.tanh %62 : vector<2x10xf32>
    %64 = arith.mulf %59, %63 : vector<2x10xf32>
    %65 = vector.extract_strided_slice %6 {offsets = [4, 0], sizes = [2, 40], strides = [1, 1]} : vector<16x40xf32> to vector<2x40xf32>
    %cst_17 = arith.constant dense<0.000000e+00> : vector<2x40xf32>
    %66 = tpu.matmul %64, %2, %cst_17 {dimension_numbers = #tpu.dot_dimension_numbers<[1], [0], [0], [1], [0, 0, 1, 1], [], []>} : vector<2x10xf32>, vector<10x40xf32>, vector<2x40xf32> -> vector<2x40xf32>
    %67 = arith.addf %65, %66 : vector<2x40xf32>
    %68 = vector.extract_strided_slice %67 {offsets = [0, 0], sizes = [2, 10], strides = [1, 1]} : vector<2x40xf32> to vector<2x10xf32>
    %69 = arith.negf %68 : vector<2x10xf32>
    %70 = math.exp %69 : vector<2x10xf32>
    %cst_18 = arith.constant 1.000000e+00 : f32
    %71 = vector.broadcast %cst_18 : f32 to vector<2x10xf32>
    %72 = arith.addf %71, %70 : vector<2x10xf32>
    %73 = arith.divf %71, %72 : vector<2x10xf32>
    %74 = vector.extract_strided_slice %67 {offsets = [0, 10], sizes = [2, 10], strides = [1, 1]} : vector<2x40xf32> to vector<2x10xf32>
    %75 = arith.negf %74 : vector<2x10xf32>
    %76 = math.exp %75 : vector<2x10xf32>
    %cst_19 = arith.constant 1.000000e+00 : f32
    %77 = vector.broadcast %cst_19 : f32 to vector<2x10xf32>
    %78 = arith.addf %77, %76 : vector<2x10xf32>
    %79 = arith.divf %77, %78 : vector<2x10xf32>
    %80 = vector.extract_strided_slice %67 {offsets = [0, 20], sizes = [2, 10], strides = [1, 1]} : vector<2x40xf32> to vector<2x10xf32>
    %81 = math.tanh %80 : vector<2x10xf32>
    %82 = vector.extract_strided_slice %67 {offsets = [0, 30], sizes = [2, 10], strides = [1, 1]} : vector<2x40xf32> to vector<2x10xf32>
    %83 = arith.negf %82 : vector<2x10xf32>
    %84 = math.exp %83 : vector<2x10xf32>
    %cst_20 = arith.constant 1.000000e+00 : f32
    %85 = vector.broadcast %cst_20 : f32 to vector<2x10xf32>
    %86 = arith.addf %85, %84 : vector<2x10xf32>
    %87 = arith.divf %85, %86 : vector<2x10xf32>
    %88 = arith.mulf %79, %62 : vector<2x10xf32>
    %89 = arith.mulf %73, %81 : vector<2x10xf32>
    %90 = arith.addf %88, %89 : vector<2x10xf32>
    %91 = math.tanh %90 : vector<2x10xf32>
    %92 = arith.mulf %87, %91 : vector<2x10xf32>
    %93 = vector.extract_strided_slice %6 {offsets = [6, 0], sizes = [2, 40], strides = [1, 1]} : vector<16x40xf32> to vector<2x40xf32>
    %cst_21 = arith.constant dense<0.000000e+00> : vector<2x40xf32>
    %94 = tpu.matmul %92, %2, %cst_21 {dimension_numbers = #tpu.dot_dimension_numbers<[1], [0], [0], [1], [0, 0, 1, 1], [], []>} : vector<2x10xf32>, vector<10x40xf32>, vector<2x40xf32> -> vector<2x40xf32>
    %95 = arith.addf %93, %94 : vector<2x40xf32>
    %96 = vector.extract_strided_slice %95 {offsets = [0, 0], sizes = [2, 10], strides = [1, 1]} : vector<2x40xf32> to vector<2x10xf32>
    %97 = arith.negf %96 : vector<2x10xf32>
    %98 = math.exp %97 : vector<2x10xf32>
    %cst_22 = arith.constant 1.000000e+00 : f32
    %99 = vector.broadcast %cst_22 : f32 to vector<2x10xf32>
    %100 = arith.addf %99, %98 : vector<2x10xf32>
    %101 = arith.divf %99, %100 : vector<2x10xf32>
    %102 = vector.extract_strided_slice %95 {offsets = [0, 10], sizes = [2, 10], strides = [1, 1]} : vector<2x40xf32> to vector<2x10xf32>
    %103 = arith.negf %102 : vector<2x10xf32>
    %104 = math.exp %103 : vector<2x10xf32>
    %cst_23 = arith.constant 1.000000e+00 : f32
    %105 = vector.broadcast %cst_23 : f32 to vector<2x10xf32>
    %106 = arith.addf %105, %104 : vector<2x10xf32>
    %107 = arith.divf %105, %106 : vector<2x10xf32>
    %108 = vector.extract_strided_slice %95 {offsets = [0, 20], sizes = [2, 10], strides = [1, 1]} : vector<2x40xf32> to vector<2x10xf32>
    %109 = math.tanh %108 : vector<2x10xf32>
    %110 = vector.extract_strided_slice %95 {offsets = [0, 30], sizes = [2, 10], strides = [1, 1]} : vector<2x40xf32> to vector<2x10xf32>
    %111 = arith.negf %110 : vector<2x10xf32>
    %112 = math.exp %111 : vector<2x10xf32>
    %cst_24 = arith.constant 1.000000e+00 : f32
    %113 = vector.broadcast %cst_24 : f32 to vector<2x10xf32>
    %114 = arith.addf %113, %112 : vector<2x10xf32>
    %115 = arith.divf %113, %114 : vector<2x10xf32>
    %116 = arith.mulf %107, %90 : vector<2x10xf32>
    %117 = arith.mulf %101, %109 : vector<2x10xf32>
    %118 = arith.addf %116, %117 : vector<2x10xf32>
    %119 = math.tanh %118 : vector<2x10xf32>
    %120 = arith.mulf %115, %119 : vector<2x10xf32>
    %121 = vector.extract_strided_slice %6 {offsets = [8, 0], sizes = [2, 40], strides = [1, 1]} : vector<16x40xf32> to vector<2x40xf32>
    %cst_25 = arith.constant dense<0.000000e+00> : vector<2x40xf32>
    %122 = tpu.matmul %120, %2, %cst_25 {dimension_numbers = #tpu.dot_dimension_numbers<[1], [0], [0], [1], [0, 0, 1, 1], [], []>} : vector<2x10xf32>, vector<10x40xf32>, vector<2x40xf32> -> vector<2x40xf32>
    %123 = arith.addf %121, %122 : vector<2x40xf32>
    %124 = vector.extract_strided_slice %123 {offsets = [0, 0], sizes = [2, 10], strides = [1, 1]} : vector<2x40xf32> to vector<2x10xf32>
    %125 = arith.negf %124 : vector<2x10xf32>
    %126 = math.exp %125 : vector<2x10xf32>
    %cst_26 = arith.constant 1.000000e+00 : f32
    %127 = vector.broadcast %cst_26 : f32 to vector<2x10xf32>
    %128 = arith.addf %127, %126 : vector<2x10xf32>
    %129 = arith.divf %127, %128 : vector<2x10xf32>
    %130 = vector.extract_strided_slice %123 {offsets = [0, 10], sizes = [2, 10], strides = [1, 1]} : vector<2x40xf32> to vector<2x10xf32>
    %131 = arith.negf %130 : vector<2x10xf32>
    %132 = math.exp %131 : vector<2x10xf32>
    %cst_27 = arith.constant 1.000000e+00 : f32
    %133 = vector.broadcast %cst_27 : f32 to vector<2x10xf32>
    %134 = arith.addf %133, %132 : vector<2x10xf32>
    %135 = arith.divf %133, %134 : vector<2x10xf32>
    %136 = vector.extract_strided_slice %123 {offsets = [0, 20], sizes = [2, 10], strides = [1, 1]} : vector<2x40xf32> to vector<2x10xf32>
    %137 = math.tanh %136 : vector<2x10xf32>
    %138 = vector.extract_strided_slice %123 {offsets = [0, 30], sizes = [2, 10], strides = [1, 1]} : vector<2x40xf32> to vector<2x10xf32>
    %139 = arith.negf %138 : vector<2x10xf32>
    %140 = math.exp %139 : vector<2x10xf32>
    %cst_28 = arith.constant 1.000000e+00 : f32
    %141 = vector.broadcast %cst_28 : f32 to vector<2x10xf32>
    %142 = arith.addf %141, %140 : vector<2x10xf32>
    %143 = arith.divf %141, %142 : vector<2x10xf32>
    %144 = arith.mulf %135, %118 : vector<2x10xf32>
    %145 = arith.mulf %129, %137 : vector<2x10xf32>
    %146 = arith.addf %144, %145 : vector<2x10xf32>
    %147 = math.tanh %146 : vector<2x10xf32>
    %148 = arith.mulf %143, %147 : vector<2x10xf32>
    %149 = vector.extract_strided_slice %6 {offsets = [10, 0], sizes = [2, 40], strides = [1, 1]} : vector<16x40xf32> to vector<2x40xf32>
    %cst_29 = arith.constant dense<0.000000e+00> : vector<2x40xf32>
    %150 = tpu.matmul %148, %2, %cst_29 {dimension_numbers = #tpu.dot_dimension_numbers<[1], [0], [0], [1], [0, 0, 1, 1], [], []>} : vector<2x10xf32>, vector<10x40xf32>, vector<2x40xf32> -> vector<2x40xf32>
    %151 = arith.addf %149, %150 : vector<2x40xf32>
    %152 = vector.extract_strided_slice %151 {offsets = [0, 0], sizes = [2, 10], strides = [1, 1]} : vector<2x40xf32> to vector<2x10xf32>
    %153 = arith.negf %152 : vector<2x10xf32>
    %154 = math.exp %153 : vector<2x10xf32>
    %cst_30 = arith.constant 1.000000e+00 : f32
    %155 = vector.broadcast %cst_30 : f32 to vector<2x10xf32>
    %156 = arith.addf %155, %154 : vector<2x10xf32>
    %157 = arith.divf %155, %156 : vector<2x10xf32>
    %158 = vector.extract_strided_slice %151 {offsets = [0, 10], sizes = [2, 10], strides = [1, 1]} : vector<2x40xf32> to vector<2x10xf32>
    %159 = arith.negf %158 : vector<2x10xf32>
    %160 = math.exp %159 : vector<2x10xf32>
    %cst_31 = arith.constant 1.000000e+00 : f32
    %161 = vector.broadcast %cst_31 : f32 to vector<2x10xf32>
    %162 = arith.addf %161, %160 : vector<2x10xf32>
    %163 = arith.divf %161, %162 : vector<2x10xf32>
    %164 = vector.extract_strided_slice %151 {offsets = [0, 20], sizes = [2, 10], strides = [1, 1]} : vector<2x40xf32> to vector<2x10xf32>
    %165 = math.tanh %164 : vector<2x10xf32>
    %166 = vector.extract_strided_slice %151 {offsets = [0, 30], sizes = [2, 10], strides = [1, 1]} : vector<2x40xf32> to vector<2x10xf32>
    %167 = arith.negf %166 : vector<2x10xf32>
    %168 = math.exp %167 : vector<2x10xf32>
    %cst_32 = arith.constant 1.000000e+00 : f32
    %169 = vector.broadcast %cst_32 : f32 to vector<2x10xf32>
    %170 = arith.addf %169, %168 : vector<2x10xf32>
    %171 = arith.divf %169, %170 : vector<2x10xf32>
    %172 = arith.mulf %163, %146 : vector<2x10xf32>
    %173 = arith.mulf %157, %165 : vector<2x10xf32>
    %174 = arith.addf %172, %173 : vector<2x10xf32>
    %175 = math.tanh %174 : vector<2x10xf32>
    %176 = arith.mulf %171, %175 : vector<2x10xf32>
    %177 = vector.extract_strided_slice %6 {offsets = [12, 0], sizes = [2, 40], strides = [1, 1]} : vector<16x40xf32> to vector<2x40xf32>
    %cst_33 = arith.constant dense<0.000000e+00> : vector<2x40xf32>
    %178 = tpu.matmul %176, %2, %cst_33 {dimension_numbers = #tpu.dot_dimension_numbers<[1], [0], [0], [1], [0, 0, 1, 1], [], []>} : vector<2x10xf32>, vector<10x40xf32>, vector<2x40xf32> -> vector<2x40xf32>
    %179 = arith.addf %177, %178 : vector<2x40xf32>
    %180 = vector.extract_strided_slice %179 {offsets = [0, 0], sizes = [2, 10], strides = [1, 1]} : vector<2x40xf32> to vector<2x10xf32>
    %181 = arith.negf %180 : vector<2x10xf32>
    %182 = math.exp %181 : vector<2x10xf32>
    %cst_34 = arith.constant 1.000000e+00 : f32
    %183 = vector.broadcast %cst_34 : f32 to vector<2x10xf32>
    %184 = arith.addf %183, %182 : vector<2x10xf32>
    %185 = arith.divf %183, %184 : vector<2x10xf32>
    %186 = vector.extract_strided_slice %179 {offsets = [0, 10], sizes = [2, 10], strides = [1, 1]} : vector<2x40xf32> to vector<2x10xf32>
    %187 = arith.negf %186 : vector<2x10xf32>
    %188 = math.exp %187 : vector<2x10xf32>
    %cst_35 = arith.constant 1.000000e+00 : f32
    %189 = vector.broadcast %cst_35 : f32 to vector<2x10xf32>
    %190 = arith.addf %189, %188 : vector<2x10xf32>
    %191 = arith.divf %189, %190 : vector<2x10xf32>
    %192 = vector.extract_strided_slice %179 {offsets = [0, 20], sizes = [2, 10], strides = [1, 1]} : vector<2x40xf32> to vector<2x10xf32>
    %193 = math.tanh %192 : vector<2x10xf32>
    %194 = vector.extract_strided_slice %179 {offsets = [0, 30], sizes = [2, 10], strides = [1, 1]} : vector<2x40xf32> to vector<2x10xf32>
    %195 = arith.negf %194 : vector<2x10xf32>
    %196 = math.exp %195 : vector<2x10xf32>
    %cst_36 = arith.constant 1.000000e+00 : f32
    %197 = vector.broadcast %cst_36 : f32 to vector<2x10xf32>
    %198 = arith.addf %197, %196 : vector<2x10xf32>
    %199 = arith.divf %197, %198 : vector<2x10xf32>
    %200 = arith.mulf %191, %174 : vector<2x10xf32>
    %201 = arith.mulf %185, %193 : vector<2x10xf32>
    %202 = arith.addf %200, %201 : vector<2x10xf32>
    %203 = math.tanh %202 : vector<2x10xf32>
    %204 = arith.mulf %199, %203 : vector<2x10xf32>
    %205 = vector.extract_strided_slice %6 {offsets = [14, 0], sizes = [2, 40], strides = [1, 1]} : vector<16x40xf32> to vector<2x40xf32>
    %cst_37 = arith.constant dense<0.000000e+00> : vector<2x40xf32>
    %206 = tpu.matmul %204, %2, %cst_37 {dimension_numbers = #tpu.dot_dimension_numbers<[1], [0], [0], [1], [0, 0, 1, 1], [], []>} : vector<2x10xf32>, vector<10x40xf32>, vector<2x40xf32> -> vector<2x40xf32>
    %207 = arith.addf %205, %206 : vector<2x40xf32>
    %208 = vector.extract_strided_slice %207 {offsets = [0, 0], sizes = [2, 10], strides = [1, 1]} : vector<2x40xf32> to vector<2x10xf32>
    %209 = arith.negf %208 : vector<2x10xf32>
    %210 = math.exp %209 : vector<2x10xf32>
    %cst_38 = arith.constant 1.000000e+00 : f32
    %211 = vector.broadcast %cst_38 : f32 to vector<2x10xf32>
    %212 = arith.addf %211, %210 : vector<2x10xf32>
    %213 = arith.divf %211, %212 : vector<2x10xf32>
    %214 = vector.extract_strided_slice %207 {offsets = [0, 10], sizes = [2, 10], strides = [1, 1]} : vector<2x40xf32> to vector<2x10xf32>
    %215 = arith.negf %214 : vector<2x10xf32>
    %216 = math.exp %215 : vector<2x10xf32>
    %cst_39 = arith.constant 1.000000e+00 : f32
    %217 = vector.broadcast %cst_39 : f32 to vector<2x10xf32>
    %218 = arith.addf %217, %216 : vector<2x10xf32>
    %219 = arith.divf %217, %218 : vector<2x10xf32>
    %220 = vector.extract_strided_slice %207 {offsets = [0, 20], sizes = [2, 10], strides = [1, 1]} : vector<2x40xf32> to vector<2x10xf32>
    %221 = math.tanh %220 : vector<2x10xf32>
    %222 = vector.extract_strided_slice %207 {offsets = [0, 30], sizes = [2, 10], strides = [1, 1]} : vector<2x40xf32> to vector<2x10xf32>
    %223 = arith.negf %222 : vector<2x10xf32>
    %224 = math.exp %223 : vector<2x10xf32>
    %cst_40 = arith.constant 1.000000e+00 : f32
    %225 = vector.broadcast %cst_40 : f32 to vector<2x10xf32>
    %226 = arith.addf %225, %224 : vector<2x10xf32>
    %227 = arith.divf %225, %226 : vector<2x10xf32>
    %228 = arith.mulf %219, %202 : vector<2x10xf32>
    %229 = arith.mulf %213, %221 : vector<2x10xf32>
    %230 = arith.addf %228, %229 : vector<2x10xf32>
    %231 = math.tanh %230 : vector<2x10xf32>
    %232 = arith.mulf %227, %231 : vector<2x10xf32>
    %c0_41 = arith.constant 0 : index
    %c0_42 = arith.constant 0 : index
    %233 = vector.load %arg5[%c0_41, %c0_42] : memref<16x40xf32, #tpu.memory_space<vmem>>, vector<16x40xf32>
    %c0_43 = arith.constant 0 : index
    %c0_44 = arith.constant 0 : index
    %234 = vector.load %arg6[%c0_43, %c0_44] : memref<10x40xf32, #tpu.memory_space<vmem>>, vector<10x40xf32>
    %c0_45 = arith.constant 0 : index
    %c0_46 = arith.constant 0 : index
    %235 = vector.load %arg7[%c0_45, %c0_46] : memref<1x40xf32, #tpu.memory_space<vmem>>, vector<1x40xf32>
    %cst_47 = arith.constant dense<0.000000e+00> : vector<16x40xf32>
    %236 = tpu.matmul %0, %233, %cst_47 {dimension_numbers = #tpu.dot_dimension_numbers<[1], [0], [0], [1], [0, 0, 1, 1], [], []>} : vector<16x16xf32>, vector<16x40xf32>, vector<16x40xf32> -> vector<16x40xf32>
    %237 = vector.broadcast %235 : vector<1x40xf32> to vector<16x40xf32>
    %238 = arith.addf %236, %237 : vector<16x40xf32>
    %cst_48 = arith.constant 0.000000e+00 : f32
    %239 = vector.broadcast %cst_48 : f32 to vector<2x10xf32>
    %cst_49 = arith.constant 0.000000e+00 : f32
    %240 = vector.broadcast %cst_49 : f32 to vector<2x10xf32>
    %241 = vector.extract_strided_slice %238 {offsets = [14, 0], sizes = [2, 40], strides = [1, 1]} : vector<16x40xf32> to vector<2x40xf32>
    %cst_50 = arith.constant dense<0.000000e+00> : vector<2x40xf32>
    %242 = tpu.matmul %239, %234, %cst_50 {dimension_numbers = #tpu.dot_dimension_numbers<[1], [0], [0], [1], [0, 0, 1, 1], [], []>} : vector<2x10xf32>, vector<10x40xf32>, vector<2x40xf32> -> vector<2x40xf32>
    %243 = arith.addf %241, %242 : vector<2x40xf32>
    %244 = vector.extract_strided_slice %243 {offsets = [0, 0], sizes = [2, 10], strides = [1, 1]} : vector<2x40xf32> to vector<2x10xf32>
    %245 = arith.negf %244 : vector<2x10xf32>
    %246 = math.exp %245 : vector<2x10xf32>
    %cst_51 = arith.constant 1.000000e+00 : f32
    %247 = vector.broadcast %cst_51 : f32 to vector<2x10xf32>
    %248 = arith.addf %247, %246 : vector<2x10xf32>
    %249 = arith.divf %247, %248 : vector<2x10xf32>
    %250 = vector.extract_strided_slice %243 {offsets = [0, 10], sizes = [2, 10], strides = [1, 1]} : vector<2x40xf32> to vector<2x10xf32>
    %251 = arith.negf %250 : vector<2x10xf32>
    %252 = math.exp %251 : vector<2x10xf32>
    %cst_52 = arith.constant 1.000000e+00 : f32
    %253 = vector.broadcast %cst_52 : f32 to vector<2x10xf32>
    %254 = arith.addf %253, %252 : vector<2x10xf32>
    %255 = arith.divf %253, %254 : vector<2x10xf32>
    %256 = vector.extract_strided_slice %243 {offsets = [0, 20], sizes = [2, 10], strides = [1, 1]} : vector<2x40xf32> to vector<2x10xf32>
    %257 = math.tanh %256 : vector<2x10xf32>
    %258 = vector.extract_strided_slice %243 {offsets = [0, 30], sizes = [2, 10], strides = [1, 1]} : vector<2x40xf32> to vector<2x10xf32>
    %259 = arith.negf %258 : vector<2x10xf32>
    %260 = math.exp %259 : vector<2x10xf32>
    %cst_53 = arith.constant 1.000000e+00 : f32
    %261 = vector.broadcast %cst_53 : f32 to vector<2x10xf32>
    %262 = arith.addf %261, %260 : vector<2x10xf32>
    %263 = arith.divf %261, %262 : vector<2x10xf32>
    %264 = arith.mulf %255, %240 : vector<2x10xf32>
    %265 = arith.mulf %249, %257 : vector<2x10xf32>
    %266 = arith.addf %264, %265 : vector<2x10xf32>
    %267 = math.tanh %266 : vector<2x10xf32>
    %268 = arith.mulf %263, %267 : vector<2x10xf32>
    %269 = vector.extract_strided_slice %238 {offsets = [12, 0], sizes = [2, 40], strides = [1, 1]} : vector<16x40xf32> to vector<2x40xf32>
    %cst_54 = arith.constant dense<0.000000e+00> : vector<2x40xf32>
    %270 = tpu.matmul %268, %234, %cst_54 {dimension_numbers = #tpu.dot_dimension_numbers<[1], [0], [0], [1], [0, 0, 1, 1], [], []>} : vector<2x10xf32>, vector<10x40xf32>, vector<2x40xf32> -> vector<2x40xf32>
    %271 = arith.addf %269, %270 : vector<2x40xf32>
    %272 = vector.extract_strided_slice %271 {offsets = [0, 0], sizes = [2, 10], strides = [1, 1]} : vector<2x40xf32> to vector<2x10xf32>
    %273 = arith.negf %272 : vector<2x10xf32>
    %274 = math.exp %273 : vector<2x10xf32>
    %cst_55 = arith.constant 1.000000e+00 : f32
    %275 = vector.broadcast %cst_55 : f32 to vector<2x10xf32>
    %276 = arith.addf %275, %274 : vector<2x10xf32>
    %277 = arith.divf %275, %276 : vector<2x10xf32>
    %278 = vector.extract_strided_slice %271 {offsets = [0, 10], sizes = [2, 10], strides = [1, 1]} : vector<2x40xf32> to vector<2x10xf32>
    %279 = arith.negf %278 : vector<2x10xf32>
    %280 = math.exp %279 : vector<2x10xf32>
    %cst_56 = arith.constant 1.000000e+00 : f32
    %281 = vector.broadcast %cst_56 : f32 to vector<2x10xf32>
    %282 = arith.addf %281, %280 : vector<2x10xf32>
    %283 = arith.divf %281, %282 : vector<2x10xf32>
    %284 = vector.extract_strided_slice %271 {offsets = [0, 20], sizes = [2, 10], strides = [1, 1]} : vector<2x40xf32> to vector<2x10xf32>
    %285 = math.tanh %284 : vector<2x10xf32>
    %286 = vector.extract_strided_slice %271 {offsets = [0, 30], sizes = [2, 10], strides = [1, 1]} : vector<2x40xf32> to vector<2x10xf32>
    %287 = arith.negf %286 : vector<2x10xf32>
    %288 = math.exp %287 : vector<2x10xf32>
    %cst_57 = arith.constant 1.000000e+00 : f32
    %289 = vector.broadcast %cst_57 : f32 to vector<2x10xf32>
    %290 = arith.addf %289, %288 : vector<2x10xf32>
    %291 = arith.divf %289, %290 : vector<2x10xf32>
    %292 = arith.mulf %283, %266 : vector<2x10xf32>
    %293 = arith.mulf %277, %285 : vector<2x10xf32>
    %294 = arith.addf %292, %293 : vector<2x10xf32>
    %295 = math.tanh %294 : vector<2x10xf32>
    %296 = arith.mulf %291, %295 : vector<2x10xf32>
    %297 = vector.extract_strided_slice %238 {offsets = [10, 0], sizes = [2, 40], strides = [1, 1]} : vector<16x40xf32> to vector<2x40xf32>
    %cst_58 = arith.constant dense<0.000000e+00> : vector<2x40xf32>
    %298 = tpu.matmul %296, %234, %cst_58 {dimension_numbers = #tpu.dot_dimension_numbers<[1], [0], [0], [1], [0, 0, 1, 1], [], []>} : vector<2x10xf32>, vector<10x40xf32>, vector<2x40xf32> -> vector<2x40xf32>
    %299 = arith.addf %297, %298 : vector<2x40xf32>
    %300 = vector.extract_strided_slice %299 {offsets = [0, 0], sizes = [2, 10], strides = [1, 1]} : vector<2x40xf32> to vector<2x10xf32>
    %301 = arith.negf %300 : vector<2x10xf32>
    %302 = math.exp %301 : vector<2x10xf32>
    %cst_59 = arith.constant 1.000000e+00 : f32
    %303 = vector.broadcast %cst_59 : f32 to vector<2x10xf32>
    %304 = arith.addf %303, %302 : vector<2x10xf32>
    %305 = arith.divf %303, %304 : vector<2x10xf32>
    %306 = vector.extract_strided_slice %299 {offsets = [0, 10], sizes = [2, 10], strides = [1, 1]} : vector<2x40xf32> to vector<2x10xf32>
    %307 = arith.negf %306 : vector<2x10xf32>
    %308 = math.exp %307 : vector<2x10xf32>
    %cst_60 = arith.constant 1.000000e+00 : f32
    %309 = vector.broadcast %cst_60 : f32 to vector<2x10xf32>
    %310 = arith.addf %309, %308 : vector<2x10xf32>
    %311 = arith.divf %309, %310 : vector<2x10xf32>
    %312 = vector.extract_strided_slice %299 {offsets = [0, 20], sizes = [2, 10], strides = [1, 1]} : vector<2x40xf32> to vector<2x10xf32>
    %313 = math.tanh %312 : vector<2x10xf32>
    %314 = vector.extract_strided_slice %299 {offsets = [0, 30], sizes = [2, 10], strides = [1, 1]} : vector<2x40xf32> to vector<2x10xf32>
    %315 = arith.negf %314 : vector<2x10xf32>
    %316 = math.exp %315 : vector<2x10xf32>
    %cst_61 = arith.constant 1.000000e+00 : f32
    %317 = vector.broadcast %cst_61 : f32 to vector<2x10xf32>
    %318 = arith.addf %317, %316 : vector<2x10xf32>
    %319 = arith.divf %317, %318 : vector<2x10xf32>
    %320 = arith.mulf %311, %294 : vector<2x10xf32>
    %321 = arith.mulf %305, %313 : vector<2x10xf32>
    %322 = arith.addf %320, %321 : vector<2x10xf32>
    %323 = math.tanh %322 : vector<2x10xf32>
    %324 = arith.mulf %319, %323 : vector<2x10xf32>
    %325 = vector.extract_strided_slice %238 {offsets = [8, 0], sizes = [2, 40], strides = [1, 1]} : vector<16x40xf32> to vector<2x40xf32>
    %cst_62 = arith.constant dense<0.000000e+00> : vector<2x40xf32>
    %326 = tpu.matmul %324, %234, %cst_62 {dimension_numbers = #tpu.dot_dimension_numbers<[1], [0], [0], [1], [0, 0, 1, 1], [], []>} : vector<2x10xf32>, vector<10x40xf32>, vector<2x40xf32> -> vector<2x40xf32>
    %327 = arith.addf %325, %326 : vector<2x40xf32>
    %328 = vector.extract_strided_slice %327 {offsets = [0, 0], sizes = [2, 10], strides = [1, 1]} : vector<2x40xf32> to vector<2x10xf32>
    %329 = arith.negf %328 : vector<2x10xf32>
    %330 = math.exp %329 : vector<2x10xf32>
    %cst_63 = arith.constant 1.000000e+00 : f32
    %331 = vector.broadcast %cst_63 : f32 to vector<2x10xf32>
    %332 = arith.addf %331, %330 : vector<2x10xf32>
    %333 = arith.divf %331, %332 : vector<2x10xf32>
    %334 = vector.extract_strided_slice %327 {offsets = [0, 10], sizes = [2, 10], strides = [1, 1]} : vector<2x40xf32> to vector<2x10xf32>
    %335 = arith.negf %334 : vector<2x10xf32>
    %336 = math.exp %335 : vector<2x10xf32>
    %cst_64 = arith.constant 1.000000e+00 : f32
    %337 = vector.broadcast %cst_64 : f32 to vector<2x10xf32>
    %338 = arith.addf %337, %336 : vector<2x10xf32>
    %339 = arith.divf %337, %338 : vector<2x10xf32>
    %340 = vector.extract_strided_slice %327 {offsets = [0, 20], sizes = [2, 10], strides = [1, 1]} : vector<2x40xf32> to vector<2x10xf32>
    %341 = math.tanh %340 : vector<2x10xf32>
    %342 = vector.extract_strided_slice %327 {offsets = [0, 30], sizes = [2, 10], strides = [1, 1]} : vector<2x40xf32> to vector<2x10xf32>
    %343 = arith.negf %342 : vector<2x10xf32>
    %344 = math.exp %343 : vector<2x10xf32>
    %cst_65 = arith.constant 1.000000e+00 : f32
    %345 = vector.broadcast %cst_65 : f32 to vector<2x10xf32>
    %346 = arith.addf %345, %344 : vector<2x10xf32>
    %347 = arith.divf %345, %346 : vector<2x10xf32>
    %348 = arith.mulf %339, %322 : vector<2x10xf32>
    %349 = arith.mulf %333, %341 : vector<2x10xf32>
    %350 = arith.addf %348, %349 : vector<2x10xf32>
    %351 = math.tanh %350 : vector<2x10xf32>
    %352 = arith.mulf %347, %351 : vector<2x10xf32>
    %353 = vector.extract_strided_slice %238 {offsets = [6, 0], sizes = [2, 40], strides = [1, 1]} : vector<16x40xf32> to vector<2x40xf32>
    %cst_66 = arith.constant dense<0.000000e+00> : vector<2x40xf32>
    %354 = tpu.matmul %352, %234, %cst_66 {dimension_numbers = #tpu.dot_dimension_numbers<[1], [0], [0], [1], [0, 0, 1, 1], [], []>} : vector<2x10xf32>, vector<10x40xf32>, vector<2x40xf32> -> vector<2x40xf32>
    %355 = arith.addf %353, %354 : vector<2x40xf32>
    %356 = vector.extract_strided_slice %355 {offsets = [0, 0], sizes = [2, 10], strides = [1, 1]} : vector<2x40xf32> to vector<2x10xf32>
    %357 = arith.negf %356 : vector<2x10xf32>
    %358 = math.exp %357 : vector<2x10xf32>
    %cst_67 = arith.constant 1.000000e+00 : f32
    %359 = vector.broadcast %cst_67 : f32 to vector<2x10xf32>
    %360 = arith.addf %359, %358 : vector<2x10xf32>
    %361 = arith.divf %359, %360 : vector<2x10xf32>
    %362 = vector.extract_strided_slice %355 {offsets = [0, 10], sizes = [2, 10], strides = [1, 1]} : vector<2x40xf32> to vector<2x10xf32>
    %363 = arith.negf %362 : vector<2x10xf32>
    %364 = math.exp %363 : vector<2x10xf32>
    %cst_68 = arith.constant 1.000000e+00 : f32
    %365 = vector.broadcast %cst_68 : f32 to vector<2x10xf32>
    %366 = arith.addf %365, %364 : vector<2x10xf32>
    %367 = arith.divf %365, %366 : vector<2x10xf32>
    %368 = vector.extract_strided_slice %355 {offsets = [0, 20], sizes = [2, 10], strides = [1, 1]} : vector<2x40xf32> to vector<2x10xf32>
    %369 = math.tanh %368 : vector<2x10xf32>
    %370 = vector.extract_strided_slice %355 {offsets = [0, 30], sizes = [2, 10], strides = [1, 1]} : vector<2x40xf32> to vector<2x10xf32>
    %371 = arith.negf %370 : vector<2x10xf32>
    %372 = math.exp %371 : vector<2x10xf32>
    %cst_69 = arith.constant 1.000000e+00 : f32
    %373 = vector.broadcast %cst_69 : f32 to vector<2x10xf32>
    %374 = arith.addf %373, %372 : vector<2x10xf32>
    %375 = arith.divf %373, %374 : vector<2x10xf32>
    %376 = arith.mulf %367, %350 : vector<2x10xf32>
    %377 = arith.mulf %361, %369 : vector<2x10xf32>
    %378 = arith.addf %376, %377 : vector<2x10xf32>
    %379 = math.tanh %378 : vector<2x10xf32>
    %380 = arith.mulf %375, %379 : vector<2x10xf32>
    %381 = vector.extract_strided_slice %238 {offsets = [4, 0], sizes = [2, 40], strides = [1, 1]} : vector<16x40xf32> to vector<2x40xf32>
    %cst_70 = arith.constant dense<0.000000e+00> : vector<2x40xf32>
    %382 = tpu.matmul %380, %234, %cst_70 {dimension_numbers = #tpu.dot_dimension_numbers<[1], [0], [0], [1], [0, 0, 1, 1], [], []>} : vector<2x10xf32>, vector<10x40xf32>, vector<2x40xf32> -> vector<2x40xf32>
    %383 = arith.addf %381, %382 : vector<2x40xf32>
    %384 = vector.extract_strided_slice %383 {offsets = [0, 0], sizes = [2, 10], strides = [1, 1]} : vector<2x40xf32> to vector<2x10xf32>
    %385 = arith.negf %384 : vector<2x10xf32>
    %386 = math.exp %385 : vector<2x10xf32>
    %cst_71 = arith.constant 1.000000e+00 : f32
    %387 = vector.broadcast %cst_71 : f32 to vector<2x10xf32>
    %388 = arith.addf %387, %386 : vector<2x10xf32>
    %389 = arith.divf %387, %388 : vector<2x10xf32>
    %390 = vector.extract_strided_slice %383 {offsets = [0, 10], sizes = [2, 10], strides = [1, 1]} : vector<2x40xf32> to vector<2x10xf32>
    %391 = arith.negf %390 : vector<2x10xf32>
    %392 = math.exp %391 : vector<2x10xf32>
    %cst_72 = arith.constant 1.000000e+00 : f32
    %393 = vector.broadcast %cst_72 : f32 to vector<2x10xf32>
    %394 = arith.addf %393, %392 : vector<2x10xf32>
    %395 = arith.divf %393, %394 : vector<2x10xf32>
    %396 = vector.extract_strided_slice %383 {offsets = [0, 20], sizes = [2, 10], strides = [1, 1]} : vector<2x40xf32> to vector<2x10xf32>
    %397 = math.tanh %396 : vector<2x10xf32>
    %398 = vector.extract_strided_slice %383 {offsets = [0, 30], sizes = [2, 10], strides = [1, 1]} : vector<2x40xf32> to vector<2x10xf32>
    %399 = arith.negf %398 : vector<2x10xf32>
    %400 = math.exp %399 : vector<2x10xf32>
    %cst_73 = arith.constant 1.000000e+00 : f32
    %401 = vector.broadcast %cst_73 : f32 to vector<2x10xf32>
    %402 = arith.addf %401, %400 : vector<2x10xf32>
    %403 = arith.divf %401, %402 : vector<2x10xf32>
    %404 = arith.mulf %395, %378 : vector<2x10xf32>
    %405 = arith.mulf %389, %397 : vector<2x10xf32>
    %406 = arith.addf %404, %405 : vector<2x10xf32>
    %407 = math.tanh %406 : vector<2x10xf32>
    %408 = arith.mulf %403, %407 : vector<2x10xf32>
    %409 = vector.extract_strided_slice %238 {offsets = [2, 0], sizes = [2, 40], strides = [1, 1]} : vector<16x40xf32> to vector<2x40xf32>
    %cst_74 = arith.constant dense<0.000000e+00> : vector<2x40xf32>
    %410 = tpu.matmul %408, %234, %cst_74 {dimension_numbers = #tpu.dot_dimension_numbers<[1], [0], [0], [1], [0, 0, 1, 1], [], []>} : vector<2x10xf32>, vector<10x40xf32>, vector<2x40xf32> -> vector<2x40xf32>
    %411 = arith.addf %409, %410 : vector<2x40xf32>
    %412 = vector.extract_strided_slice %411 {offsets = [0, 0], sizes = [2, 10], strides = [1, 1]} : vector<2x40xf32> to vector<2x10xf32>
    %413 = arith.negf %412 : vector<2x10xf32>
    %414 = math.exp %413 : vector<2x10xf32>
    %cst_75 = arith.constant 1.000000e+00 : f32
    %415 = vector.broadcast %cst_75 : f32 to vector<2x10xf32>
    %416 = arith.addf %415, %414 : vector<2x10xf32>
    %417 = arith.divf %415, %416 : vector<2x10xf32>
    %418 = vector.extract_strided_slice %411 {offsets = [0, 10], sizes = [2, 10], strides = [1, 1]} : vector<2x40xf32> to vector<2x10xf32>
    %419 = arith.negf %418 : vector<2x10xf32>
    %420 = math.exp %419 : vector<2x10xf32>
    %cst_76 = arith.constant 1.000000e+00 : f32
    %421 = vector.broadcast %cst_76 : f32 to vector<2x10xf32>
    %422 = arith.addf %421, %420 : vector<2x10xf32>
    %423 = arith.divf %421, %422 : vector<2x10xf32>
    %424 = vector.extract_strided_slice %411 {offsets = [0, 20], sizes = [2, 10], strides = [1, 1]} : vector<2x40xf32> to vector<2x10xf32>
    %425 = math.tanh %424 : vector<2x10xf32>
    %426 = vector.extract_strided_slice %411 {offsets = [0, 30], sizes = [2, 10], strides = [1, 1]} : vector<2x40xf32> to vector<2x10xf32>
    %427 = arith.negf %426 : vector<2x10xf32>
    %428 = math.exp %427 : vector<2x10xf32>
    %cst_77 = arith.constant 1.000000e+00 : f32
    %429 = vector.broadcast %cst_77 : f32 to vector<2x10xf32>
    %430 = arith.addf %429, %428 : vector<2x10xf32>
    %431 = arith.divf %429, %430 : vector<2x10xf32>
    %432 = arith.mulf %423, %406 : vector<2x10xf32>
    %433 = arith.mulf %417, %425 : vector<2x10xf32>
    %434 = arith.addf %432, %433 : vector<2x10xf32>
    %435 = math.tanh %434 : vector<2x10xf32>
    %436 = arith.mulf %431, %435 : vector<2x10xf32>
    %437 = vector.extract_strided_slice %238 {offsets = [0, 0], sizes = [2, 40], strides = [1, 1]} : vector<16x40xf32> to vector<2x40xf32>
    %cst_78 = arith.constant dense<0.000000e+00> : vector<2x40xf32>
    %438 = tpu.matmul %436, %234, %cst_78 {dimension_numbers = #tpu.dot_dimension_numbers<[1], [0], [0], [1], [0, 0, 1, 1], [], []>} : vector<2x10xf32>, vector<10x40xf32>, vector<2x40xf32> -> vector<2x40xf32>
    %439 = arith.addf %437, %438 : vector<2x40xf32>
    %440 = vector.extract_strided_slice %439 {offsets = [0, 0], sizes = [2, 10], strides = [1, 1]} : vector<2x40xf32> to vector<2x10xf32>
    %441 = arith.negf %440 : vector<2x10xf32>
    %442 = math.exp %441 : vector<2x10xf32>
    %cst_79 = arith.constant 1.000000e+00 : f32
    %443 = vector.broadcast %cst_79 : f32 to vector<2x10xf32>
    %444 = arith.addf %443, %442 : vector<2x10xf32>
    %445 = arith.divf %443, %444 : vector<2x10xf32>
    %446 = vector.extract_strided_slice %439 {offsets = [0, 10], sizes = [2, 10], strides = [1, 1]} : vector<2x40xf32> to vector<2x10xf32>
    %447 = arith.negf %446 : vector<2x10xf32>
    %448 = math.exp %447 : vector<2x10xf32>
    %cst_80 = arith.constant 1.000000e+00 : f32
    %449 = vector.broadcast %cst_80 : f32 to vector<2x10xf32>
    %450 = arith.addf %449, %448 : vector<2x10xf32>
    %451 = arith.divf %449, %450 : vector<2x10xf32>
    %452 = vector.extract_strided_slice %439 {offsets = [0, 20], sizes = [2, 10], strides = [1, 1]} : vector<2x40xf32> to vector<2x10xf32>
    %453 = math.tanh %452 : vector<2x10xf32>
    %454 = vector.extract_strided_slice %439 {offsets = [0, 30], sizes = [2, 10], strides = [1, 1]} : vector<2x40xf32> to vector<2x10xf32>
    %455 = arith.negf %454 : vector<2x10xf32>
    %456 = math.exp %455 : vector<2x10xf32>
    %cst_81 = arith.constant 1.000000e+00 : f32
    %457 = vector.broadcast %cst_81 : f32 to vector<2x10xf32>
    %458 = arith.addf %457, %456 : vector<2x10xf32>
    %459 = arith.divf %457, %458 : vector<2x10xf32>
    %460 = arith.mulf %451, %434 : vector<2x10xf32>
    %461 = arith.mulf %445, %453 : vector<2x10xf32>
    %462 = arith.addf %460, %461 : vector<2x10xf32>
    %463 = math.tanh %462 : vector<2x10xf32>
    %464 = arith.mulf %459, %463 : vector<2x10xf32>
    %465 = tpu.concatenate %36, %464 in 1 : vector<2x10xf32>, vector<2x10xf32> -> vector<2x20xf32>
    %466 = tpu.concatenate %64, %436 in 1 : vector<2x10xf32>, vector<2x10xf32> -> vector<2x20xf32>
    %467 = tpu.concatenate %92, %408 in 1 : vector<2x10xf32>, vector<2x10xf32> -> vector<2x20xf32>
    %468 = tpu.concatenate %120, %380 in 1 : vector<2x10xf32>, vector<2x10xf32> -> vector<2x20xf32>
    %469 = tpu.concatenate %148, %352 in 1 : vector<2x10xf32>, vector<2x10xf32> -> vector<2x20xf32>
    %470 = tpu.concatenate %176, %324 in 1 : vector<2x10xf32>, vector<2x10xf32> -> vector<2x20xf32>
    %471 = tpu.concatenate %204, %296 in 1 : vector<2x10xf32>, vector<2x10xf32> -> vector<2x20xf32>
    %472 = tpu.concatenate %232, %268 in 1 : vector<2x10xf32>, vector<2x10xf32> -> vector<2x20xf32>
    %473 = tpu.concatenate %465, %466, %467, %468, %469, %470, %471, %472 in 0 : vector<2x20xf32>, vector<2x20xf32>, vector<2x20xf32>, vector<2x20xf32>, vector<2x20xf32>, vector<2x20xf32>, vector<2x20xf32>, vector<2x20xf32> -> vector<16x20xf32>
    %c0_82 = arith.constant 0 : index
    %c0_83 = arith.constant 0 : index
    %474 = vector.load %arg8[%c0_82, %c0_83] : memref<20x40xf32, #tpu.memory_space<vmem>>, vector<20x40xf32>
    %c0_84 = arith.constant 0 : index
    %c0_85 = arith.constant 0 : index
    %475 = vector.load %arg9[%c0_84, %c0_85] : memref<10x40xf32, #tpu.memory_space<vmem>>, vector<10x40xf32>
    %c0_86 = arith.constant 0 : index
    %c0_87 = arith.constant 0 : index
    %476 = vector.load %arg10[%c0_86, %c0_87] : memref<1x40xf32, #tpu.memory_space<vmem>>, vector<1x40xf32>
    %cst_88 = arith.constant dense<0.000000e+00> : vector<16x40xf32>
    %477 = tpu.matmul %473, %474, %cst_88 {dimension_numbers = #tpu.dot_dimension_numbers<[1], [0], [0], [1], [0, 0, 1, 1], [], []>} : vector<16x20xf32>, vector<20x40xf32>, vector<16x40xf32> -> vector<16x40xf32>
    %478 = vector.broadcast %476 : vector<1x40xf32> to vector<16x40xf32>
    %479 = arith.addf %477, %478 : vector<16x40xf32>
    %cst_89 = arith.constant 0.000000e+00 : f32
    %480 = vector.broadcast %cst_89 : f32 to vector<2x10xf32>
    %cst_90 = arith.constant 0.000000e+00 : f32
    %481 = vector.broadcast %cst_90 : f32 to vector<2x10xf32>
    %482 = vector.extract_strided_slice %479 {offsets = [0, 0], sizes = [2, 40], strides = [1, 1]} : vector<16x40xf32> to vector<2x40xf32>
    %cst_91 = arith.constant dense<0.000000e+00> : vector<2x40xf32>
    %483 = tpu.matmul %480, %475, %cst_91 {dimension_numbers = #tpu.dot_dimension_numbers<[1], [0], [0], [1], [0, 0, 1, 1], [], []>} : vector<2x10xf32>, vector<10x40xf32>, vector<2x40xf32> -> vector<2x40xf32>
    %484 = arith.addf %482, %483 : vector<2x40xf32>
    %485 = vector.extract_strided_slice %484 {offsets = [0, 0], sizes = [2, 10], strides = [1, 1]} : vector<2x40xf32> to vector<2x10xf32>
    %486 = arith.negf %485 : vector<2x10xf32>
    %487 = math.exp %486 : vector<2x10xf32>
    %cst_92 = arith.constant 1.000000e+00 : f32
    %488 = vector.broadcast %cst_92 : f32 to vector<2x10xf32>
    %489 = arith.addf %488, %487 : vector<2x10xf32>
    %490 = arith.divf %488, %489 : vector<2x10xf32>
    %491 = vector.extract_strided_slice %484 {offsets = [0, 10], sizes = [2, 10], strides = [1, 1]} : vector<2x40xf32> to vector<2x10xf32>
    %492 = arith.negf %491 : vector<2x10xf32>
    %493 = math.exp %492 : vector<2x10xf32>
    %cst_93 = arith.constant 1.000000e+00 : f32
    %494 = vector.broadcast %cst_93 : f32 to vector<2x10xf32>
    %495 = arith.addf %494, %493 : vector<2x10xf32>
    %496 = arith.divf %494, %495 : vector<2x10xf32>
    %497 = vector.extract_strided_slice %484 {offsets = [0, 20], sizes = [2, 10], strides = [1, 1]} : vector<2x40xf32> to vector<2x10xf32>
    %498 = math.tanh %497 : vector<2x10xf32>
    %499 = vector.extract_strided_slice %484 {offsets = [0, 30], sizes = [2, 10], strides = [1, 1]} : vector<2x40xf32> to vector<2x10xf32>
    %500 = arith.negf %499 : vector<2x10xf32>
    %501 = math.exp %500 : vector<2x10xf32>
    %cst_94 = arith.constant 1.000000e+00 : f32
    %502 = vector.broadcast %cst_94 : f32 to vector<2x10xf32>
    %503 = arith.addf %502, %501 : vector<2x10xf32>
    %504 = arith.divf %502, %503 : vector<2x10xf32>
    %505 = arith.mulf %496, %481 : vector<2x10xf32>
    %506 = arith.mulf %490, %498 : vector<2x10xf32>
    %507 = arith.addf %505, %506 : vector<2x10xf32>
    %508 = math.tanh %507 : vector<2x10xf32>
    %509 = arith.mulf %504, %508 : vector<2x10xf32>
    %510 = vector.extract_strided_slice %479 {offsets = [2, 0], sizes = [2, 40], strides = [1, 1]} : vector<16x40xf32> to vector<2x40xf32>
    %cst_95 = arith.constant dense<0.000000e+00> : vector<2x40xf32>
    %511 = tpu.matmul %509, %475, %cst_95 {dimension_numbers = #tpu.dot_dimension_numbers<[1], [0], [0], [1], [0, 0, 1, 1], [], []>} : vector<2x10xf32>, vector<10x40xf32>, vector<2x40xf32> -> vector<2x40xf32>
    %512 = arith.addf %510, %511 : vector<2x40xf32>
    %513 = vector.extract_strided_slice %512 {offsets = [0, 0], sizes = [2, 10], strides = [1, 1]} : vector<2x40xf32> to vector<2x10xf32>
    %514 = arith.negf %513 : vector<2x10xf32>
    %515 = math.exp %514 : vector<2x10xf32>
    %cst_96 = arith.constant 1.000000e+00 : f32
    %516 = vector.broadcast %cst_96 : f32 to vector<2x10xf32>
    %517 = arith.addf %516, %515 : vector<2x10xf32>
    %518 = arith.divf %516, %517 : vector<2x10xf32>
    %519 = vector.extract_strided_slice %512 {offsets = [0, 10], sizes = [2, 10], strides = [1, 1]} : vector<2x40xf32> to vector<2x10xf32>
    %520 = arith.negf %519 : vector<2x10xf32>
    %521 = math.exp %520 : vector<2x10xf32>
    %cst_97 = arith.constant 1.000000e+00 : f32
    %522 = vector.broadcast %cst_97 : f32 to vector<2x10xf32>
    %523 = arith.addf %522, %521 : vector<2x10xf32>
    %524 = arith.divf %522, %523 : vector<2x10xf32>
    %525 = vector.extract_strided_slice %512 {offsets = [0, 20], sizes = [2, 10], strides = [1, 1]} : vector<2x40xf32> to vector<2x10xf32>
    %526 = math.tanh %525 : vector<2x10xf32>
    %527 = vector.extract_strided_slice %512 {offsets = [0, 30], sizes = [2, 10], strides = [1, 1]} : vector<2x40xf32> to vector<2x10xf32>
    %528 = arith.negf %527 : vector<2x10xf32>
    %529 = math.exp %528 : vector<2x10xf32>
    %cst_98 = arith.constant 1.000000e+00 : f32
    %530 = vector.broadcast %cst_98 : f32 to vector<2x10xf32>
    %531 = arith.addf %530, %529 : vector<2x10xf32>
    %532 = arith.divf %530, %531 : vector<2x10xf32>
    %533 = arith.mulf %524, %507 : vector<2x10xf32>
    %534 = arith.mulf %518, %526 : vector<2x10xf32>
    %535 = arith.addf %533, %534 : vector<2x10xf32>
    %536 = math.tanh %535 : vector<2x10xf32>
    %537 = arith.mulf %532, %536 : vector<2x10xf32>
    %538 = vector.extract_strided_slice %479 {offsets = [4, 0], sizes = [2, 40], strides = [1, 1]} : vector<16x40xf32> to vector<2x40xf32>
    %cst_99 = arith.constant dense<0.000000e+00> : vector<2x40xf32>
    %539 = tpu.matmul %537, %475, %cst_99 {dimension_numbers = #tpu.dot_dimension_numbers<[1], [0], [0], [1], [0, 0, 1, 1], [], []>} : vector<2x10xf32>, vector<10x40xf32>, vector<2x40xf32> -> vector<2x40xf32>
    %540 = arith.addf %538, %539 : vector<2x40xf32>
    %541 = vector.extract_strided_slice %540 {offsets = [0, 0], sizes = [2, 10], strides = [1, 1]} : vector<2x40xf32> to vector<2x10xf32>
    %542 = arith.negf %541 : vector<2x10xf32>
    %543 = math.exp %542 : vector<2x10xf32>
    %cst_100 = arith.constant 1.000000e+00 : f32
    %544 = vector.broadcast %cst_100 : f32 to vector<2x10xf32>
    %545 = arith.addf %544, %543 : vector<2x10xf32>
    %546 = arith.divf %544, %545 : vector<2x10xf32>
    %547 = vector.extract_strided_slice %540 {offsets = [0, 10], sizes = [2, 10], strides = [1, 1]} : vector<2x40xf32> to vector<2x10xf32>
    %548 = arith.negf %547 : vector<2x10xf32>
    %549 = math.exp %548 : vector<2x10xf32>
    %cst_101 = arith.constant 1.000000e+00 : f32
    %550 = vector.broadcast %cst_101 : f32 to vector<2x10xf32>
    %551 = arith.addf %550, %549 : vector<2x10xf32>
    %552 = arith.divf %550, %551 : vector<2x10xf32>
    %553 = vector.extract_strided_slice %540 {offsets = [0, 20], sizes = [2, 10], strides = [1, 1]} : vector<2x40xf32> to vector<2x10xf32>
    %554 = math.tanh %553 : vector<2x10xf32>
    %555 = vector.extract_strided_slice %540 {offsets = [0, 30], sizes = [2, 10], strides = [1, 1]} : vector<2x40xf32> to vector<2x10xf32>
    %556 = arith.negf %555 : vector<2x10xf32>
    %557 = math.exp %556 : vector<2x10xf32>
    %cst_102 = arith.constant 1.000000e+00 : f32
    %558 = vector.broadcast %cst_102 : f32 to vector<2x10xf32>
    %559 = arith.addf %558, %557 : vector<2x10xf32>
    %560 = arith.divf %558, %559 : vector<2x10xf32>
    %561 = arith.mulf %552, %535 : vector<2x10xf32>
    %562 = arith.mulf %546, %554 : vector<2x10xf32>
    %563 = arith.addf %561, %562 : vector<2x10xf32>
    %564 = math.tanh %563 : vector<2x10xf32>
    %565 = arith.mulf %560, %564 : vector<2x10xf32>
    %566 = vector.extract_strided_slice %479 {offsets = [6, 0], sizes = [2, 40], strides = [1, 1]} : vector<16x40xf32> to vector<2x40xf32>
    %cst_103 = arith.constant dense<0.000000e+00> : vector<2x40xf32>
    %567 = tpu.matmul %565, %475, %cst_103 {dimension_numbers = #tpu.dot_dimension_numbers<[1], [0], [0], [1], [0, 0, 1, 1], [], []>} : vector<2x10xf32>, vector<10x40xf32>, vector<2x40xf32> -> vector<2x40xf32>
    %568 = arith.addf %566, %567 : vector<2x40xf32>
    %569 = vector.extract_strided_slice %568 {offsets = [0, 0], sizes = [2, 10], strides = [1, 1]} : vector<2x40xf32> to vector<2x10xf32>
    %570 = arith.negf %569 : vector<2x10xf32>
    %571 = math.exp %570 : vector<2x10xf32>
    %cst_104 = arith.constant 1.000000e+00 : f32
    %572 = vector.broadcast %cst_104 : f32 to vector<2x10xf32>
    %573 = arith.addf %572, %571 : vector<2x10xf32>
    %574 = arith.divf %572, %573 : vector<2x10xf32>
    %575 = vector.extract_strided_slice %568 {offsets = [0, 10], sizes = [2, 10], strides = [1, 1]} : vector<2x40xf32> to vector<2x10xf32>
    %576 = arith.negf %575 : vector<2x10xf32>
    %577 = math.exp %576 : vector<2x10xf32>
    %cst_105 = arith.constant 1.000000e+00 : f32
    %578 = vector.broadcast %cst_105 : f32 to vector<2x10xf32>
    %579 = arith.addf %578, %577 : vector<2x10xf32>
    %580 = arith.divf %578, %579 : vector<2x10xf32>
    %581 = vector.extract_strided_slice %568 {offsets = [0, 20], sizes = [2, 10], strides = [1, 1]} : vector<2x40xf32> to vector<2x10xf32>
    %582 = math.tanh %581 : vector<2x10xf32>
    %583 = vector.extract_strided_slice %568 {offsets = [0, 30], sizes = [2, 10], strides = [1, 1]} : vector<2x40xf32> to vector<2x10xf32>
    %584 = arith.negf %583 : vector<2x10xf32>
    %585 = math.exp %584 : vector<2x10xf32>
    %cst_106 = arith.constant 1.000000e+00 : f32
    %586 = vector.broadcast %cst_106 : f32 to vector<2x10xf32>
    %587 = arith.addf %586, %585 : vector<2x10xf32>
    %588 = arith.divf %586, %587 : vector<2x10xf32>
    %589 = arith.mulf %580, %563 : vector<2x10xf32>
    %590 = arith.mulf %574, %582 : vector<2x10xf32>
    %591 = arith.addf %589, %590 : vector<2x10xf32>
    %592 = math.tanh %591 : vector<2x10xf32>
    %593 = arith.mulf %588, %592 : vector<2x10xf32>
    %594 = vector.extract_strided_slice %479 {offsets = [8, 0], sizes = [2, 40], strides = [1, 1]} : vector<16x40xf32> to vector<2x40xf32>
    %cst_107 = arith.constant dense<0.000000e+00> : vector<2x40xf32>
    %595 = tpu.matmul %593, %475, %cst_107 {dimension_numbers = #tpu.dot_dimension_numbers<[1], [0], [0], [1], [0, 0, 1, 1], [], []>} : vector<2x10xf32>, vector<10x40xf32>, vector<2x40xf32> -> vector<2x40xf32>
    %596 = arith.addf %594, %595 : vector<2x40xf32>
    %597 = vector.extract_strided_slice %596 {offsets = [0, 0], sizes = [2, 10], strides = [1, 1]} : vector<2x40xf32> to vector<2x10xf32>
    %598 = arith.negf %597 : vector<2x10xf32>
    %599 = math.exp %598 : vector<2x10xf32>
    %cst_108 = arith.constant 1.000000e+00 : f32
    %600 = vector.broadcast %cst_108 : f32 to vector<2x10xf32>
    %601 = arith.addf %600, %599 : vector<2x10xf32>
    %602 = arith.divf %600, %601 : vector<2x10xf32>
    %603 = vector.extract_strided_slice %596 {offsets = [0, 10], sizes = [2, 10], strides = [1, 1]} : vector<2x40xf32> to vector<2x10xf32>
    %604 = arith.negf %603 : vector<2x10xf32>
    %605 = math.exp %604 : vector<2x10xf32>
    %cst_109 = arith.constant 1.000000e+00 : f32
    %606 = vector.broadcast %cst_109 : f32 to vector<2x10xf32>
    %607 = arith.addf %606, %605 : vector<2x10xf32>
    %608 = arith.divf %606, %607 : vector<2x10xf32>
    %609 = vector.extract_strided_slice %596 {offsets = [0, 20], sizes = [2, 10], strides = [1, 1]} : vector<2x40xf32> to vector<2x10xf32>
    %610 = math.tanh %609 : vector<2x10xf32>
    %611 = vector.extract_strided_slice %596 {offsets = [0, 30], sizes = [2, 10], strides = [1, 1]} : vector<2x40xf32> to vector<2x10xf32>
    %612 = arith.negf %611 : vector<2x10xf32>
    %613 = math.exp %612 : vector<2x10xf32>
    %cst_110 = arith.constant 1.000000e+00 : f32
    %614 = vector.broadcast %cst_110 : f32 to vector<2x10xf32>
    %615 = arith.addf %614, %613 : vector<2x10xf32>
    %616 = arith.divf %614, %615 : vector<2x10xf32>
    %617 = arith.mulf %608, %591 : vector<2x10xf32>
    %618 = arith.mulf %602, %610 : vector<2x10xf32>
    %619 = arith.addf %617, %618 : vector<2x10xf32>
    %620 = math.tanh %619 : vector<2x10xf32>
    %621 = arith.mulf %616, %620 : vector<2x10xf32>
    %622 = vector.extract_strided_slice %479 {offsets = [10, 0], sizes = [2, 40], strides = [1, 1]} : vector<16x40xf32> to vector<2x40xf32>
    %cst_111 = arith.constant dense<0.000000e+00> : vector<2x40xf32>
    %623 = tpu.matmul %621, %475, %cst_111 {dimension_numbers = #tpu.dot_dimension_numbers<[1], [0], [0], [1], [0, 0, 1, 1], [], []>} : vector<2x10xf32>, vector<10x40xf32>, vector<2x40xf32> -> vector<2x40xf32>
    %624 = arith.addf %622, %623 : vector<2x40xf32>
    %625 = vector.extract_strided_slice %624 {offsets = [0, 0], sizes = [2, 10], strides = [1, 1]} : vector<2x40xf32> to vector<2x10xf32>
    %626 = arith.negf %625 : vector<2x10xf32>
    %627 = math.exp %626 : vector<2x10xf32>
    %cst_112 = arith.constant 1.000000e+00 : f32
    %628 = vector.broadcast %cst_112 : f32 to vector<2x10xf32>
    %629 = arith.addf %628, %627 : vector<2x10xf32>
    %630 = arith.divf %628, %629 : vector<2x10xf32>
    %631 = vector.extract_strided_slice %624 {offsets = [0, 10], sizes = [2, 10], strides = [1, 1]} : vector<2x40xf32> to vector<2x10xf32>
    %632 = arith.negf %631 : vector<2x10xf32>
    %633 = math.exp %632 : vector<2x10xf32>
    %cst_113 = arith.constant 1.000000e+00 : f32
    %634 = vector.broadcast %cst_113 : f32 to vector<2x10xf32>
    %635 = arith.addf %634, %633 : vector<2x10xf32>
    %636 = arith.divf %634, %635 : vector<2x10xf32>
    %637 = vector.extract_strided_slice %624 {offsets = [0, 20], sizes = [2, 10], strides = [1, 1]} : vector<2x40xf32> to vector<2x10xf32>
    %638 = math.tanh %637 : vector<2x10xf32>
    %639 = vector.extract_strided_slice %624 {offsets = [0, 30], sizes = [2, 10], strides = [1, 1]} : vector<2x40xf32> to vector<2x10xf32>
    %640 = arith.negf %639 : vector<2x10xf32>
    %641 = math.exp %640 : vector<2x10xf32>
    %cst_114 = arith.constant 1.000000e+00 : f32
    %642 = vector.broadcast %cst_114 : f32 to vector<2x10xf32>
    %643 = arith.addf %642, %641 : vector<2x10xf32>
    %644 = arith.divf %642, %643 : vector<2x10xf32>
    %645 = arith.mulf %636, %619 : vector<2x10xf32>
    %646 = arith.mulf %630, %638 : vector<2x10xf32>
    %647 = arith.addf %645, %646 : vector<2x10xf32>
    %648 = math.tanh %647 : vector<2x10xf32>
    %649 = arith.mulf %644, %648 : vector<2x10xf32>
    %650 = vector.extract_strided_slice %479 {offsets = [12, 0], sizes = [2, 40], strides = [1, 1]} : vector<16x40xf32> to vector<2x40xf32>
    %cst_115 = arith.constant dense<0.000000e+00> : vector<2x40xf32>
    %651 = tpu.matmul %649, %475, %cst_115 {dimension_numbers = #tpu.dot_dimension_numbers<[1], [0], [0], [1], [0, 0, 1, 1], [], []>} : vector<2x10xf32>, vector<10x40xf32>, vector<2x40xf32> -> vector<2x40xf32>
    %652 = arith.addf %650, %651 : vector<2x40xf32>
    %653 = vector.extract_strided_slice %652 {offsets = [0, 0], sizes = [2, 10], strides = [1, 1]} : vector<2x40xf32> to vector<2x10xf32>
    %654 = arith.negf %653 : vector<2x10xf32>
    %655 = math.exp %654 : vector<2x10xf32>
    %cst_116 = arith.constant 1.000000e+00 : f32
    %656 = vector.broadcast %cst_116 : f32 to vector<2x10xf32>
    %657 = arith.addf %656, %655 : vector<2x10xf32>
    %658 = arith.divf %656, %657 : vector<2x10xf32>
    %659 = vector.extract_strided_slice %652 {offsets = [0, 10], sizes = [2, 10], strides = [1, 1]} : vector<2x40xf32> to vector<2x10xf32>
    %660 = arith.negf %659 : vector<2x10xf32>
    %661 = math.exp %660 : vector<2x10xf32>
    %cst_117 = arith.constant 1.000000e+00 : f32
    %662 = vector.broadcast %cst_117 : f32 to vector<2x10xf32>
    %663 = arith.addf %662, %661 : vector<2x10xf32>
    %664 = arith.divf %662, %663 : vector<2x10xf32>
    %665 = vector.extract_strided_slice %652 {offsets = [0, 20], sizes = [2, 10], strides = [1, 1]} : vector<2x40xf32> to vector<2x10xf32>
    %666 = math.tanh %665 : vector<2x10xf32>
    %667 = vector.extract_strided_slice %652 {offsets = [0, 30], sizes = [2, 10], strides = [1, 1]} : vector<2x40xf32> to vector<2x10xf32>
    %668 = arith.negf %667 : vector<2x10xf32>
    %669 = math.exp %668 : vector<2x10xf32>
    %cst_118 = arith.constant 1.000000e+00 : f32
    %670 = vector.broadcast %cst_118 : f32 to vector<2x10xf32>
    %671 = arith.addf %670, %669 : vector<2x10xf32>
    %672 = arith.divf %670, %671 : vector<2x10xf32>
    %673 = arith.mulf %664, %647 : vector<2x10xf32>
    %674 = arith.mulf %658, %666 : vector<2x10xf32>
    %675 = arith.addf %673, %674 : vector<2x10xf32>
    %676 = math.tanh %675 : vector<2x10xf32>
    %677 = arith.mulf %672, %676 : vector<2x10xf32>
    %678 = vector.extract_strided_slice %479 {offsets = [14, 0], sizes = [2, 40], strides = [1, 1]} : vector<16x40xf32> to vector<2x40xf32>
    %cst_119 = arith.constant dense<0.000000e+00> : vector<2x40xf32>
    %679 = tpu.matmul %677, %475, %cst_119 {dimension_numbers = #tpu.dot_dimension_numbers<[1], [0], [0], [1], [0, 0, 1, 1], [], []>} : vector<2x10xf32>, vector<10x40xf32>, vector<2x40xf32> -> vector<2x40xf32>
    %680 = arith.addf %678, %679 : vector<2x40xf32>
    %681 = vector.extract_strided_slice %680 {offsets = [0, 0], sizes = [2, 10], strides = [1, 1]} : vector<2x40xf32> to vector<2x10xf32>
    %682 = arith.negf %681 : vector<2x10xf32>
    %683 = math.exp %682 : vector<2x10xf32>
    %cst_120 = arith.constant 1.000000e+00 : f32
    %684 = vector.broadcast %cst_120 : f32 to vector<2x10xf32>
    %685 = arith.addf %684, %683 : vector<2x10xf32>
    %686 = arith.divf %684, %685 : vector<2x10xf32>
    %687 = vector.extract_strided_slice %680 {offsets = [0, 10], sizes = [2, 10], strides = [1, 1]} : vector<2x40xf32> to vector<2x10xf32>
    %688 = arith.negf %687 : vector<2x10xf32>
    %689 = math.exp %688 : vector<2x10xf32>
    %cst_121 = arith.constant 1.000000e+00 : f32
    %690 = vector.broadcast %cst_121 : f32 to vector<2x10xf32>
    %691 = arith.addf %690, %689 : vector<2x10xf32>
    %692 = arith.divf %690, %691 : vector<2x10xf32>
    %693 = vector.extract_strided_slice %680 {offsets = [0, 20], sizes = [2, 10], strides = [1, 1]} : vector<2x40xf32> to vector<2x10xf32>
    %694 = math.tanh %693 : vector<2x10xf32>
    %695 = vector.extract_strided_slice %680 {offsets = [0, 30], sizes = [2, 10], strides = [1, 1]} : vector<2x40xf32> to vector<2x10xf32>
    %696 = arith.negf %695 : vector<2x10xf32>
    %697 = math.exp %696 : vector<2x10xf32>
    %cst_122 = arith.constant 1.000000e+00 : f32
    %698 = vector.broadcast %cst_122 : f32 to vector<2x10xf32>
    %699 = arith.addf %698, %697 : vector<2x10xf32>
    %700 = arith.divf %698, %699 : vector<2x10xf32>
    %701 = arith.mulf %692, %675 : vector<2x10xf32>
    %702 = arith.mulf %686, %694 : vector<2x10xf32>
    %703 = arith.addf %701, %702 : vector<2x10xf32>
    %704 = math.tanh %703 : vector<2x10xf32>
    %705 = arith.mulf %700, %704 : vector<2x10xf32>
    %c0_123 = arith.constant 0 : index
    %c0_124 = arith.constant 0 : index
    %706 = vector.load %arg11[%c0_123, %c0_124] : memref<20x40xf32, #tpu.memory_space<vmem>>, vector<20x40xf32>
    %c0_125 = arith.constant 0 : index
    %c0_126 = arith.constant 0 : index
    %707 = vector.load %arg12[%c0_125, %c0_126] : memref<10x40xf32, #tpu.memory_space<vmem>>, vector<10x40xf32>
    %c0_127 = arith.constant 0 : index
    %c0_128 = arith.constant 0 : index
    %708 = vector.load %arg13[%c0_127, %c0_128] : memref<1x40xf32, #tpu.memory_space<vmem>>, vector<1x40xf32>
    %cst_129 = arith.constant dense<0.000000e+00> : vector<16x40xf32>
    %709 = tpu.matmul %473, %706, %cst_129 {dimension_numbers = #tpu.dot_dimension_numbers<[1], [0], [0], [1], [0, 0, 1, 1], [], []>} : vector<16x20xf32>, vector<20x40xf32>, vector<16x40xf32> -> vector<16x40xf32>
    %710 = vector.broadcast %708 : vector<1x40xf32> to vector<16x40xf32>
    %711 = arith.addf %709, %710 : vector<16x40xf32>
    %cst_130 = arith.constant 0.000000e+00 : f32
    %712 = vector.broadcast %cst_130 : f32 to vector<2x10xf32>
    %cst_131 = arith.constant 0.000000e+00 : f32
    %713 = vector.broadcast %cst_131 : f32 to vector<2x10xf32>
    %714 = vector.extract_strided_slice %711 {offsets = [14, 0], sizes = [2, 40], strides = [1, 1]} : vector<16x40xf32> to vector<2x40xf32>
    %cst_132 = arith.constant dense<0.000000e+00> : vector<2x40xf32>
    %715 = tpu.matmul %712, %707, %cst_132 {dimension_numbers = #tpu.dot_dimension_numbers<[1], [0], [0], [1], [0, 0, 1, 1], [], []>} : vector<2x10xf32>, vector<10x40xf32>, vector<2x40xf32> -> vector<2x40xf32>
    %716 = arith.addf %714, %715 : vector<2x40xf32>
    %717 = vector.extract_strided_slice %716 {offsets = [0, 0], sizes = [2, 10], strides = [1, 1]} : vector<2x40xf32> to vector<2x10xf32>
    %718 = arith.negf %717 : vector<2x10xf32>
    %719 = math.exp %718 : vector<2x10xf32>
    %cst_133 = arith.constant 1.000000e+00 : f32
    %720 = vector.broadcast %cst_133 : f32 to vector<2x10xf32>
    %721 = arith.addf %720, %719 : vector<2x10xf32>
    %722 = arith.divf %720, %721 : vector<2x10xf32>
    %723 = vector.extract_strided_slice %716 {offsets = [0, 10], sizes = [2, 10], strides = [1, 1]} : vector<2x40xf32> to vector<2x10xf32>
    %724 = arith.negf %723 : vector<2x10xf32>
    %725 = math.exp %724 : vector<2x10xf32>
    %cst_134 = arith.constant 1.000000e+00 : f32
    %726 = vector.broadcast %cst_134 : f32 to vector<2x10xf32>
    %727 = arith.addf %726, %725 : vector<2x10xf32>
    %728 = arith.divf %726, %727 : vector<2x10xf32>
    %729 = vector.extract_strided_slice %716 {offsets = [0, 20], sizes = [2, 10], strides = [1, 1]} : vector<2x40xf32> to vector<2x10xf32>
    %730 = math.tanh %729 : vector<2x10xf32>
    %731 = vector.extract_strided_slice %716 {offsets = [0, 30], sizes = [2, 10], strides = [1, 1]} : vector<2x40xf32> to vector<2x10xf32>
    %732 = arith.negf %731 : vector<2x10xf32>
    %733 = math.exp %732 : vector<2x10xf32>
    %cst_135 = arith.constant 1.000000e+00 : f32
    %734 = vector.broadcast %cst_135 : f32 to vector<2x10xf32>
    %735 = arith.addf %734, %733 : vector<2x10xf32>
    %736 = arith.divf %734, %735 : vector<2x10xf32>
    %737 = arith.mulf %728, %713 : vector<2x10xf32>
    %738 = arith.mulf %722, %730 : vector<2x10xf32>
    %739 = arith.addf %737, %738 : vector<2x10xf32>
    %740 = math.tanh %739 : vector<2x10xf32>
    %741 = arith.mulf %736, %740 : vector<2x10xf32>
    %742 = vector.extract_strided_slice %711 {offsets = [12, 0], sizes = [2, 40], strides = [1, 1]} : vector<16x40xf32> to vector<2x40xf32>
    %cst_136 = arith.constant dense<0.000000e+00> : vector<2x40xf32>
    %743 = tpu.matmul %741, %707, %cst_136 {dimension_numbers = #tpu.dot_dimension_numbers<[1], [0], [0], [1], [0, 0, 1, 1], [], []>} : vector<2x10xf32>, vector<10x40xf32>, vector<2x40xf32> -> vector<2x40xf32>
    %744 = arith.addf %742, %743 : vector<2x40xf32>
    %745 = vector.extract_strided_slice %744 {offsets = [0, 0], sizes = [2, 10], strides = [1, 1]} : vector<2x40xf32> to vector<2x10xf32>
    %746 = arith.negf %745 : vector<2x10xf32>
    %747 = math.exp %746 : vector<2x10xf32>
    %cst_137 = arith.constant 1.000000e+00 : f32
    %748 = vector.broadcast %cst_137 : f32 to vector<2x10xf32>
    %749 = arith.addf %748, %747 : vector<2x10xf32>
    %750 = arith.divf %748, %749 : vector<2x10xf32>
    %751 = vector.extract_strided_slice %744 {offsets = [0, 10], sizes = [2, 10], strides = [1, 1]} : vector<2x40xf32> to vector<2x10xf32>
    %752 = arith.negf %751 : vector<2x10xf32>
    %753 = math.exp %752 : vector<2x10xf32>
    %cst_138 = arith.constant 1.000000e+00 : f32
    %754 = vector.broadcast %cst_138 : f32 to vector<2x10xf32>
    %755 = arith.addf %754, %753 : vector<2x10xf32>
    %756 = arith.divf %754, %755 : vector<2x10xf32>
    %757 = vector.extract_strided_slice %744 {offsets = [0, 20], sizes = [2, 10], strides = [1, 1]} : vector<2x40xf32> to vector<2x10xf32>
    %758 = math.tanh %757 : vector<2x10xf32>
    %759 = vector.extract_strided_slice %744 {offsets = [0, 30], sizes = [2, 10], strides = [1, 1]} : vector<2x40xf32> to vector<2x10xf32>
    %760 = arith.negf %759 : vector<2x10xf32>
    %761 = math.exp %760 : vector<2x10xf32>
    %cst_139 = arith.constant 1.000000e+00 : f32
    %762 = vector.broadcast %cst_139 : f32 to vector<2x10xf32>
    %763 = arith.addf %762, %761 : vector<2x10xf32>
    %764 = arith.divf %762, %763 : vector<2x10xf32>
    %765 = arith.mulf %756, %739 : vector<2x10xf32>
    %766 = arith.mulf %750, %758 : vector<2x10xf32>
    %767 = arith.addf %765, %766 : vector<2x10xf32>
    %768 = math.tanh %767 : vector<2x10xf32>
    %769 = arith.mulf %764, %768 : vector<2x10xf32>
    %770 = vector.extract_strided_slice %711 {offsets = [10, 0], sizes = [2, 40], strides = [1, 1]} : vector<16x40xf32> to vector<2x40xf32>
    %cst_140 = arith.constant dense<0.000000e+00> : vector<2x40xf32>
    %771 = tpu.matmul %769, %707, %cst_140 {dimension_numbers = #tpu.dot_dimension_numbers<[1], [0], [0], [1], [0, 0, 1, 1], [], []>} : vector<2x10xf32>, vector<10x40xf32>, vector<2x40xf32> -> vector<2x40xf32>
    %772 = arith.addf %770, %771 : vector<2x40xf32>
    %773 = vector.extract_strided_slice %772 {offsets = [0, 0], sizes = [2, 10], strides = [1, 1]} : vector<2x40xf32> to vector<2x10xf32>
    %774 = arith.negf %773 : vector<2x10xf32>
    %775 = math.exp %774 : vector<2x10xf32>
    %cst_141 = arith.constant 1.000000e+00 : f32
    %776 = vector.broadcast %cst_141 : f32 to vector<2x10xf32>
    %777 = arith.addf %776, %775 : vector<2x10xf32>
    %778 = arith.divf %776, %777 : vector<2x10xf32>
    %779 = vector.extract_strided_slice %772 {offsets = [0, 10], sizes = [2, 10], strides = [1, 1]} : vector<2x40xf32> to vector<2x10xf32>
    %780 = arith.negf %779 : vector<2x10xf32>
    %781 = math.exp %780 : vector<2x10xf32>
    %cst_142 = arith.constant 1.000000e+00 : f32
    %782 = vector.broadcast %cst_142 : f32 to vector<2x10xf32>
    %783 = arith.addf %782, %781 : vector<2x10xf32>
    %784 = arith.divf %782, %783 : vector<2x10xf32>
    %785 = vector.extract_strided_slice %772 {offsets = [0, 20], sizes = [2, 10], strides = [1, 1]} : vector<2x40xf32> to vector<2x10xf32>
    %786 = math.tanh %785 : vector<2x10xf32>
    %787 = vector.extract_strided_slice %772 {offsets = [0, 30], sizes = [2, 10], strides = [1, 1]} : vector<2x40xf32> to vector<2x10xf32>
    %788 = arith.negf %787 : vector<2x10xf32>
    %789 = math.exp %788 : vector<2x10xf32>
    %cst_143 = arith.constant 1.000000e+00 : f32
    %790 = vector.broadcast %cst_143 : f32 to vector<2x10xf32>
    %791 = arith.addf %790, %789 : vector<2x10xf32>
    %792 = arith.divf %790, %791 : vector<2x10xf32>
    %793 = arith.mulf %784, %767 : vector<2x10xf32>
    %794 = arith.mulf %778, %786 : vector<2x10xf32>
    %795 = arith.addf %793, %794 : vector<2x10xf32>
    %796 = math.tanh %795 : vector<2x10xf32>
    %797 = arith.mulf %792, %796 : vector<2x10xf32>
    %798 = vector.extract_strided_slice %711 {offsets = [8, 0], sizes = [2, 40], strides = [1, 1]} : vector<16x40xf32> to vector<2x40xf32>
    %cst_144 = arith.constant dense<0.000000e+00> : vector<2x40xf32>
    %799 = tpu.matmul %797, %707, %cst_144 {dimension_numbers = #tpu.dot_dimension_numbers<[1], [0], [0], [1], [0, 0, 1, 1], [], []>} : vector<2x10xf32>, vector<10x40xf32>, vector<2x40xf32> -> vector<2x40xf32>
    %800 = arith.addf %798, %799 : vector<2x40xf32>
    %801 = vector.extract_strided_slice %800 {offsets = [0, 0], sizes = [2, 10], strides = [1, 1]} : vector<2x40xf32> to vector<2x10xf32>
    %802 = arith.negf %801 : vector<2x10xf32>
    %803 = math.exp %802 : vector<2x10xf32>
    %cst_145 = arith.constant 1.000000e+00 : f32
    %804 = vector.broadcast %cst_145 : f32 to vector<2x10xf32>
    %805 = arith.addf %804, %803 : vector<2x10xf32>
    %806 = arith.divf %804, %805 : vector<2x10xf32>
    %807 = vector.extract_strided_slice %800 {offsets = [0, 10], sizes = [2, 10], strides = [1, 1]} : vector<2x40xf32> to vector<2x10xf32>
    %808 = arith.negf %807 : vector<2x10xf32>
    %809 = math.exp %808 : vector<2x10xf32>
    %cst_146 = arith.constant 1.000000e+00 : f32
    %810 = vector.broadcast %cst_146 : f32 to vector<2x10xf32>
    %811 = arith.addf %810, %809 : vector<2x10xf32>
    %812 = arith.divf %810, %811 : vector<2x10xf32>
    %813 = vector.extract_strided_slice %800 {offsets = [0, 20], sizes = [2, 10], strides = [1, 1]} : vector<2x40xf32> to vector<2x10xf32>
    %814 = math.tanh %813 : vector<2x10xf32>
    %815 = vector.extract_strided_slice %800 {offsets = [0, 30], sizes = [2, 10], strides = [1, 1]} : vector<2x40xf32> to vector<2x10xf32>
    %816 = arith.negf %815 : vector<2x10xf32>
    %817 = math.exp %816 : vector<2x10xf32>
    %cst_147 = arith.constant 1.000000e+00 : f32
    %818 = vector.broadcast %cst_147 : f32 to vector<2x10xf32>
    %819 = arith.addf %818, %817 : vector<2x10xf32>
    %820 = arith.divf %818, %819 : vector<2x10xf32>
    %821 = arith.mulf %812, %795 : vector<2x10xf32>
    %822 = arith.mulf %806, %814 : vector<2x10xf32>
    %823 = arith.addf %821, %822 : vector<2x10xf32>
    %824 = math.tanh %823 : vector<2x10xf32>
    %825 = arith.mulf %820, %824 : vector<2x10xf32>
    %826 = vector.extract_strided_slice %711 {offsets = [6, 0], sizes = [2, 40], strides = [1, 1]} : vector<16x40xf32> to vector<2x40xf32>
    %cst_148 = arith.constant dense<0.000000e+00> : vector<2x40xf32>
    %827 = tpu.matmul %825, %707, %cst_148 {dimension_numbers = #tpu.dot_dimension_numbers<[1], [0], [0], [1], [0, 0, 1, 1], [], []>} : vector<2x10xf32>, vector<10x40xf32>, vector<2x40xf32> -> vector<2x40xf32>
    %828 = arith.addf %826, %827 : vector<2x40xf32>
    %829 = vector.extract_strided_slice %828 {offsets = [0, 0], sizes = [2, 10], strides = [1, 1]} : vector<2x40xf32> to vector<2x10xf32>
    %830 = arith.negf %829 : vector<2x10xf32>
    %831 = math.exp %830 : vector<2x10xf32>
    %cst_149 = arith.constant 1.000000e+00 : f32
    %832 = vector.broadcast %cst_149 : f32 to vector<2x10xf32>
    %833 = arith.addf %832, %831 : vector<2x10xf32>
    %834 = arith.divf %832, %833 : vector<2x10xf32>
    %835 = vector.extract_strided_slice %828 {offsets = [0, 10], sizes = [2, 10], strides = [1, 1]} : vector<2x40xf32> to vector<2x10xf32>
    %836 = arith.negf %835 : vector<2x10xf32>
    %837 = math.exp %836 : vector<2x10xf32>
    %cst_150 = arith.constant 1.000000e+00 : f32
    %838 = vector.broadcast %cst_150 : f32 to vector<2x10xf32>
    %839 = arith.addf %838, %837 : vector<2x10xf32>
    %840 = arith.divf %838, %839 : vector<2x10xf32>
    %841 = vector.extract_strided_slice %828 {offsets = [0, 20], sizes = [2, 10], strides = [1, 1]} : vector<2x40xf32> to vector<2x10xf32>
    %842 = math.tanh %841 : vector<2x10xf32>
    %843 = vector.extract_strided_slice %828 {offsets = [0, 30], sizes = [2, 10], strides = [1, 1]} : vector<2x40xf32> to vector<2x10xf32>
    %844 = arith.negf %843 : vector<2x10xf32>
    %845 = math.exp %844 : vector<2x10xf32>
    %cst_151 = arith.constant 1.000000e+00 : f32
    %846 = vector.broadcast %cst_151 : f32 to vector<2x10xf32>
    %847 = arith.addf %846, %845 : vector<2x10xf32>
    %848 = arith.divf %846, %847 : vector<2x10xf32>
    %849 = arith.mulf %840, %823 : vector<2x10xf32>
    %850 = arith.mulf %834, %842 : vector<2x10xf32>
    %851 = arith.addf %849, %850 : vector<2x10xf32>
    %852 = math.tanh %851 : vector<2x10xf32>
    %853 = arith.mulf %848, %852 : vector<2x10xf32>
    %854 = vector.extract_strided_slice %711 {offsets = [4, 0], sizes = [2, 40], strides = [1, 1]} : vector<16x40xf32> to vector<2x40xf32>
    %cst_152 = arith.constant dense<0.000000e+00> : vector<2x40xf32>
    %855 = tpu.matmul %853, %707, %cst_152 {dimension_numbers = #tpu.dot_dimension_numbers<[1], [0], [0], [1], [0, 0, 1, 1], [], []>} : vector<2x10xf32>, vector<10x40xf32>, vector<2x40xf32> -> vector<2x40xf32>
    %856 = arith.addf %854, %855 : vector<2x40xf32>
    %857 = vector.extract_strided_slice %856 {offsets = [0, 0], sizes = [2, 10], strides = [1, 1]} : vector<2x40xf32> to vector<2x10xf32>
    %858 = arith.negf %857 : vector<2x10xf32>
    %859 = math.exp %858 : vector<2x10xf32>
    %cst_153 = arith.constant 1.000000e+00 : f32
    %860 = vector.broadcast %cst_153 : f32 to vector<2x10xf32>
    %861 = arith.addf %860, %859 : vector<2x10xf32>
    %862 = arith.divf %860, %861 : vector<2x10xf32>
    %863 = vector.extract_strided_slice %856 {offsets = [0, 10], sizes = [2, 10], strides = [1, 1]} : vector<2x40xf32> to vector<2x10xf32>
    %864 = arith.negf %863 : vector<2x10xf32>
    %865 = math.exp %864 : vector<2x10xf32>
    %cst_154 = arith.constant 1.000000e+00 : f32
    %866 = vector.broadcast %cst_154 : f32 to vector<2x10xf32>
    %867 = arith.addf %866, %865 : vector<2x10xf32>
    %868 = arith.divf %866, %867 : vector<2x10xf32>
    %869 = vector.extract_strided_slice %856 {offsets = [0, 20], sizes = [2, 10], strides = [1, 1]} : vector<2x40xf32> to vector<2x10xf32>
    %870 = math.tanh %869 : vector<2x10xf32>
    %871 = vector.extract_strided_slice %856 {offsets = [0, 30], sizes = [2, 10], strides = [1, 1]} : vector<2x40xf32> to vector<2x10xf32>
    %872 = arith.negf %871 : vector<2x10xf32>
    %873 = math.exp %872 : vector<2x10xf32>
    %cst_155 = arith.constant 1.000000e+00 : f32
    %874 = vector.broadcast %cst_155 : f32 to vector<2x10xf32>
    %875 = arith.addf %874, %873 : vector<2x10xf32>
    %876 = arith.divf %874, %875 : vector<2x10xf32>
    %877 = arith.mulf %868, %851 : vector<2x10xf32>
    %878 = arith.mulf %862, %870 : vector<2x10xf32>
    %879 = arith.addf %877, %878 : vector<2x10xf32>
    %880 = math.tanh %879 : vector<2x10xf32>
    %881 = arith.mulf %876, %880 : vector<2x10xf32>
    %882 = vector.extract_strided_slice %711 {offsets = [2, 0], sizes = [2, 40], strides = [1, 1]} : vector<16x40xf32> to vector<2x40xf32>
    %cst_156 = arith.constant dense<0.000000e+00> : vector<2x40xf32>
    %883 = tpu.matmul %881, %707, %cst_156 {dimension_numbers = #tpu.dot_dimension_numbers<[1], [0], [0], [1], [0, 0, 1, 1], [], []>} : vector<2x10xf32>, vector<10x40xf32>, vector<2x40xf32> -> vector<2x40xf32>
    %884 = arith.addf %882, %883 : vector<2x40xf32>
    %885 = vector.extract_strided_slice %884 {offsets = [0, 0], sizes = [2, 10], strides = [1, 1]} : vector<2x40xf32> to vector<2x10xf32>
    %886 = arith.negf %885 : vector<2x10xf32>
    %887 = math.exp %886 : vector<2x10xf32>
    %cst_157 = arith.constant 1.000000e+00 : f32
    %888 = vector.broadcast %cst_157 : f32 to vector<2x10xf32>
    %889 = arith.addf %888, %887 : vector<2x10xf32>
    %890 = arith.divf %888, %889 : vector<2x10xf32>
    %891 = vector.extract_strided_slice %884 {offsets = [0, 10], sizes = [2, 10], strides = [1, 1]} : vector<2x40xf32> to vector<2x10xf32>
    %892 = arith.negf %891 : vector<2x10xf32>
    %893 = math.exp %892 : vector<2x10xf32>
    %cst_158 = arith.constant 1.000000e+00 : f32
    %894 = vector.broadcast %cst_158 : f32 to vector<2x10xf32>
    %895 = arith.addf %894, %893 : vector<2x10xf32>
    %896 = arith.divf %894, %895 : vector<2x10xf32>
    %897 = vector.extract_strided_slice %884 {offsets = [0, 20], sizes = [2, 10], strides = [1, 1]} : vector<2x40xf32> to vector<2x10xf32>
    %898 = math.tanh %897 : vector<2x10xf32>
    %899 = vector.extract_strided_slice %884 {offsets = [0, 30], sizes = [2, 10], strides = [1, 1]} : vector<2x40xf32> to vector<2x10xf32>
    %900 = arith.negf %899 : vector<2x10xf32>
    %901 = math.exp %900 : vector<2x10xf32>
    %cst_159 = arith.constant 1.000000e+00 : f32
    %902 = vector.broadcast %cst_159 : f32 to vector<2x10xf32>
    %903 = arith.addf %902, %901 : vector<2x10xf32>
    %904 = arith.divf %902, %903 : vector<2x10xf32>
    %905 = arith.mulf %896, %879 : vector<2x10xf32>
    %906 = arith.mulf %890, %898 : vector<2x10xf32>
    %907 = arith.addf %905, %906 : vector<2x10xf32>
    %908 = math.tanh %907 : vector<2x10xf32>
    %909 = arith.mulf %904, %908 : vector<2x10xf32>
    %910 = vector.extract_strided_slice %711 {offsets = [0, 0], sizes = [2, 40], strides = [1, 1]} : vector<16x40xf32> to vector<2x40xf32>
    %cst_160 = arith.constant dense<0.000000e+00> : vector<2x40xf32>
    %911 = tpu.matmul %909, %707, %cst_160 {dimension_numbers = #tpu.dot_dimension_numbers<[1], [0], [0], [1], [0, 0, 1, 1], [], []>} : vector<2x10xf32>, vector<10x40xf32>, vector<2x40xf32> -> vector<2x40xf32>
    %912 = arith.addf %910, %911 : vector<2x40xf32>
    %913 = vector.extract_strided_slice %912 {offsets = [0, 0], sizes = [2, 10], strides = [1, 1]} : vector<2x40xf32> to vector<2x10xf32>
    %914 = arith.negf %913 : vector<2x10xf32>
    %915 = math.exp %914 : vector<2x10xf32>
    %cst_161 = arith.constant 1.000000e+00 : f32
    %916 = vector.broadcast %cst_161 : f32 to vector<2x10xf32>
    %917 = arith.addf %916, %915 : vector<2x10xf32>
    %918 = arith.divf %916, %917 : vector<2x10xf32>
    %919 = vector.extract_strided_slice %912 {offsets = [0, 10], sizes = [2, 10], strides = [1, 1]} : vector<2x40xf32> to vector<2x10xf32>
    %920 = arith.negf %919 : vector<2x10xf32>
    %921 = math.exp %920 : vector<2x10xf32>
    %cst_162 = arith.constant 1.000000e+00 : f32
    %922 = vector.broadcast %cst_162 : f32 to vector<2x10xf32>
    %923 = arith.addf %922, %921 : vector<2x10xf32>
    %924 = arith.divf %922, %923 : vector<2x10xf32>
    %925 = vector.extract_strided_slice %912 {offsets = [0, 20], sizes = [2, 10], strides = [1, 1]} : vector<2x40xf32> to vector<2x10xf32>
    %926 = math.tanh %925 : vector<2x10xf32>
    %927 = vector.extract_strided_slice %912 {offsets = [0, 30], sizes = [2, 10], strides = [1, 1]} : vector<2x40xf32> to vector<2x10xf32>
    %928 = arith.negf %927 : vector<2x10xf32>
    %929 = math.exp %928 : vector<2x10xf32>
    %cst_163 = arith.constant 1.000000e+00 : f32
    %930 = vector.broadcast %cst_163 : f32 to vector<2x10xf32>
    %931 = arith.addf %930, %929 : vector<2x10xf32>
    %932 = arith.divf %930, %931 : vector<2x10xf32>
    %933 = arith.mulf %924, %907 : vector<2x10xf32>
    %934 = arith.mulf %918, %926 : vector<2x10xf32>
    %935 = arith.addf %933, %934 : vector<2x10xf32>
    %936 = math.tanh %935 : vector<2x10xf32>
    %937 = arith.mulf %932, %936 : vector<2x10xf32>
    %938 = tpu.concatenate %509, %937 in 1 : vector<2x10xf32>, vector<2x10xf32> -> vector<2x20xf32>
    %939 = tpu.concatenate %537, %909 in 1 : vector<2x10xf32>, vector<2x10xf32> -> vector<2x20xf32>
    %940 = tpu.concatenate %565, %881 in 1 : vector<2x10xf32>, vector<2x10xf32> -> vector<2x20xf32>
    %941 = tpu.concatenate %593, %853 in 1 : vector<2x10xf32>, vector<2x10xf32> -> vector<2x20xf32>
    %942 = tpu.concatenate %621, %825 in 1 : vector<2x10xf32>, vector<2x10xf32> -> vector<2x20xf32>
    %943 = tpu.concatenate %649, %797 in 1 : vector<2x10xf32>, vector<2x10xf32> -> vector<2x20xf32>
    %944 = tpu.concatenate %677, %769 in 1 : vector<2x10xf32>, vector<2x10xf32> -> vector<2x20xf32>
    %945 = tpu.concatenate %705, %741 in 1 : vector<2x10xf32>, vector<2x10xf32> -> vector<2x20xf32>
    %946 = tpu.concatenate %938, %939, %940, %941, %942, %943, %944, %945 in 0 : vector<2x20xf32>, vector<2x20xf32>, vector<2x20xf32>, vector<2x20xf32>, vector<2x20xf32>, vector<2x20xf32>, vector<2x20xf32>, vector<2x20xf32> -> vector<16x20xf32>
    %c0_164 = arith.constant 0 : index
    %c0_165 = arith.constant 0 : index
    %947 = vector.load %arg14[%c0_164, %c0_165] : memref<1x20xf32, #tpu.memory_space<vmem>>, vector<1x20xf32>
    %c0_166 = arith.constant 0 : index
    %c0_167 = arith.constant 0 : index
    %948 = vector.load %arg17[%c0_166, %c0_167] : memref<1x20xf32, #tpu.memory_space<vmem>>, vector<1x20xf32>
    %cst_168 = arith.constant 9.99999974E-6 : f32
    %949 = vector.broadcast %cst_168 : f32 to vector<1x20xf32>
    %950 = arith.addf %948, %949 : vector<1x20xf32>
    %951 = math.rsqrt %950 : vector<1x20xf32>
    %952 = arith.mulf %947, %951 : vector<1x20xf32>
    %c0_169 = arith.constant 0 : index
    %c0_170 = arith.constant 0 : index
    %953 = vector.load %arg15[%c0_169, %c0_170] : memref<1x20xf32, #tpu.memory_space<vmem>>, vector<1x20xf32>
    %c0_171 = arith.constant 0 : index
    %c0_172 = arith.constant 0 : index
    %954 = vector.load %arg16[%c0_171, %c0_172] : memref<1x20xf32, #tpu.memory_space<vmem>>, vector<1x20xf32>
    %955 = arith.mulf %954, %952 : vector<1x20xf32>
    %956 = arith.subf %953, %955 : vector<1x20xf32>
    %957 = vector.broadcast %952 : vector<1x20xf32> to vector<16x20xf32>
    %958 = arith.mulf %946, %957 : vector<16x20xf32>
    %959 = vector.broadcast %956 : vector<1x20xf32> to vector<16x20xf32>
    %960 = arith.addf %958, %959 : vector<16x20xf32>
    %cst_173 = arith.constant 0.000000e+00 : f32
    %961 = vector.broadcast %cst_173 : f32 to vector<16x20xf32>
    %962 = arith.maximumf %960, %961 : vector<16x20xf32>
    %c0_174 = arith.constant 0 : index
    %c0_175 = arith.constant 0 : index
    %963 = vector.load %arg18[%c0_174, %c0_175] : memref<20x1xf32, #tpu.memory_space<vmem>>, vector<20x1xf32>
    %cst_176 = arith.constant dense<0.000000e+00> : vector<16x1xf32>
    %964 = tpu.matmul %962, %963, %cst_176 {dimension_numbers = #tpu.dot_dimension_numbers<[1], [0], [0], [1], [0, 0, 1, 1], [], []>} : vector<16x20xf32>, vector<20x1xf32>, vector<16x1xf32> -> vector<16x1xf32>
    %c0_177 = arith.constant 0 : index
    %c0_178 = arith.constant 0 : index
    %965 = vector.load %arg19[%c0_177, %c0_178] : memref<1x4xf32, #tpu.memory_space<vmem>>, vector<1x4xf32>
    %c0_179 = arith.constant 0 : index
    %c0_180 = arith.constant 0 : index
    %966 = vector.load %arg22[%c0_179, %c0_180] : memref<1x4xf32, #tpu.memory_space<vmem>>, vector<1x4xf32>
    %cst_181 = arith.constant 9.99999974E-6 : f32
    %967 = vector.broadcast %cst_181 : f32 to vector<1x4xf32>
    %968 = arith.addf %966, %967 : vector<1x4xf32>
    %969 = math.rsqrt %968 : vector<1x4xf32>
    %970 = arith.mulf %965, %969 : vector<1x4xf32>
    %c0_182 = arith.constant 0 : index
    %c0_183 = arith.constant 0 : index
    %971 = vector.load %arg20[%c0_182, %c0_183] : memref<1x4xf32, #tpu.memory_space<vmem>>, vector<1x4xf32>
    %c0_184 = arith.constant 0 : index
    %c0_185 = arith.constant 0 : index
    %972 = vector.load %arg21[%c0_184, %c0_185] : memref<1x4xf32, #tpu.memory_space<vmem>>, vector<1x4xf32>
    %973 = arith.mulf %972, %970 : vector<1x4xf32>
    %974 = arith.subf %971, %973 : vector<1x4xf32>
    %c0_186 = arith.constant 0 : index
    %c0_187 = arith.constant 0 : index
    %975 = vector.load %arg1[%c0_186, %c0_187] : memref<2x4xf32, #tpu.memory_space<vmem>>, vector<2x4xf32>
    %976 = vector.broadcast %970 : vector<1x4xf32> to vector<2x4xf32>
    %977 = arith.mulf %975, %976 : vector<2x4xf32>
    %978 = vector.broadcast %974 : vector<1x4xf32> to vector<2x4xf32>
    %979 = arith.addf %977, %978 : vector<2x4xf32>
    %cst_188 = arith.constant 0.000000e+00 : f32
    %980 = vector.broadcast %cst_188 : f32 to vector<2x4xf32>
    %981 = arith.maximumf %979, %980 : vector<2x4xf32>
    %c0_189 = arith.constant 0 : index
    %c0_190 = arith.constant 0 : index
    %982 = vector.load %arg23[%c0_189, %c0_190] : memref<4x1xf32, #tpu.memory_space<vmem>>, vector<4x1xf32>
    %cst_191 = arith.constant dense<0.000000e+00> : vector<2x1xf32>
    %983 = tpu.matmul %981, %982, %cst_191 {dimension_numbers = #tpu.dot_dimension_numbers<[1], [0], [0], [1], [0, 0, 1, 1], [], []>} : vector<2x4xf32>, vector<4x1xf32>, vector<2x1xf32> -> vector<2x1xf32>
    %984 = vector.extract_strided_slice %964 {offsets = [0, 0], sizes = [2, 1], strides = [1, 1]} : vector<16x1xf32> to vector<2x1xf32>
    %985 = arith.addf %984, %983 : vector<2x1xf32>
    %c0_192 = arith.constant 0 : index
    %c0_193 = arith.constant 0 : index
    %986 = vector.load %arg24[%c0_192, %c0_193] : memref<1x1xf32, #tpu.memory_space<vmem>>, vector<1x1xf32>
    %987 = vector.broadcast %986 : vector<1x1xf32> to vector<2x1xf32>
    %988 = arith.addf %985, %987 : vector<2x1xf32>
    %cst_194 = arith.constant 0.000000e+00 : f32
    %989 = vector.broadcast %cst_194 : f32 to vector<2x1xf32>
    %990 = arith.maximumf %988, %989 : vector<2x1xf32>
    %991 = vector.extract_strided_slice %964 {offsets = [2, 0], sizes = [2, 1], strides = [1, 1]} : vector<16x1xf32> to vector<2x1xf32>
    %992 = arith.addf %991, %983 : vector<2x1xf32>
    %c0_195 = arith.constant 0 : index
    %c0_196 = arith.constant 0 : index
    %993 = vector.load %arg24[%c0_195, %c0_196] : memref<1x1xf32, #tpu.memory_space<vmem>>, vector<1x1xf32>
    %994 = vector.broadcast %993 : vector<1x1xf32> to vector<2x1xf32>
    %995 = arith.addf %992, %994 : vector<2x1xf32>
    %cst_197 = arith.constant 0.000000e+00 : f32
    %996 = vector.broadcast %cst_197 : f32 to vector<2x1xf32>
    %997 = arith.maximumf %995, %996 : vector<2x1xf32>
    %998 = vector.extract_strided_slice %964 {offsets = [4, 0], sizes = [2, 1], strides = [1, 1]} : vector<16x1xf32> to vector<2x1xf32>
    %999 = arith.addf %998, %983 : vector<2x1xf32>
    %c0_198 = arith.constant 0 : index
    %c0_199 = arith.constant 0 : index
    %1000 = vector.load %arg24[%c0_198, %c0_199] : memref<1x1xf32, #tpu.memory_space<vmem>>, vector<1x1xf32>
    %1001 = vector.broadcast %1000 : vector<1x1xf32> to vector<2x1xf32>
    %1002 = arith.addf %999, %1001 : vector<2x1xf32>
    %cst_200 = arith.constant 0.000000e+00 : f32
    %1003 = vector.broadcast %cst_200 : f32 to vector<2x1xf32>
    %1004 = arith.maximumf %1002, %1003 : vector<2x1xf32>
    %1005 = vector.extract_strided_slice %964 {offsets = [6, 0], sizes = [2, 1], strides = [1, 1]} : vector<16x1xf32> to vector<2x1xf32>
    %1006 = arith.addf %1005, %983 : vector<2x1xf32>
    %c0_201 = arith.constant 0 : index
    %c0_202 = arith.constant 0 : index
    %1007 = vector.load %arg24[%c0_201, %c0_202] : memref<1x1xf32, #tpu.memory_space<vmem>>, vector<1x1xf32>
    %1008 = vector.broadcast %1007 : vector<1x1xf32> to vector<2x1xf32>
    %1009 = arith.addf %1006, %1008 : vector<2x1xf32>
    %cst_203 = arith.constant 0.000000e+00 : f32
    %1010 = vector.broadcast %cst_203 : f32 to vector<2x1xf32>
    %1011 = arith.maximumf %1009, %1010 : vector<2x1xf32>
    %1012 = vector.extract_strided_slice %964 {offsets = [8, 0], sizes = [2, 1], strides = [1, 1]} : vector<16x1xf32> to vector<2x1xf32>
    %1013 = arith.addf %1012, %983 : vector<2x1xf32>
    %c0_204 = arith.constant 0 : index
    %c0_205 = arith.constant 0 : index
    %1014 = vector.load %arg24[%c0_204, %c0_205] : memref<1x1xf32, #tpu.memory_space<vmem>>, vector<1x1xf32>
    %1015 = vector.broadcast %1014 : vector<1x1xf32> to vector<2x1xf32>
    %1016 = arith.addf %1013, %1015 : vector<2x1xf32>
    %cst_206 = arith.constant 0.000000e+00 : f32
    %1017 = vector.broadcast %cst_206 : f32 to vector<2x1xf32>
    %1018 = arith.maximumf %1016, %1017 : vector<2x1xf32>
    %1019 = vector.extract_strided_slice %964 {offsets = [10, 0], sizes = [2, 1], strides = [1, 1]} : vector<16x1xf32> to vector<2x1xf32>
    %1020 = arith.addf %1019, %983 : vector<2x1xf32>
    %c0_207 = arith.constant 0 : index
    %c0_208 = arith.constant 0 : index
    %1021 = vector.load %arg24[%c0_207, %c0_208] : memref<1x1xf32, #tpu.memory_space<vmem>>, vector<1x1xf32>
    %1022 = vector.broadcast %1021 : vector<1x1xf32> to vector<2x1xf32>
    %1023 = arith.addf %1020, %1022 : vector<2x1xf32>
    %cst_209 = arith.constant 0.000000e+00 : f32
    %1024 = vector.broadcast %cst_209 : f32 to vector<2x1xf32>
    %1025 = arith.maximumf %1023, %1024 : vector<2x1xf32>
    %1026 = vector.extract_strided_slice %964 {offsets = [12, 0], sizes = [2, 1], strides = [1, 1]} : vector<16x1xf32> to vector<2x1xf32>
    %1027 = arith.addf %1026, %983 : vector<2x1xf32>
    %c0_210 = arith.constant 0 : index
    %c0_211 = arith.constant 0 : index
    %1028 = vector.load %arg24[%c0_210, %c0_211] : memref<1x1xf32, #tpu.memory_space<vmem>>, vector<1x1xf32>
    %1029 = vector.broadcast %1028 : vector<1x1xf32> to vector<2x1xf32>
    %1030 = arith.addf %1027, %1029 : vector<2x1xf32>
    %cst_212 = arith.constant 0.000000e+00 : f32
    %1031 = vector.broadcast %cst_212 : f32 to vector<2x1xf32>
    %1032 = arith.maximumf %1030, %1031 : vector<2x1xf32>
    %1033 = vector.extract_strided_slice %964 {offsets = [14, 0], sizes = [2, 1], strides = [1, 1]} : vector<16x1xf32> to vector<2x1xf32>
    %1034 = arith.addf %1033, %983 : vector<2x1xf32>
    %c0_213 = arith.constant 0 : index
    %c0_214 = arith.constant 0 : index
    %1035 = vector.load %arg24[%c0_213, %c0_214] : memref<1x1xf32, #tpu.memory_space<vmem>>, vector<1x1xf32>
    %1036 = vector.broadcast %1035 : vector<1x1xf32> to vector<2x1xf32>
    %1037 = arith.addf %1034, %1036 : vector<2x1xf32>
    %cst_215 = arith.constant 0.000000e+00 : f32
    %1038 = vector.broadcast %cst_215 : f32 to vector<2x1xf32>
    %1039 = arith.maximumf %1037, %1038 : vector<2x1xf32>
    %1040 = tpu.concatenate %990, %997, %1004, %1011, %1018, %1025, %1032, %1039 in 1 : vector<2x1xf32>, vector<2x1xf32>, vector<2x1xf32>, vector<2x1xf32>, vector<2x1xf32>, vector<2x1xf32>, vector<2x1xf32>, vector<2x1xf32> -> vector<2x8xf32>
    %c0_216 = arith.constant 0 : index
    %c0_217 = arith.constant 0 : index
    %1041 = vector.load %arg25[%c0_216, %c0_217] : memref<2x8xf32, #tpu.memory_space<vmem>>, vector<2x8xf32>
    tpu.vector_store %arg25[%c0_216, %c0_217], %1040 {strides = array<i32>} : memref<2x8xf32, #tpu.memory_space<vmem>>, vector<2x8xf32>,
    return
  }
}

</mosaic_0001>

<llo_original>
// kernel: tpu_custom_call.1
$region0: #{tpu_custom_call.1}
  #allocation0 [shape = 'u32[]', space=smem, size = 0x4, offset = 0x4, fixed_abs, tag = 'smem constant byte address 0x4 - core index']
  #allocation1 [shape = 'u32[144,128]{1,0:T(1,128)}', space=vmem, size = 0x12000, scoped, tag = 'internal scratch']
  #allocation2 [shape = 'f32[1,1]{1,0:T(1,128)S(1)}', space=vmem, size = 0x200, scoped, tag = 'scoped memory for tpu_custom_call.1']
  %s0 = inlined_call_operand.hbm [shape: f32[16,16], index: 0, kind: input, shape index: {}]
  %s1 = inlined_call_operand.hbm [shape: f32[2,4], index: 1, kind: input, shape index: {}]
  %s2 = inlined_call_operand.hbm [shape: f32[16,40], index: 2, kind: input, shape index: {}]
  %s3 = inlined_call_operand.hbm [shape: f32[10,40], index: 3, kind: input, shape index: {}]
  %s4 = inlined_call_operand.hbm [shape: f32[1,40], index: 4, kind: input, shape index: {}]
  %s5 = inlined_call_operand.hbm [shape: f32[16,40], index: 5, kind: input, shape index: {}]
  %s6 = inlined_call_operand.hbm [shape: f32[10,40], index: 6, kind: input, shape index: {}]
  %s7 = inlined_call_operand.hbm [shape: f32[1,40], index: 7, kind: input, shape index: {}]
  %s8 = inlined_call_operand.vmem [shape: f32[20,40], index: 8, kind: input, shape index: {}]
  %s9 = inlined_call_operand.vmem [shape: f32[10,40], index: 9, kind: input, shape index: {}]
  %s10 = inlined_call_operand.vmem [shape: f32[1,40], index: 10, kind: input, shape index: {}]
  %s11 = inlined_call_operand.vmem [shape: f32[20,40], index: 11, kind: input, shape index: {}]
  %s12 = inlined_call_operand.hbm [shape: f32[10,40], index: 12, kind: input, shape index: {}]
  %s13 = inlined_call_operand.vmem [shape: f32[1,40], index: 13, kind: input, shape index: {}]
  %s14 = inlined_call_operand.vmem [shape: f32[1,20], index: 14, kind: input, shape index: {}]
  %s15 = inlined_call_operand.vmem [shape: f32[1,20], index: 15, kind: input, shape index: {}]
  %s16 = inlined_call_operand.vmem [shape: f32[1,20], index: 16, kind: input, shape index: {}]
  %s17 = inlined_call_operand.vmem [shape: f32[1,20], index: 17, kind: input, shape index: {}]
  %s18 = inlined_call_operand.vmem [shape: f32[20,1], index: 18, kind: input, shape index: {}]
  %s19 = inlined_call_operand.vmem [shape: f32[1,4], index: 19, kind: input, shape index: {}]
  %s20 = inlined_call_operand.vmem [shape: f32[1,4], index: 20, kind: input, shape index: {}]
  %s21 = inlined_call_operand.vmem [shape: f32[1,4], index: 21, kind: input, shape index: {}]
  %s22 = inlined_call_operand.vmem [shape: f32[1,4], index: 22, kind: input, shape index: {}]
  %s23 = inlined_call_operand.vmem [shape: f32[4,1], index: 23, kind: input, shape index: {}]
  %s24 = inlined_call_operand.<no memory space> [shape: f32[1,1], index: 24, kind: input, shape index: {}]
  %s25 = inlined_call_operand.hbm [shape: f32[2,8], index: 25, kind: output, shape index: {}]
  %s26 = sld [smem:[#allocation0]]
  $region146: #{tpu_custom_call.1} parent=0
    _
  %s28 = ssub.s32 1, %s26
  %s29 = scalar_select 0, %s28, %s26
  %v30 = vstv %s24
  %31 = vst [vmem:[#allocation2] sm:$0x1] %v30
  $region1: #{tpu_custom_call.1} parent=0
    #allocation3 [shape = 'u8[8192]{0}', space=vmem, size = 0x2000, scoped, tag = 'input window, operand 0, single buffered']
    #allocation4 [shape = 's32[1]{0}', space=sflag, size = 0x4, scoped, tag = 'scoped memory for tpu_custom_call.1']
    #allocation5 [shape = 's32[1]{0}', space=sflag, size = 0x4, scoped, tag = 'scoped memory for tpu_custom_call.1']
    #allocation6 [shape = 'u8[1024]{0}', space=vmem, size = 0x400, scoped, tag = 'input window, operand 1, single buffered']
    #allocation7 [shape = 's32[1]{0}', space=sflag, size = 0x4, scoped, tag = 'scoped memory for tpu_custom_call.1']
    #allocation8 [shape = 'u8[8192]{0}', space=vmem, size = 0x2000, scoped, tag = 'input window, operand 2, single buffered']
    #allocation9 [shape = 'u8[8192]{0}', space=vmem, size = 0x2000, scoped, tag = 'input window, operand 3, single buffered']
    #allocation10 [shape = 's32[1]{0}', space=sflag, size = 0x4, scoped, tag = 'scoped memory for tpu_custom_call.1']
    #allocation11 [shape = 'u8[512]{0}', space=vmem, size = 0x400, scoped, tag = 'input window, operand 4, single buffered']
    #allocation12 [shape = 'u8[8192]{0}', space=vmem, size = 0x2000, scoped, tag = 'input window, operand 5, single buffered']
    #allocation13 [shape = 's32[1]{0}', space=sflag, size = 0x4, scoped, tag = 'scoped memory for tpu_custom_call.1']
    #allocation14 [shape = 'u8[8192]{0}', space=vmem, size = 0x2000, scoped, tag = 'input window, operand 6, single buffered']
    #allocation15 [shape = 'u8[512]{0}', space=vmem, size = 0x400, scoped, tag = 'input window, operand 7, single buffered']
    #allocation16 [shape = 's32[1]{0}', space=sflag, size = 0x4, scoped, tag = 'scoped memory for tpu_custom_call.1']
    #allocation17 [shape = 'u8[8192]{0}', space=vmem, size = 0x2000, scoped, tag = 'input window, operand 12, single buffered']
    #allocation18 [shape = 'u8[1024]{0}', space=vmem, size = 0x400, scoped, tag = 'output window, operand 0, single buffered']
    %32 = vsyncpa [#allocation4], 0
    %33 = vsyncpa [#allocation7], 0
    %34 = vsyncpa [#allocation10], 0
    %35 = vsyncpa [#allocation13], 0
    %36 = vsyncpa [#allocation16], 0
    %37 = vsyncpa [#allocation5], 0
    // Predicated region
    $region2: #{tpu_custom_call.1} parent=1 // pred_check
      _
    $region3: #{tpu_custom_call.1} parent=1 // pred_check_branch
      %39 = sbr.rel (0) target = $region5
    $region4: #{tpu_custom_call.1} parent=1 // pred_region
      %s41 = ssub.s32 256, 256
      %42 = vsyncadd [#allocation4], %s41
      %s43 = sshll.u32 [#allocation3], 4
      %s44 = int_to_ptr.vmem [resolvable:$true] %s43
      %49 = dma.hbm_to_vmem [thread:$0]  %s0, 256, %s44, [#allocation4], 128, 128, 8
    $region5: #{tpu_custom_call.1} parent=1 // pred_fallthru
      _
    // Predicated region
    $region6: #{tpu_custom_call.1} parent=1 // pred_check
      _
    $region7: #{tpu_custom_call.1} parent=1 // pred_check_branch
      %51 = sbr.rel (0) target = $region9
    $region8: #{tpu_custom_call.1} parent=1 // pred_region
      %s53 = ssub.s32 32, 32
      %54 = vsyncadd [#allocation7], %s53
      %s56 = sshll.u32 [#allocation6], 4
      %s57 = int_to_ptr.vmem [resolvable:$true] %s56
      %59 = dma.hbm_to_vmem [thread:$0]  %s1, 32, %s57, [#allocation7]
    $region9: #{tpu_custom_call.1} parent=1 // pred_fallthru
      _
    // Predicated region
    $region10: #{tpu_custom_call.1} parent=1 // pred_check
      _
    $region11: #{tpu_custom_call.1} parent=1 // pred_check_branch
      %61 = sbr.rel (0) target = $region13
    $region12: #{tpu_custom_call.1} parent=1 // pred_region
      %s63 = ssub.s32 256, 256
      %64 = vsyncadd [#allocation7], %s63
      %s65 = sshll.u32 [#allocation8], 4
      %s66 = int_to_ptr.vmem [resolvable:$true] %s65
      %71 = dma.hbm_to_vmem [thread:$0]  %s2, 256, %s66, [#allocation7], 128, 128, 8
    $region13: #{tpu_custom_call.1} parent=1 // pred_fallthru
      _
    // Predicated region
    $region14: #{tpu_custom_call.1} parent=1 // pred_check
      _
    $region15: #{tpu_custom_call.1} parent=1 // pred_check_branch
      %73 = sbr.rel (0) target = $region17
    $region16: #{tpu_custom_call.1} parent=1 // pred_region
      %s75 = ssub.s32 256, 256
      %76 = vsyncadd [#allocation10], %s75
      %s77 = sshll.u32 [#allocation9], 4
      %s78 = int_to_ptr.vmem [resolvable:$true] %s77
      %83 = dma.hbm_to_vmem [thread:$0]  %s3, 256, %s78, [#allocation10], 128, 128, 8
    $region17: #{tpu_custom_call.1} parent=1 // pred_fallthru
      _
    // Predicated region
    $region18: #{tpu_custom_call.1} parent=1 // pred_check
      _
    $region19: #{tpu_custom_call.1} parent=1 // pred_check_branch
      %85 = sbr.rel (0) target = $region21
    $region20: #{tpu_custom_call.1} parent=1 // pred_region
      %s87 = ssub.s32 16, 16
      %88 = vsyncadd [#allocation10], %s87
      %s90 = sshll.u32 [#allocation11], 4
      %s91 = int_to_ptr.vmem [resolvable:$true] %s90
      %93 = dma.hbm_to_vmem [thread:$0]  %s4, 16, %s91, [#allocation10]
    $region21: #{tpu_custom_call.1} parent=1 // pred_fallthru
      _
    // Predicated region
    $region22: #{tpu_custom_call.1} parent=1 // pred_check
      _
    $region23: #{tpu_custom_call.1} parent=1 // pred_check_branch
      %95 = sbr.rel (0) target = $region25
    $region24: #{tpu_custom_call.1} parent=1 // pred_region
      %s97 = ssub.s32 256, 256
      %98 = vsyncadd [#allocation13], %s97
      %s99 = sshll.u32 [#allocation12], 4
      %s100 = int_to_ptr.vmem [resolvable:$true] %s99
      %105 = dma.hbm_to_vmem [thread:$0]  %s5, 256, %s100, [#allocation13], 128, 128, 8
    $region25: #{tpu_custom_call.1} parent=1 // pred_fallthru
      _
    // Predicated region
    $region26: #{tpu_custom_call.1} parent=1 // pred_check
      _
    $region27: #{tpu_custom_call.1} parent=1 // pred_check_branch
      %107 = sbr.rel (0) target = $region29
    $region28: #{tpu_custom_call.1} parent=1 // pred_region
      %s109 = ssub.s32 256, 256
      %110 = vsyncadd [#allocation13], %s109
      %s111 = sshll.u32 [#allocation14], 4
      %s112 = int_to_ptr.vmem [resolvable:$true] %s111
      %117 = dma.hbm_to_vmem [thread:$0]  %s6, 256, %s112, [#allocation13], 128, 128, 8
    $region29: #{tpu_custom_call.1} parent=1 // pred_fallthru
      _
    // Predicated region
    $region30: #{tpu_custom_call.1} parent=1 // pred_check
      _
    $region31: #{tpu_custom_call.1} parent=1 // pred_check_branch
      %119 = sbr.rel (0) target = $region33
    $region32: #{tpu_custom_call.1} parent=1 // pred_region
      %s121 = ssub.s32 16, 16
      %122 = vsyncadd [#allocation16], %s121
      %s124 = sshll.u32 [#allocation15], 4
      %s125 = int_to_ptr.vmem [resolvable:$true] %s124
      %127 = dma.hbm_to_vmem [thread:$0]  %s7, 16, %s125, [#allocation16]
    $region33: #{tpu_custom_call.1} parent=1 // pred_fallthru
      _
    // Predicated region
    $region34: #{tpu_custom_call.1} parent=1 // pred_check
      _
    $region35: #{tpu_custom_call.1} parent=1 // pred_check_branch
      %129 = sbr.rel (0) target = $region37
    $region36: #{tpu_custom_call.1} parent=1 // pred_region
      _
    $region37: #{tpu_custom_call.1} parent=1 // pred_fallthru
      _
    // Predicated region
    $region38: #{tpu_custom_call.1} parent=1 // pred_check
      _
    $region39: #{tpu_custom_call.1} parent=1 // pred_check_branch
      %131 = sbr.rel (0) target = $region41
    $region40: #{tpu_custom_call.1} parent=1 // pred_region
      _
    $region41: #{tpu_custom_call.1} parent=1 // pred_fallthru
      _
    // Predicated region
    $region42: #{tpu_custom_call.1} parent=1 // pred_check
      _
    $region43: #{tpu_custom_call.1} parent=1 // pred_check_branch
      %133 = sbr.rel (0) target = $region45
    $region44: #{tpu_custom_call.1} parent=1 // pred_region
      _
    $region45: #{tpu_custom_call.1} parent=1 // pred_fallthru
      _
    // Predicated region
    $region46: #{tpu_custom_call.1} parent=1 // pred_check
      _
    $region47: #{tpu_custom_call.1} parent=1 // pred_check_branch
      %135 = sbr.rel (0) target = $region49
    $region48: #{tpu_custom_call.1} parent=1 // pred_region
      _
    $region49: #{tpu_custom_call.1} parent=1 // pred_fallthru
      _
    // Predicated region
    $region50: #{tpu_custom_call.1} parent=1 // pred_check
      _
    $region51: #{tpu_custom_call.1} parent=1 // pred_check_branch
      %137 = sbr.rel (0) target = $region53
    $region52: #{tpu_custom_call.1} parent=1 // pred_region
      %s139 = ssub.s32 256, 256
      %140 = vsyncadd [#allocation16], %s139
      %s141 = sshll.u32 [#allocation17], 4
      %s142 = int_to_ptr.vmem [resolvable:$true] %s141
      %147 = dma.hbm_to_vmem [thread:$0]  %s12, 256, %s142, [#allocation16], 128, 128, 8
    $region53: #{tpu_custom_call.1} parent=1 // pred_fallthru
      _
    // Predicated region
    $region54: #{tpu_custom_call.1} parent=1 // pred_check
      _
    $region55: #{tpu_custom_call.1} parent=1 // pred_check_branch
      %149 = sbr.rel (0) target = $region57
    $region56: #{tpu_custom_call.1} parent=1 // pred_region
      _
    $region57: #{tpu_custom_call.1} parent=1 // pred_fallthru
      _
    // Predicated region
    $region58: #{tpu_custom_call.1} parent=1 // pred_check
      _
    $region59: #{tpu_custom_call.1} parent=1 // pred_check_branch
      %151 = sbr.rel (0) target = $region61
    $region60: #{tpu_custom_call.1} parent=1 // pred_region
      _
    $region61: #{tpu_custom_call.1} parent=1 // pred_fallthru
      _
    // Predicated region
    $region62: #{tpu_custom_call.1} parent=1 // pred_check
      _
    $region63: #{tpu_custom_call.1} parent=1 // pred_check_branch
      %153 = sbr.rel (0) target = $region65
    $region64: #{tpu_custom_call.1} parent=1 // pred_region
      _
    $region65: #{tpu_custom_call.1} parent=1 // pred_fallthru
      _
    // Predicated region
    $region66: #{tpu_custom_call.1} parent=1 // pred_check
      _
    $region67: #{tpu_custom_call.1} parent=1 // pred_check_branch
      %155 = sbr.rel (0) target = $region69
    $region68: #{tpu_custom_call.1} parent=1 // pred_region
      _
    $region69: #{tpu_custom_call.1} parent=1 // pred_fallthru
      _
    // Predicated region
    $region70: #{tpu_custom_call.1} parent=1 // pred_check
      _
    $region71: #{tpu_custom_call.1} parent=1 // pred_check_branch
      %157 = sbr.rel (0) target = $region73
    $region72: #{tpu_custom_call.1} parent=1 // pred_region
      _
    $region73: #{tpu_custom_call.1} parent=1 // pred_fallthru
      _
    // Predicated region
    $region74: #{tpu_custom_call.1} parent=1 // pred_check
      _
    $region75: #{tpu_custom_call.1} parent=1 // pred_check_branch
      %159 = sbr.rel (0) target = $region77
    $region76: #{tpu_custom_call.1} parent=1 // pred_region
      _
    $region77: #{tpu_custom_call.1} parent=1 // pred_fallthru
      _
    // Predicated region
    $region78: #{tpu_custom_call.1} parent=1 // pred_check
      _
    $region79: #{tpu_custom_call.1} parent=1 // pred_check_branch
      %161 = sbr.rel (0) target = $region81
    $region80: #{tpu_custom_call.1} parent=1 // pred_region
      _
    $region81: #{tpu_custom_call.1} parent=1 // pred_fallthru
      _
    // Predicated region
    $region82: #{tpu_custom_call.1} parent=1 // pred_check
      _
    $region83: #{tpu_custom_call.1} parent=1 // pred_check_branch
      %163 = sbr.rel (0) target = $region85
    $region84: #{tpu_custom_call.1} parent=1 // pred_region
      _
    $region85: #{tpu_custom_call.1} parent=1 // pred_fallthru
      _
    // Predicated region
    $region86: #{tpu_custom_call.1} parent=1 // pred_check
      _
    $region87: #{tpu_custom_call.1} parent=1 // pred_check_branch
      %165 = sbr.rel (0) target = $region89
    $region88: #{tpu_custom_call.1} parent=1 // pred_region
      _
    $region89: #{tpu_custom_call.1} parent=1 // pred_fallthru
      _
    // Predicated region
    $region90: #{tpu_custom_call.1} parent=1 // pred_check
      _
    $region91: #{tpu_custom_call.1} parent=1 // pred_check_branch
      %167 = sbr.rel (0) target = $region93
    $region92: #{tpu_custom_call.1} parent=1 // pred_region
      _
    $region93: #{tpu_custom_call.1} parent=1 // pred_fallthru
      _
    // Predicated region
    $region94: #{tpu_custom_call.1} parent=1 // pred_check
      _
    $region95: #{tpu_custom_call.1} parent=1 // pred_check_branch
      %169 = sbr.rel (0) target = $region97
    $region96: #{tpu_custom_call.1} parent=1 // pred_region
      _
    $region97: #{tpu_custom_call.1} parent=1 // pred_fallthru
      _
    // Predicated region
    $region98: #{tpu_custom_call.1} parent=1 // pred_check
      _
    $region99: #{tpu_custom_call.1} parent=1 // pred_check_branch
      %171 = sbr.rel (0) target = $region101
    $region100: #{tpu_custom_call.1} parent=1 // pred_region
      _
    $region101: #{tpu_custom_call.1} parent=1 // pred_fallthru
      _
    // Predicated region
    $region102: #{tpu_custom_call.1} parent=1 // pred_check
      _
    $region103: #{tpu_custom_call.1} parent=1 // pred_check_branch
      %173 = sbr.rel (0) target = $region105
    $region104: #{tpu_custom_call.1} parent=1 // pred_region
      %174 = dma.done [#allocation4], 256
    $region105: #{tpu_custom_call.1} parent=1 // pred_fallthru
      _
    // Predicated region
    $region106: #{tpu_custom_call.1} parent=1 // pred_check
      _
    $region107: #{tpu_custom_call.1} parent=1 // pred_check_branch
      %176 = sbr.rel (0) target = $region109
    $region108: #{tpu_custom_call.1} parent=1 // pred_region
      %177 = dma.done [#allocation7], 32
    $region109: #{tpu_custom_call.1} parent=1 // pred_fallthru
      _
    // Predicated region
    $region110: #{tpu_custom_call.1} parent=1 // pred_check
      _
    $region111: #{tpu_custom_call.1} parent=1 // pred_check_branch
      %179 = sbr.rel (0) target = $region113
    $region112: #{tpu_custom_call.1} parent=1 // pred_region
      %180 = dma.done [#allocation7], 256
    $region113: #{tpu_custom_call.1} parent=1 // pred_fallthru
      _
    // Predicated region
    $region114: #{tpu_custom_call.1} parent=1 // pred_check
      _
    $region115: #{tpu_custom_call.1} parent=1 // pred_check_branch
      %182 = sbr.rel (0) target = $region117
    $region116: #{tpu_custom_call.1} parent=1 // pred_region
      %183 = dma.done [#allocation10], 256
    $region117: #{tpu_custom_call.1} parent=1 // pred_fallthru
      _
    // Predicated region
    $region118: #{tpu_custom_call.1} parent=1 // pred_check
      _
    $region119: #{tpu_custom_call.1} parent=1 // pred_check_branch
      %185 = sbr.rel (0) target = $region121
    $region120: #{tpu_custom_call.1} parent=1 // pred_region
      %186 = dma.done [#allocation10], 16
    $region121: #{tpu_custom_call.1} parent=1 // pred_fallthru
      _
    // Predicated region
    $region122: #{tpu_custom_call.1} parent=1 // pred_check
      _
    $region123: #{tpu_custom_call.1} parent=1 // pred_check_branch
      %188 = sbr.rel (0) target = $region125
    $region124: #{tpu_custom_call.1} parent=1 // pred_region
      %189 = dma.done [#allocation13], 256
    $region125: #{tpu_custom_call.1} parent=1 // pred_fallthru
      _
    // Predicated region
    $region126: #{tpu_custom_call.1} parent=1 // pred_check
      _
    $region127: #{tpu_custom_call.1} parent=1 // pred_check_branch
      %191 = sbr.rel (0) target = $region129
    $region128: #{tpu_custom_call.1} parent=1 // pred_region
      %192 = dma.done [#allocation13], 256
    $region129: #{tpu_custom_call.1} parent=1 // pred_fallthru
      _
    // Predicated region
    $region130: #{tpu_custom_call.1} parent=1 // pred_check
      _
    $region131: #{tpu_custom_call.1} parent=1 // pred_check_branch
      %194 = sbr.rel (0) target = $region133
    $region132: #{tpu_custom_call.1} parent=1 // pred_region
      %195 = dma.done [#allocation16], 16
    $region133: #{tpu_custom_call.1} parent=1 // pred_fallthru
      _
    // Predicated region
    $region134: #{tpu_custom_call.1} parent=1 // pred_check
      _
    $region135: #{tpu_custom_call.1} parent=1 // pred_check_branch
      %197 = sbr.rel (0) target = $region137
    $region136: #{tpu_custom_call.1} parent=1 // pred_region
      %198 = dma.done [#allocation16], 256
    $region137: #{tpu_custom_call.1} parent=1 // pred_fallthru
      _
    %v199 = vld [vmem:[#allocation3] sm:$0xff]
    %v200 = vld [vmem:[#allocation3 + $0x8] sm:$0xff]
    %v201 = vld [vmem:[#allocation8] sm:$0xff]
    %v202 = vld [vmem:[#allocation8 + $0x8] sm:$0xff]
    %v203 = vld [vmem:[#allocation9] sm:$0xff]
    %v204 = vld [vmem:[#allocation9 + $0x8] sm:$0x3]
    %v205 = vld [vmem:[#allocation11] sm:$0x1]
    %v207 = vlaneseq
    %v208 = vshrl.u32 %v207, 7
    %v209 = vsub.s32 0, %v208
    %v210 = vrot.slane %v205, %v209
    %vm212 = vcmask 130048
    %v214 = vsel %vm212, %v199, 0
    %v217 = vsel %vm212, %v200, 0
    %219 = vmatprep.subr.mxu0 0.0
    %220 = vmatpush1.msra.mxu0 %v201
    %221 = vmatprep.subr.mxu0 0.0
    %222 = vmatpush1.msra.mxu0 %v202
    %223 = vmatprep.subr.mxu0 0.0
    %224 = vmatpush1.msra.mxu0 0.0
    %225 = vmatprep.subr.mxu0 0.0
    %226 = vmatpush1.msra.mxu0 0.0
    %227 = vmatprep.subr.mxu0 0.0
    %228 = vmatpush1.msra.mxu0 0.0
    %229 = vmatprep.subr.mxu0 0.0
    %230 = vmatpush1.msra.mxu0 0.0
    %231 = vmatprep.subr.mxu0 0.0
    %232 = vmatpush1.msra.mxu0 0.0
    %233 = vmatprep.subr.mxu0 0.0
    %234 = vmatpush1.msra.mxu0 0.0
    %235 = vmatprep.subr.mxu0 0.0
    %236 = vmatpush1.msra.mxu0 0.0
    %237 = vmatprep.subr.mxu0 0.0
    %238 = vmatpush1.msra.mxu0 0.0
    %239 = vmatprep.subr.mxu0 0.0
    %240 = vmatpush1.msra.mxu0 0.0
    %241 = vmatprep.subr.mxu0 0.0
    %242 = vmatpush1.msra.mxu0 0.0
    %243 = vmatprep.subr.mxu0 0.0
    %244 = vmatpush1.msra.mxu0 0.0
    %245 = vmatprep.subr.mxu0 0.0
    %246 = vmatpush1.msra.mxu0 0.0
    %247 = vmatprep.subr.mxu0 0.0
    %248 = vmatpush1.msra.mxu0 0.0
    %249 = vmatprep.subr.mxu0 0.0
    %250 = vmatpush1.msra.mxu0 0.0
    %251 = vmatprep.subr.mxu0 0.0
    %252 = vmatpush1.msra.mxu0 0.0
    %253 = vmatprep.subr.mxu0 0.0
    %254 = vmatpush1.msra.mxu0 0.0
    %255 = vmatprep.subr.mxu0 0.0
    %256 = vmatpush1.msra.mxu0 0.0
    %257 = vmatprep.subr.mxu0 0.0
    %258 = vmatpush1.msra.mxu0 0.0
    %259 = vmatprep.subr.mxu0 0.0
    %260 = vmatpush1.msra.mxu0 0.0
    %261 = vmatprep.subr.mxu0 0.0
    %262 = vmatpush1.msra.mxu0 0.0
    %263 = vmatprep.subr.mxu0 0.0
    %264 = vmatpush1.msra.mxu0 0.0
    %265 = vmatprep.subr.mxu0 0.0
    %266 = vmatpush1.msra.mxu0 0.0
    %267 = vmatprep.subr.mxu0 0.0
    %268 = vmatpush1.msra.mxu0 0.0
    %269 = vmatprep.subr.mxu0 0.0
    %270 = vmatpush1.msra.mxu0 0.0
    %271 = vmatprep.subr.mxu0 0.0
    %272 = vmatpush1.msra.mxu0 0.0
    %273 = vmatprep.subr.mxu0 0.0
    %274 = vmatpush1.msra.mxu0 0.0
    %275 = vmatprep.subr.mxu0 0.0
    %276 = vmatpush1.msra.mxu0 0.0
    %277 = vmatprep.subr.mxu0 0.0
    %278 = vmatpush1.msra.mxu0 0.0
    %279 = vmatprep.subr.mxu0 0.0
    %280 = vmatpush1.msra.mxu0 0.0
    %281 = vmatprep.subr.mxu0 0.0
    %282 = vmatpush1.msra.mxu0 0.0
    %283 = vmatprep.mubr.f32.mxu0 0.0
    %284 = vmatmul.mubr.f32.gmra.mrb[0].mxu0 %v214
    %v285 = vpop.f32.mrb[0].mxu0
    %v286 = vadd.f32 %v210, %v285
    %v287 = vpop.f32.mrb[0].mxu0
    %288 = vmatprep.mubr.f32.mxu0 0.0
    %289 = vmatmul.mubr.f32.gmra.mrb[0].mxu0 %v217
    %v290 = vpop.f32.mrb[0].mxu0
    %v291 = vadd.f32 %v210, %v290
    %v292 = vpop.f32.mrb[0].mxu0
    %293 = vdwg.mxu0
    %vm294 = vcmask 80896
    %v296 = vsel %vm294, 0.0, 0
    %vm298 = vcmask 1041408
    %v300 = vsel %vm298, %v204, 0
    %302 = vmatprep.subr.mxu0 0.0
    %303 = vmatpush1.msra.mxu0 %v203
    %304 = vmatprep.subr.mxu0 0.0
    %305 = vmatpush1.msra.mxu0 %v300
    %306 = vmatprep.subr.mxu0 0.0
    %307 = vmatpush1.msra.mxu0 0.0
    %308 = vmatprep.subr.mxu0 0.0
    %309 = vmatpush1.msra.mxu0 0.0
    %310 = vmatprep.subr.mxu0 0.0
    %311 = vmatpush1.msra.mxu0 0.0
    %312 = vmatprep.subr.mxu0 0.0
    %313 = vmatpush1.msra.mxu0 0.0
    %314 = vmatprep.subr.mxu0 0.0
    %315 = vmatpush1.msra.mxu0 0.0
    %316 = vmatprep.subr.mxu0 0.0
    %317 = vmatpush1.msra.mxu0 0.0
    %318 = vmatprep.subr.mxu0 0.0
    %319 = vmatpush1.msra.mxu0 0.0
    %320 = vmatprep.subr.mxu0 0.0
    %321 = vmatpush1.msra.mxu0 0.0
    %322 = vmatprep.subr.mxu0 0.0
    %323 = vmatpush1.msra.mxu0 0.0
    %324 = vmatprep.subr.mxu0 0.0
    %325 = vmatpush1.msra.mxu0 0.0
    %326 = vmatprep.subr.mxu0 0.0
    %327 = vmatpush1.msra.mxu0 0.0
    %328 = vmatprep.subr.mxu0 0.0
    %329 = vmatpush1.msra.mxu0 0.0
    %330 = vmatprep.subr.mxu0 0.0
    %331 = vmatpush1.msra.mxu0 0.0
    %332 = vmatprep.subr.mxu0 0.0
    %333 = vmatpush1.msra.mxu0 0.0
    %334 = vmatprep.subr.mxu0 0.0
    %335 = vmatpush1.msra.mxu0 0.0
    %336 = vmatprep.subr.mxu0 0.0
    %337 = vmatpush1.msra.mxu0 0.0
    %338 = vmatprep.subr.mxu0 0.0
    %339 = vmatpush1.msra.mxu0 0.0
    %340 = vmatprep.subr.mxu0 0.0
    %341 = vmatpush1.msra.mxu0 0.0
    %342 = vmatprep.subr.mxu0 0.0
    %343 = vmatpush1.msra.mxu0 0.0
    %344 = vmatprep.subr.mxu0 0.0
    %345 = vmatpush1.msra.mxu0 0.0
    %346 = vmatprep.subr.mxu0 0.0
    %347 = vmatpush1.msra.mxu0 0.0
    %348 = vmatprep.subr.mxu0 0.0
    %349 = vmatpush1.msra.mxu0 0.0
    %350 = vmatprep.subr.mxu0 0.0
    %351 = vmatpush1.msra.mxu0 0.0
    %352 = vmatprep.subr.mxu0 0.0
    %353 = vmatpush1.msra.mxu0 0.0
    %354 = vmatprep.subr.mxu0 0.0
    %355 = vmatpush1.msra.mxu0 0.0
    %356 = vmatprep.subr.mxu0 0.0
    %357 = vmatpush1.msra.mxu0 0.0
    %358 = vmatprep.subr.mxu0 0.0
    %359 = vmatpush1.msra.mxu0 0.0
    %360 = vmatprep.subr.mxu0 0.0
    %361 = vmatpush1.msra.mxu0 0.0
    %362 = vmatprep.subr.mxu0 0.0
    %363 = vmatpush1.msra.mxu0 0.0
    %364 = vmatprep.subr.mxu0 0.0
    %365 = vmatpush1.msra.mxu0 0.0
    %366 = vmatprep.mubr.f32.mxu0 0.0
    %367 = vmatmul.mubr.f32.gmra.mrb[0].mxu0 %v296
    %v368 = vpop.f32.mrb[0].mxu0
    %v369 = vadd.f32 0.0, %v368
    %v370 = vpop.f32.mrb[0].mxu0
    %371 = vdwg.mxu0
    %v372 = vadd.f32 %v286, %v369
    %v373 = vxor.u32 %v372, 2147483648
    %v374 = vmul.f32 %v373, 1.442695
    %v375 = vpow.pop %v374
    %v376 = vadd.f32 %v375, 1.0
    %v377 = vrcp.pop %v376
    %v378 = vmul.f32 1.0, %v377
    %v379 = vtanh.pop %v372
    %v380 = vmul.f32 %v378, 0.0
    %382 = vrot.lane.b32.xlu0 %v379, 108
    %v383 = vpop.permute.xlu0 %382
    %v385 = vmul.f32 %v378, %v383
    %387 = vrot.lane.b32.xlu0 %v385, 10
    %v388 = vpop.permute.xlu0 %387
    %v390 = vadd.f32 %v380, %v388
    %v391 = vtanh.pop %v390
    %393 = vrot.lane.b32.xlu0 %v391, 20
    %v394 = vpop.permute.xlu0 %393
    %v396 = vmul.f32 %v378, %v394
    %398 = vrot.lane.b32.xlu0 %v396, 98
    %v399 = vpop.permute.xlu0 %398
    %v400 = vsel %vm294, %v399, 0
    %402 = vmatprep.subr.mxu0 0.0
    %403 = vmatpush1.msra.mxu0 %v203
    %404 = vmatprep.subr.mxu0 0.0
    %405 = vmatpush1.msra.mxu0 %v300
    %406 = vmatprep.subr.mxu0 0.0
    %407 = vmatpush1.msra.mxu0 0.0
    %408 = vmatprep.subr.mxu0 0.0
    %409 = vmatpush1.msra.mxu0 0.0
    %410 = vmatprep.subr.mxu0 0.0
    %411 = vmatpush1.msra.mxu0 0.0
    %412 = vmatprep.subr.mxu0 0.0
    %413 = vmatpush1.msra.mxu0 0.0
    %414 = vmatprep.subr.mxu0 0.0
    %415 = vmatpush1.msra.mxu0 0.0
    %416 = vmatprep.subr.mxu0 0.0
    %417 = vmatpush1.msra.mxu0 0.0
    %418 = vmatprep.subr.mxu0 0.0
    %419 = vmatpush1.msra.mxu0 0.0
    %420 = vmatprep.subr.mxu0 0.0
    %421 = vmatpush1.msra.mxu0 0.0
    %422 = vmatprep.subr.mxu0 0.0
    %423 = vmatpush1.msra.mxu0 0.0
    %424 = vmatprep.subr.mxu0 0.0
    %425 = vmatpush1.msra.mxu0 0.0
    %426 = vmatprep.subr.mxu0 0.0
    %427 = vmatpush1.msra.mxu0 0.0
    %428 = vmatprep.subr.mxu0 0.0
    %429 = vmatpush1.msra.mxu0 0.0
    %430 = vmatprep.subr.mxu0 0.0
    %431 = vmatpush1.msra.mxu0 0.0
    %432 = vmatprep.subr.mxu0 0.0
    %433 = vmatpush1.msra.mxu0 0.0
    %434 = vmatprep.subr.mxu0 0.0
    %435 = vmatpush1.msra.mxu0 0.0
    %436 = vmatprep.subr.mxu0 0.0
    %437 = vmatpush1.msra.mxu0 0.0
    %438 = vmatprep.subr.mxu0 0.0
    %439 = vmatpush1.msra.mxu0 0.0
    %440 = vmatprep.subr.mxu0 0.0
    %441 = vmatpush1.msra.mxu0 0.0
    %442 = vmatprep.subr.mxu0 0.0
    %443 = vmatpush1.msra.mxu0 0.0
    %444 = vmatprep.subr.mxu0 0.0
    %445 = vmatpush1.msra.mxu0 0.0
    %446 = vmatprep.subr.mxu0 0.0
    %447 = vmatpush1.msra.mxu0 0.0
    %448 = vmatprep.subr.mxu0 0.0
    %449 = vmatpush1.msra.mxu0 0.0
    %450 = vmatprep.subr.mxu0 0.0
    %451 = vmatpush1.msra.mxu0 0.0
    %452 = vmatprep.subr.mxu0 0.0
    %453 = vmatpush1.msra.mxu0 0.0
    %454 = vmatprep.subr.mxu0 0.0
    %455 = vmatpush1.msra.mxu0 0.0
    %456 = vmatprep.subr.mxu0 0.0
    %457 = vmatpush1.msra.mxu0 0.0
    %458 = vmatprep.subr.mxu0 0.0
    %459 = vmatpush1.msra.mxu0 0.0
    %460 = vmatprep.subr.mxu0 0.0
    %461 = vmatpush1.msra.mxu0 0.0
    %462 = vmatprep.subr.mxu0 0.0
    %463 = vmatpush1.msra.mxu0 0.0
    %464 = vmatprep.subr.mxu0 0.0
    %465 = vmatpush1.msra.mxu0 0.0
    %466 = vmatprep.mubr.f32.mxu0 0.0
    %467 = vmatmul.mubr.f32.gmra.mrb[0].mxu0 %v400
    %v468 = vpop.f32.mrb[0].mxu0
    %v469 = vadd.f32 0.0, %v468
    %v470 = vpop.f32.mrb[0].mxu0
    %471 = vdwg.mxu0
    %v473 = vrot.slane %v469, 6
    %v475 = vadd.f32 %v286, %v473
    %v476 = vxor.u32 %v475, 2147483648
    %v477 = vmul.f32 %v476, 1.442695
    %v478 = vpow.pop %v477
    %v479 = vadd.f32 %v478, 1.0
    %v480 = vrcp.pop %v479
    %v481 = vmul.f32 1.0, %v480
    %v482 = vtanh.pop %v475
    %v484 = vrot.slane %v390, 6
    %v486 = vmul.f32 %v481, %v484
    %488 = vrot.lane.b32.xlu0 %v482, 108
    %v489 = vpop.permute.xlu0 %488
    %v491 = vmul.f32 %v481, %v489
    %493 = vrot.lane.b32.xlu0 %v491, 10
    %v494 = vpop.permute.xlu0 %493
    %v496 = vadd.f32 %v486, %v494
    %v497 = vtanh.pop %v496
    %499 = vrot.lane.b32.xlu0 %v497, 20
    %v500 = vpop.permute.xlu0 %499
    %v502 = vmul.f32 %v481, %v500
    %v504 = vrot.slane %v502, 2
    %505 = vrot.lane.b32.xlu0 %v504, 98
    %v506 = vpop.permute.xlu0 %505
    %v507 = vsel %vm294, %v506, 0
    %509 = vmatprep.subr.mxu0 0.0
    %510 = vmatpush1.msra.mxu0 %v203
    %511 = vmatprep.subr.mxu0 0.0
    %512 = vmatpush1.msra.mxu0 %v300
    %513 = vmatprep.subr.mxu0 0.0
    %514 = vmatpush1.msra.mxu0 0.0
    %515 = vmatprep.subr.mxu0 0.0
    %516 = vmatpush1.msra.mxu0 0.0
    %517 = vmatprep.subr.mxu0 0.0
    %518 = vmatpush1.msra.mxu0 0.0
    %519 = vmatprep.subr.mxu0 0.0
    %520 = vmatpush1.msra.mxu0 0.0
    %521 = vmatprep.subr.mxu0 0.0
    %522 = vmatpush1.msra.mxu0 0.0
    %523 = vmatprep.subr.mxu0 0.0
    %524 = vmatpush1.msra.mxu0 0.0
    %525 = vmatprep.subr.mxu0 0.0
    %526 = vmatpush1.msra.mxu0 0.0
    %527 = vmatprep.subr.mxu0 0.0
    %528 = vmatpush1.msra.mxu0 0.0
    %529 = vmatprep.subr.mxu0 0.0
    %530 = vmatpush1.msra.mxu0 0.0
    %531 = vmatprep.subr.mxu0 0.0
    %532 = vmatpush1.msra.mxu0 0.0
    %533 = vmatprep.subr.mxu0 0.0
    %534 = vmatpush1.msra.mxu0 0.0
    %535 = vmatprep.subr.mxu0 0.0
    %536 = vmatpush1.msra.mxu0 0.0
    %537 = vmatprep.subr.mxu0 0.0
    %538 = vmatpush1.msra.mxu0 0.0
    %539 = vmatprep.subr.mxu0 0.0
    %540 = vmatpush1.msra.mxu0 0.0
    %541 = vmatprep.subr.mxu0 0.0
    %542 = vmatpush1.msra.mxu0 0.0
    %543 = vmatprep.subr.mxu0 0.0
    %544 = vmatpush1.msra.mxu0 0.0
    %545 = vmatprep.subr.mxu0 0.0
    %546 = vmatpush1.msra.mxu0 0.0
    %547 = vmatprep.subr.mxu0 0.0
    %548 = vmatpush1.msra.mxu0 0.0
    %549 = vmatprep.subr.mxu0 0.0
    %550 = vmatpush1.msra.mxu0 0.0
    %551 = vmatprep.subr.mxu0 0.0
    %552 = vmatpush1.msra.mxu0 0.0
    %553 = vmatprep.subr.mxu0 0.0
    %554 = vmatpush1.msra.mxu0 0.0
    %555 = vmatprep.subr.mxu0 0.0
    %556 = vmatpush1.msra.mxu0 0.0
    %557 = vmatprep.subr.mxu0 0.0
    %558 = vmatpush1.msra.mxu0 0.0
    %559 = vmatprep.subr.mxu0 0.0
    %560 = vmatpush1.msra.mxu0 0.0
    %561 = vmatprep.subr.mxu0 0.0
    %562 = vmatpush1.msra.mxu0 0.0
    %563 = vmatprep.subr.mxu0 0.0
    %564 = vmatpush1.msra.mxu0 0.0
    %565 = vmatprep.subr.mxu0 0.0
    %566 = vmatpush1.msra.mxu0 0.0
    %567 = vmatprep.subr.mxu0 0.0
    %568 = vmatpush1.msra.mxu0 0.0
    %569 = vmatprep.subr.mxu0 0.0
    %570 = vmatpush1.msra.mxu0 0.0
    %571 = vmatprep.subr.mxu0 0.0
    %572 = vmatpush1.msra.mxu0 0.0
    %573 = vmatprep.mubr.f32.mxu0 0.0
    %574 = vmatmul.mubr.f32.gmra.mrb[0].mxu0 %v507
    %v575 = vpop.f32.mrb[0].mxu0
    %v576 = vadd.f32 0.0, %v575
    %v577 = vpop.f32.mrb[0].mxu0
    %578 = vdwg.mxu0
    %v580 = vrot.slane %v576, 4
    %v582 = vadd.f32 %v286, %v580
    %v583 = vxor.u32 %v582, 2147483648
    %v584 = vmul.f32 %v583, 1.442695
    %v585 = vpow.pop %v584
    %v586 = vadd.f32 %v585, 1.0
    %v587 = vrcp.pop %v586
    %v588 = vmul.f32 1.0, %v587
    %v589 = vtanh.pop %v582
    %v591 = vrot.slane %v496, 6
    %v593 = vmul.f32 %v588, %v591
    %595 = vrot.lane.b32.xlu0 %v589, 108
    %v596 = vpop.permute.xlu0 %595
    %v598 = vmul.f32 %v588, %v596
    %600 = vrot.lane.b32.xlu0 %v598, 10
    %v601 = vpop.permute.xlu0 %600
    %v603 = vadd.f32 %v593, %v601
    %v604 = vtanh.pop %v603
    %606 = vrot.lane.b32.xlu0 %v604, 20
    %v607 = vpop.permute.xlu0 %606
    %v609 = vmul.f32 %v588, %v607
    %v611 = vrot.slane %v609, 4
    %612 = vrot.lane.b32.xlu0 %v611, 98
    %v613 = vpop.permute.xlu0 %612
    %v614 = vsel %vm294, %v613, 0
    %616 = vmatprep.subr.mxu0 0.0
    %617 = vmatpush1.msra.mxu0 %v203
    %618 = vmatprep.subr.mxu0 0.0
    %619 = vmatpush1.msra.mxu0 %v300
    %620 = vmatprep.subr.mxu0 0.0
    %621 = vmatpush1.msra.mxu0 0.0
    %622 = vmatprep.subr.mxu0 0.0
    %623 = vmatpush1.msra.mxu0 0.0
    %624 = vmatprep.subr.mxu0 0.0
    %625 = vmatpush1.msra.mxu0 0.0
    %626 = vmatprep.subr.mxu0 0.0
    %627 = vmatpush1.msra.mxu0 0.0
    %628 = vmatprep.subr.mxu0 0.0
    %629 = vmatpush1.msra.mxu0 0.0
    %630 = vmatprep.subr.mxu0 0.0
    %631 = vmatpush1.msra.mxu0 0.0
    %632 = vmatprep.subr.mxu0 0.0
    %633 = vmatpush1.msra.mxu0 0.0
    %634 = vmatprep.subr.mxu0 0.0
    %635 = vmatpush1.msra.mxu0 0.0
    %636 = vmatprep.subr.mxu0 0.0
    %637 = vmatpush1.msra.mxu0 0.0
    %638 = vmatprep.subr.mxu0 0.0
    %639 = vmatpush1.msra.mxu0 0.0
    %640 = vmatprep.subr.mxu0 0.0
    %641 = vmatpush1.msra.mxu0 0.0
    %642 = vmatprep.subr.mxu0 0.0
    %643 = vmatpush1.msra.mxu0 0.0
    %644 = vmatprep.subr.mxu0 0.0
    %645 = vmatpush1.msra.mxu0 0.0
    %646 = vmatprep.subr.mxu0 0.0
    %647 = vmatpush1.msra.mxu0 0.0
    %648 = vmatprep.subr.mxu0 0.0
    %649 = vmatpush1.msra.mxu0 0.0
    %650 = vmatprep.subr.mxu0 0.0
    %651 = vmatpush1.msra.mxu0 0.0
    %652 = vmatprep.subr.mxu0 0.0
    %653 = vmatpush1.msra.mxu0 0.0
    %654 = vmatprep.subr.mxu0 0.0
    %655 = vmatpush1.msra.mxu0 0.0
    %656 = vmatprep.subr.mxu0 0.0
    %657 = vmatpush1.msra.mxu0 0.0
    %658 = vmatprep.subr.mxu0 0.0
    %659 = vmatpush1.msra.mxu0 0.0
    %660 = vmatprep.subr.mxu0 0.0
    %661 = vmatpush1.msra.mxu0 0.0
    %662 = vmatprep.subr.mxu0 0.0
    %663 = vmatpush1.msra.mxu0 0.0
    %664 = vmatprep.subr.mxu0 0.0
    %665 = vmatpush1.msra.mxu0 0.0
    %666 = vmatprep.subr.mxu0 0.0
    %667 = vmatpush1.msra.mxu0 0.0
    %668 = vmatprep.subr.mxu0 0.0
    %669 = vmatpush1.msra.mxu0 0.0
    %670 = vmatprep.subr.mxu0 0.0
    %671 = vmatpush1.msra.mxu0 0.0
    %672 = vmatprep.subr.mxu0 0.0
    %673 = vmatpush1.msra.mxu0 0.0
    %674 = vmatprep.subr.mxu0 0.0
    %675 = vmatpush1.msra.mxu0 0.0
    %676 = vmatprep.subr.mxu0 0.0
    %677 = vmatpush1.msra.mxu0 0.0
    %678 = vmatprep.subr.mxu0 0.0
    %679 = vmatpush1.msra.mxu0 0.0
    %680 = vmatprep.mubr.f32.mxu0 0.0
    %681 = vmatmul.mubr.f32.gmra.mrb[0].mxu0 %v614
    %v682 = vpop.f32.mrb[0].mxu0
    %v683 = vadd.f32 0.0, %v682
    %v684 = vpop.f32.mrb[0].mxu0
    %685 = vdwg.mxu0
    %v687 = vrot.slane %v683, 2
    %v689 = vadd.f32 %v286, %v687
    %v690 = vxor.u32 %v689, 2147483648
    %v691 = vmul.f32 %v690, 1.442695
    %v692 = vpow.pop %v691
    %v693 = vadd.f32 %v692, 1.0
    %v694 = vrcp.pop %v693
    %v695 = vmul.f32 1.0, %v694
    %v696 = vtanh.pop %v689
    %v698 = vrot.slane %v603, 6
    %v700 = vmul.f32 %v695, %v698
    %702 = vrot.lane.b32.xlu0 %v696, 108
    %v703 = vpop.permute.xlu0 %702
    %v705 = vmul.f32 %v695, %v703
    %707 = vrot.lane.b32.xlu0 %v705, 10
    %v708 = vpop.permute.xlu0 %707
    %v710 = vadd.f32 %v700, %v708
    %v711 = vtanh.pop %v710
    %713 = vrot.lane.b32.xlu0 %v711, 20
    %v714 = vpop.permute.xlu0 %713
    %v716 = vmul.f32 %v695, %v714
    %v718 = vrot.slane %v716, 6
    %719 = vrot.lane.b32.xlu0 %v718, 98
    %v720 = vpop.permute.xlu0 %719
    %v721 = vsel %vm294, %v720, 0
    %723 = vmatprep.subr.mxu0 0.0
    %724 = vmatpush1.msra.mxu0 %v203
    %725 = vmatprep.subr.mxu0 0.0
    %726 = vmatpush1.msra.mxu0 %v300
    %727 = vmatprep.subr.mxu0 0.0
    %728 = vmatpush1.msra.mxu0 0.0
    %729 = vmatprep.subr.mxu0 0.0
    %730 = vmatpush1.msra.mxu0 0.0
    %731 = vmatprep.subr.mxu0 0.0
    %732 = vmatpush1.msra.mxu0 0.0
    %733 = vmatprep.subr.mxu0 0.0
    %734 = vmatpush1.msra.mxu0 0.0
    %735 = vmatprep.subr.mxu0 0.0
    %736 = vmatpush1.msra.mxu0 0.0
    %737 = vmatprep.subr.mxu0 0.0
    %738 = vmatpush1.msra.mxu0 0.0
    %739 = vmatprep.subr.mxu0 0.0
    %740 = vmatpush1.msra.mxu0 0.0
    %741 = vmatprep.subr.mxu0 0.0
    %742 = vmatpush1.msra.mxu0 0.0
    %743 = vmatprep.subr.mxu0 0.0
    %744 = vmatpush1.msra.mxu0 0.0
    %745 = vmatprep.subr.mxu0 0.0
    %746 = vmatpush1.msra.mxu0 0.0
    %747 = vmatprep.subr.mxu0 0.0
    %748 = vmatpush1.msra.mxu0 0.0
    %749 = vmatprep.subr.mxu0 0.0
    %750 = vmatpush1.msra.mxu0 0.0
    %751 = vmatprep.subr.mxu0 0.0
    %752 = vmatpush1.msra.mxu0 0.0
    %753 = vmatprep.subr.mxu0 0.0
    %754 = vmatpush1.msra.mxu0 0.0
    %755 = vmatprep.subr.mxu0 0.0
    %756 = vmatpush1.msra.mxu0 0.0
    %757 = vmatprep.subr.mxu0 0.0
    %758 = vmatpush1.msra.mxu0 0.0
    %759 = vmatprep.subr.mxu0 0.0
    %760 = vmatpush1.msra.mxu0 0.0
    %761 = vmatprep.subr.mxu0 0.0
    %762 = vmatpush1.msra.mxu0 0.0
    %763 = vmatprep.subr.mxu0 0.0
    %764 = vmatpush1.msra.mxu0 0.0
    %765 = vmatprep.subr.mxu0 0.0
    %766 = vmatpush1.msra.mxu0 0.0
    %767 = vmatprep.subr.mxu0 0.0
    %768 = vmatpush1.msra.mxu0 0.0
    %769 = vmatprep.subr.mxu0 0.0
    %770 = vmatpush1.msra.mxu0 0.0
    %771 = vmatprep.subr.mxu0 0.0
    %772 = vmatpush1.msra.mxu0 0.0
    %773 = vmatprep.subr.mxu0 0.0
    %774 = vmatpush1.msra.mxu0 0.0
    %775 = vmatprep.subr.mxu0 0.0
    %776 = vmatpush1.msra.mxu0 0.0
    %777 = vmatprep.subr.mxu0 0.0
    %778 = vmatpush1.msra.mxu0 0.0
    %779 = vmatprep.subr.mxu0 0.0
    %780 = vmatpush1.msra.mxu0 0.0
    %781 = vmatprep.subr.mxu0 0.0
    %782 = vmatpush1.msra.mxu0 0.0
    %783 = vmatprep.subr.mxu0 0.0
    %784 = vmatpush1.msra.mxu0 0.0
    %785 = vmatprep.subr.mxu0 0.0
    %786 = vmatpush1.msra.mxu0 0.0
    %787 = vmatprep.mubr.f32.mxu0 0.0
    %788 = vmatmul.mubr.f32.gmra.mrb[0].mxu0 %v721
    %v789 = vpop.f32.mrb[0].mxu0
    %v790 = vadd.f32 0.0, %v789
    %v791 = vpop.f32.mrb[0].mxu0
    %792 = vdwg.mxu0
    %v793 = vadd.f32 %v291, %v790
    %v794 = vxor.u32 %v793, 2147483648
    %v795 = vmul.f32 %v794, 1.442695
    %v796 = vpow.pop %v795
    %v797 = vadd.f32 %v796, 1.0
    %v798 = vrcp.pop %v797
    %v799 = vmul.f32 1.0, %v798
    %v800 = vtanh.pop %v793
    %v802 = vrot.slane %v710, 6
    %v804 = vmul.f32 %v799, %v802
    %806 = vrot.lane.b32.xlu0 %v800, 108
    %v807 = vpop.permute.xlu0 %806
    %v809 = vmul.f32 %v799, %v807
    %811 = vrot.lane.b32.xlu0 %v809, 10
    %v812 = vpop.permute.xlu0 %811
    %v814 = vadd.f32 %v804, %v812
    %v815 = vtanh.pop %v814
    %817 = vrot.lane.b32.xlu0 %v815, 20
    %v818 = vpop.permute.xlu0 %817
    %v820 = vmul.f32 %v799, %v818
    %822 = vrot.lane.b32.xlu0 %v820, 98
    %v823 = vpop.permute.xlu0 %822
    %v824 = vsel %vm294, %v823, 0
    %826 = vmatprep.subr.mxu0 0.0
    %827 = vmatpush1.msra.mxu0 %v203
    %828 = vmatprep.subr.mxu0 0.0
    %829 = vmatpush1.msra.mxu0 %v300
    %830 = vmatprep.subr.mxu0 0.0
    %831 = vmatpush1.msra.mxu0 0.0
    %832 = vmatprep.subr.mxu0 0.0
    %833 = vmatpush1.msra.mxu0 0.0
    %834 = vmatprep.subr.mxu0 0.0
    %835 = vmatpush1.msra.mxu0 0.0
    %836 = vmatprep.subr.mxu0 0.0
    %837 = vmatpush1.msra.mxu0 0.0
    %838 = vmatprep.subr.mxu0 0.0
    %839 = vmatpush1.msra.mxu0 0.0
    %840 = vmatprep.subr.mxu0 0.0
    %841 = vmatpush1.msra.mxu0 0.0
    %842 = vmatprep.subr.mxu0 0.0
    %843 = vmatpush1.msra.mxu0 0.0
    %844 = vmatprep.subr.mxu0 0.0
    %845 = vmatpush1.msra.mxu0 0.0
    %846 = vmatprep.subr.mxu0 0.0
    %847 = vmatpush1.msra.mxu0 0.0
    %848 = vmatprep.subr.mxu0 0.0
    %849 = vmatpush1.msra.mxu0 0.0
    %850 = vmatprep.subr.mxu0 0.0
    %851 = vmatpush1.msra.mxu0 0.0
    %852 = vmatprep.subr.mxu0 0.0
    %853 = vmatpush1.msra.mxu0 0.0
    %854 = vmatprep.subr.mxu0 0.0
    %855 = vmatpush1.msra.mxu0 0.0
    %856 = vmatprep.subr.mxu0 0.0
    %857 = vmatpush1.msra.mxu0 0.0
    %858 = vmatprep.subr.mxu0 0.0
    %859 = vmatpush1.msra.mxu0 0.0
    %860 = vmatprep.subr.mxu0 0.0
    %861 = vmatpush1.msra.mxu0 0.0
    %862 = vmatprep.subr.mxu0 0.0
    %863 = vmatpush1.msra.mxu0 0.0
    %864 = vmatprep.subr.mxu0 0.0
    %865 = vmatpush1.msra.mxu0 0.0
    %866 = vmatprep.subr.mxu0 0.0
    %867 = vmatpush1.msra.mxu0 0.0
    %868 = vmatprep.subr.mxu0 0.0
    %869 = vmatpush1.msra.mxu0 0.0
    %870 = vmatprep.subr.mxu0 0.0
    %871 = vmatpush1.msra.mxu0 0.0
    %872 = vmatprep.subr.mxu0 0.0
    %873 = vmatpush1.msra.mxu0 0.0
    %874 = vmatprep.subr.mxu0 0.0
    %875 = vmatpush1.msra.mxu0 0.0
    %876 = vmatprep.subr.mxu0 0.0
    %877 = vmatpush1.msra.mxu0 0.0
    %878 = vmatprep.subr.mxu0 0.0
    %879 = vmatpush1.msra.mxu0 0.0
    %880 = vmatprep.subr.mxu0 0.0
    %881 = vmatpush1.msra.mxu0 0.0
    %882 = vmatprep.subr.mxu0 0.0
    %883 = vmatpush1.msra.mxu0 0.0
    %884 = vmatprep.subr.mxu0 0.0
    %885 = vmatpush1.msra.mxu0 0.0
    %886 = vmatprep.subr.mxu0 0.0
    %887 = vmatpush1.msra.mxu0 0.0
    %888 = vmatprep.subr.mxu0 0.0
    %889 = vmatpush1.msra.mxu0 0.0
    %890 = vmatprep.mubr.f32.mxu0 0.0
    %891 = vmatmul.mubr.f32.gmra.mrb[0].mxu0 %v824
    %v892 = vpop.f32.mrb[0].mxu0
    %v893 = vadd.f32 0.0, %v892
    %v894 = vpop.f32.mrb[0].mxu0
    %895 = vdwg.mxu0
    %v897 = vrot.slane %v893, 6
    %v899 = vadd.f32 %v291, %v897
    %v900 = vxor.u32 %v899, 2147483648
    %v901 = vmul.f32 %v900, 1.442695
    %v902 = vpow.pop %v901
    %v903 = vadd.f32 %v902, 1.0
    %v904 = vrcp.pop %v903
    %v905 = vmul.f32 1.0, %v904
    %v906 = vtanh.pop %v899
    %v908 = vrot.slane %v814, 6
    %v910 = vmul.f32 %v905, %v908
    %912 = vrot.lane.b32.xlu0 %v906, 108
    %v913 = vpop.permute.xlu0 %912
    %v915 = vmul.f32 %v905, %v913
    %917 = vrot.lane.b32.xlu0 %v915, 10
    %v918 = vpop.permute.xlu0 %917
    %v920 = vadd.f32 %v910, %v918
    %v921 = vtanh.pop %v920
    %923 = vrot.lane.b32.xlu0 %v921, 20
    %v924 = vpop.permute.xlu0 %923
    %v926 = vmul.f32 %v905, %v924
    %v928 = vrot.slane %v926, 2
    %929 = vrot.lane.b32.xlu0 %v928, 98
    %v930 = vpop.permute.xlu0 %929
    %v931 = vsel %vm294, %v930, 0
    %933 = vmatprep.subr.mxu0 0.0
    %934 = vmatpush1.msra.mxu0 %v203
    %935 = vmatprep.subr.mxu0 0.0
    %936 = vmatpush1.msra.mxu0 %v300
    %937 = vmatprep.subr.mxu0 0.0
    %938 = vmatpush1.msra.mxu0 0.0
    %939 = vmatprep.subr.mxu0 0.0
    %940 = vmatpush1.msra.mxu0 0.0
    %941 = vmatprep.subr.mxu0 0.0
    %942 = vmatpush1.msra.mxu0 0.0
    %943 = vmatprep.subr.mxu0 0.0
    %944 = vmatpush1.msra.mxu0 0.0
    %945 = vmatprep.subr.mxu0 0.0
    %946 = vmatpush1.msra.mxu0 0.0
    %947 = vmatprep.subr.mxu0 0.0
    %948 = vmatpush1.msra.mxu0 0.0
    %949 = vmatprep.subr.mxu0 0.0
    %950 = vmatpush1.msra.mxu0 0.0
    %951 = vmatprep.subr.mxu0 0.0
    %952 = vmatpush1.msra.mxu0 0.0
    %953 = vmatprep.subr.mxu0 0.0
    %954 = vmatpush1.msra.mxu0 0.0
    %955 = vmatprep.subr.mxu0 0.0
    %956 = vmatpush1.msra.mxu0 0.0
    %957 = vmatprep.subr.mxu0 0.0
    %958 = vmatpush1.msra.mxu0 0.0
    %959 = vmatprep.subr.mxu0 0.0
    %960 = vmatpush1.msra.mxu0 0.0
    %961 = vmatprep.subr.mxu0 0.0
    %962 = vmatpush1.msra.mxu0 0.0
    %963 = vmatprep.subr.mxu0 0.0
    %964 = vmatpush1.msra.mxu0 0.0
    %965 = vmatprep.subr.mxu0 0.0
    %966 = vmatpush1.msra.mxu0 0.0
    %967 = vmatprep.subr.mxu0 0.0
    %968 = vmatpush1.msra.mxu0 0.0
    %969 = vmatprep.subr.mxu0 0.0
    %970 = vmatpush1.msra.mxu0 0.0
    %971 = vmatprep.subr.mxu0 0.0
    %972 = vmatpush1.msra.mxu0 0.0
    %973 = vmatprep.subr.mxu0 0.0
    %974 = vmatpush1.msra.mxu0 0.0
    %975 = vmatprep.subr.mxu0 0.0
    %976 = vmatpush1.msra.mxu0 0.0
    %977 = vmatprep.subr.mxu0 0.0
    %978 = vmatpush1.msra.mxu0 0.0
    %979 = vmatprep.subr.mxu0 0.0
    %980 = vmatpush1.msra.mxu0 0.0
    %981 = vmatprep.subr.mxu0 0.0
    %982 = vmatpush1.msra.mxu0 0.0
    %983 = vmatprep.subr.mxu0 0.0
    %984 = vmatpush1.msra.mxu0 0.0
    %985 = vmatprep.subr.mxu0 0.0
    %986 = vmatpush1.msra.mxu0 0.0
    %987 = vmatprep.subr.mxu0 0.0
    %988 = vmatpush1.msra.mxu0 0.0
    %989 = vmatprep.subr.mxu0 0.0
    %990 = vmatpush1.msra.mxu0 0.0
    %991 = vmatprep.subr.mxu0 0.0
    %992 = vmatpush1.msra.mxu0 0.0
    %993 = vmatprep.subr.mxu0 0.0
    %994 = vmatpush1.msra.mxu0 0.0
    %995 = vmatprep.subr.mxu0 0.0
    %996 = vmatpush1.msra.mxu0 0.0
    %997 = vmatprep.mubr.f32.mxu0 0.0
    %998 = vmatmul.mubr.f32.gmra.mrb[0].mxu0 %v931
    %v999 = vpop.f32.mrb[0].mxu0
    %v1000 = vadd.f32 0.0, %v999
    %v1001 = vpop.f32.mrb[0].mxu0
    %1002 = vdwg.mxu0
    %v1004 = vrot.slane %v1000, 4
    %v1006 = vadd.f32 %v291, %v1004
    %v1007 = vxor.u32 %v1006, 2147483648
    %v1008 = vmul.f32 %v1007, 1.442695
    %v1009 = vpow.pop %v1008
    %v1010 = vadd.f32 %v1009, 1.0
    %v1011 = vrcp.pop %v1010
    %v1012 = vmul.f32 1.0, %v1011
    %v1013 = vtanh.pop %v1006
    %v1015 = vrot.slane %v920, 6
    %v1017 = vmul.f32 %v1012, %v1015
    %1019 = vrot.lane.b32.xlu0 %v1013, 108
    %v1020 = vpop.permute.xlu0 %1019
    %v1022 = vmul.f32 %v1012, %v1020
    %1024 = vrot.lane.b32.xlu0 %v1022, 10
    %v1025 = vpop.permute.xlu0 %1024
    %v1027 = vadd.f32 %v1017, %v1025
    %v1028 = vtanh.pop %v1027
    %1030 = vrot.lane.b32.xlu0 %v1028, 20
    %v1031 = vpop.permute.xlu0 %1030
    %v1033 = vmul.f32 %v1012, %v1031
    %v1035 = vrot.slane %v1033, 4
    %1036 = vrot.lane.b32.xlu0 %v1035, 98
    %v1037 = vpop.permute.xlu0 %1036
    %v1038 = vsel %vm294, %v1037, 0
    %1040 = vmatprep.subr.mxu0 0.0
    %1041 = vmatpush1.msra.mxu0 %v203
    %1042 = vmatprep.subr.mxu0 0.0
    %1043 = vmatpush1.msra.mxu0 %v300
    %1044 = vmatprep.subr.mxu0 0.0
    %1045 = vmatpush1.msra.mxu0 0.0
    %1046 = vmatprep.subr.mxu0 0.0
    %1047 = vmatpush1.msra.mxu0 0.0
    %1048 = vmatprep.subr.mxu0 0.0
    %1049 = vmatpush1.msra.mxu0 0.0
    %1050 = vmatprep.subr.mxu0 0.0
    %1051 = vmatpush1.msra.mxu0 0.0
    %1052 = vmatprep.subr.mxu0 0.0
    %1053 = vmatpush1.msra.mxu0 0.0
    %1054 = vmatprep.subr.mxu0 0.0
    %1055 = vmatpush1.msra.mxu0 0.0
    %1056 = vmatprep.subr.mxu0 0.0
    %1057 = vmatpush1.msra.mxu0 0.0
    %1058 = vmatprep.subr.mxu0 0.0
    %1059 = vmatpush1.msra.mxu0 0.0
    %1060 = vmatprep.subr.mxu0 0.0
    %1061 = vmatpush1.msra.mxu0 0.0
    %1062 = vmatprep.subr.mxu0 0.0
    %1063 = vmatpush1.msra.mxu0 0.0
    %1064 = vmatprep.subr.mxu0 0.0
    %1065 = vmatpush1.msra.mxu0 0.0
    %1066 = vmatprep.subr.mxu0 0.0
    %1067 = vmatpush1.msra.mxu0 0.0
    %1068 = vmatprep.subr.mxu0 0.0
    %1069 = vmatpush1.msra.mxu0 0.0
    %1070 = vmatprep.subr.mxu0 0.0
    %1071 = vmatpush1.msra.mxu0 0.0
    %1072 = vmatprep.subr.mxu0 0.0
    %1073 = vmatpush1.msra.mxu0 0.0
    %1074 = vmatprep.subr.mxu0 0.0
    %1075 = vmatpush1.msra.mxu0 0.0
    %1076 = vmatprep.subr.mxu0 0.0
    %1077 = vmatpush1.msra.mxu0 0.0
    %1078 = vmatprep.subr.mxu0 0.0
    %1079 = vmatpush1.msra.mxu0 0.0
    %1080 = vmatprep.subr.mxu0 0.0
    %1081 = vmatpush1.msra.mxu0 0.0
    %1082 = vmatprep.subr.mxu0 0.0
    %1083 = vmatpush1.msra.mxu0 0.0
    %1084 = vmatprep.subr.mxu0 0.0
    %1085 = vmatpush1.msra.mxu0 0.0
    %1086 = vmatprep.subr.mxu0 0.0
    %1087 = vmatpush1.msra.mxu0 0.0
    %1088 = vmatprep.subr.mxu0 0.0
    %1089 = vmatpush1.msra.mxu0 0.0
    %1090 = vmatprep.subr.mxu0 0.0
    %1091 = vmatpush1.msra.mxu0 0.0
    %1092 = vmatprep.subr.mxu0 0.0
    %1093 = vmatpush1.msra.mxu0 0.0
    %1094 = vmatprep.subr.mxu0 0.0
    %1095 = vmatpush1.msra.mxu0 0.0
    %1096 = vmatprep.subr.mxu0 0.0
    %1097 = vmatpush1.msra.mxu0 0.0
    %1098 = vmatprep.subr.mxu0 0.0
    %1099 = vmatpush1.msra.mxu0 0.0
    %1100 = vmatprep.subr.mxu0 0.0
    %1101 = vmatpush1.msra.mxu0 0.0
    %1102 = vmatprep.subr.mxu0 0.0
    %1103 = vmatpush1.msra.mxu0 0.0
    %1104 = vmatprep.mubr.f32.mxu0 0.0
    %1105 = vmatmul.mubr.f32.gmra.mrb[0].mxu0 %v1038
    %v1106 = vpop.f32.mrb[0].mxu0
    %v1107 = vadd.f32 0.0, %v1106
    %v1108 = vpop.f32.mrb[0].mxu0
    %1109 = vdwg.mxu0
    %v1111 = vrot.slane %v1107, 2
    %v1113 = vadd.f32 %v291, %v1111
    %v1114 = vxor.u32 %v1113, 2147483648
    %v1115 = vmul.f32 %v1114, 1.442695
    %v1116 = vpow.pop %v1115
    %v1117 = vadd.f32 %v1116, 1.0
    %v1118 = vrcp.pop %v1117
    %v1119 = vmul.f32 1.0, %v1118
    %v1120 = vtanh.pop %v1113
    %v1122 = vrot.slane %v1027, 6
    %v1124 = vmul.f32 %v1119, %v1122
    %1126 = vrot.lane.b32.xlu0 %v1120, 108
    %v1127 = vpop.permute.xlu0 %1126
    %v1129 = vmul.f32 %v1119, %v1127
    %1131 = vrot.lane.b32.xlu0 %v1129, 10
    %v1132 = vpop.permute.xlu0 %1131
    %v1134 = vadd.f32 %v1124, %v1132
    %v1135 = vtanh.pop %v1134
    %1137 = vrot.lane.b32.xlu0 %v1135, 20
    %v1138 = vpop.permute.xlu0 %1137
    %v1140 = vmul.f32 %v1119, %v1138
    %v1141 = vld [vmem:[#allocation12] sm:$0xff]
    %v1142 = vld [vmem:[#allocation12 + $0x8] sm:$0xff]
    %v1143 = vld [vmem:[#allocation14] sm:$0xff]
    %v1144 = vld [vmem:[#allocation14 + $0x8] sm:$0x3]
    %v1145 = vld [vmem:[#allocation15] sm:$0x1]
    %v1147 = vlaneseq
    %v1148 = vshrl.u32 %v1147, 7
    %v1149 = vsub.s32 0, %v1148
    %v1150 = vrot.slane %v1145, %v1149
    %1152 = vmatprep.subr.mxu0 0.0
    %1153 = vmatpush1.msra.mxu0 %v1141
    %1154 = vmatprep.subr.mxu0 0.0
    %1155 = vmatpush1.msra.mxu0 %v1142
    %1156 = vmatprep.subr.mxu0 0.0
    %1157 = vmatpush1.msra.mxu0 0.0
    %1158 = vmatprep.subr.mxu0 0.0
    %1159 = vmatpush1.msra.mxu0 0.0
    %1160 = vmatprep.subr.mxu0 0.0
    %1161 = vmatpush1.msra.mxu0 0.0
    %1162 = vmatprep.subr.mxu0 0.0
    %1163 = vmatpush1.msra.mxu0 0.0
    %1164 = vmatprep.subr.mxu0 0.0
    %1165 = vmatpush1.msra.mxu0 0.0
    %1166 = vmatprep.subr.mxu0 0.0
    %1167 = vmatpush1.msra.mxu0 0.0
    %1168 = vmatprep.subr.mxu0 0.0
    %1169 = vmatpush1.msra.mxu0 0.0
    %1170 = vmatprep.subr.mxu0 0.0
    %1171 = vmatpush1.msra.mxu0 0.0
    %1172 = vmatprep.subr.mxu0 0.0
    %1173 = vmatpush1.msra.mxu0 0.0
    %1174 = vmatprep.subr.mxu0 0.0
    %1175 = vmatpush1.msra.mxu0 0.0
    %1176 = vmatprep.subr.mxu0 0.0
    %1177 = vmatpush1.msra.mxu0 0.0
    %1178 = vmatprep.subr.mxu0 0.0
    %1179 = vmatpush1.msra.mxu0 0.0
    %1180 = vmatprep.subr.mxu0 0.0
    %1181 = vmatpush1.msra.mxu0 0.0
    %1182 = vmatprep.subr.mxu0 0.0
    %1183 = vmatpush1.msra.mxu0 0.0
    %1184 = vmatprep.subr.mxu0 0.0
    %1185 = vmatpush1.msra.mxu0 0.0
    %1186 = vmatprep.subr.mxu0 0.0
    %1187 = vmatpush1.msra.mxu0 0.0
    %1188 = vmatprep.subr.mxu0 0.0
    %1189 = vmatpush1.msra.mxu0 0.0
    %1190 = vmatprep.subr.mxu0 0.0
    %1191 = vmatpush1.msra.mxu0 0.0
    %1192 = vmatprep.subr.mxu0 0.0
    %1193 = vmatpush1.msra.mxu0 0.0
    %1194 = vmatprep.subr.mxu0 0.0
    %1195 = vmatpush1.msra.mxu0 0.0
    %1196 = vmatprep.subr.mxu0 0.0
    %1197 = vmatpush1.msra.mxu0 0.0
    %1198 = vmatprep.subr.mxu0 0.0
    %1199 = vmatpush1.msra.mxu0 0.0
    %1200 = vmatprep.subr.mxu0 0.0
    %1201 = vmatpush1.msra.mxu0 0.0
    %1202 = vmatprep.subr.mxu0 0.0
    %1203 = vmatpush1.msra.mxu0 0.0
    %1204 = vmatprep.subr.mxu0 0.0
    %1205 = vmatpush1.msra.mxu0 0.0
    %1206 = vmatprep.subr.mxu0 0.0
    %1207 = vmatpush1.msra.mxu0 0.0
    %1208 = vmatprep.subr.mxu0 0.0
    %1209 = vmatpush1.msra.mxu0 0.0
    %1210 = vmatprep.subr.mxu0 0.0
    %1211 = vmatpush1.msra.mxu0 0.0
    %1212 = vmatprep.subr.mxu0 0.0
    %1213 = vmatpush1.msra.mxu0 0.0
    %1214 = vmatprep.subr.mxu0 0.0
    %1215 = vmatpush1.msra.mxu0 0.0
    %1216 = vmatprep.mubr.f32.mxu0 0.0
    %1217 = vmatmul.mubr.f32.gmra.mrb[0].mxu0 %v214
    %v1218 = vpop.f32.mrb[0].mxu0
    %v1219 = vadd.f32 %v1150, %v1218
    %v1220 = vpop.f32.mrb[0].mxu0
    %1221 = vmatprep.mubr.f32.mxu0 0.0
    %1222 = vmatmul.mubr.f32.gmra.mrb[0].mxu0 %v217
    %v1223 = vpop.f32.mrb[0].mxu0
    %v1224 = vadd.f32 %v1150, %v1223
    %v1225 = vpop.f32.mrb[0].mxu0
    %1226 = vdwg.mxu0
    %v1228 = vsel %vm298, %v1144, 0
    %1230 = vmatprep.subr.mxu0 0.0
    %1231 = vmatpush1.msra.mxu0 %v1143
    %1232 = vmatprep.subr.mxu0 0.0
    %1233 = vmatpush1.msra.mxu0 %v1228
    %1234 = vmatprep.subr.mxu0 0.0
    %1235 = vmatpush1.msra.mxu0 0.0
    %1236 = vmatprep.subr.mxu0 0.0
    %1237 = vmatpush1.msra.mxu0 0.0
    %1238 = vmatprep.subr.mxu0 0.0
    %1239 = vmatpush1.msra.mxu0 0.0
    %1240 = vmatprep.subr.mxu0 0.0
    %1241 = vmatpush1.msra.mxu0 0.0
    %1242 = vmatprep.subr.mxu0 0.0
    %1243 = vmatpush1.msra.mxu0 0.0
    %1244 = vmatprep.subr.mxu0 0.0
    %1245 = vmatpush1.msra.mxu0 0.0
    %1246 = vmatprep.subr.mxu0 0.0
    %1247 = vmatpush1.msra.mxu0 0.0
    %1248 = vmatprep.subr.mxu0 0.0
    %1249 = vmatpush1.msra.mxu0 0.0
    %1250 = vmatprep.subr.mxu0 0.0
    %1251 = vmatpush1.msra.mxu0 0.0
    %1252 = vmatprep.subr.mxu0 0.0
    %1253 = vmatpush1.msra.mxu0 0.0
    %1254 = vmatprep.subr.mxu0 0.0
    %1255 = vmatpush1.msra.mxu0 0.0
    %1256 = vmatprep.subr.mxu0 0.0
    %1257 = vmatpush1.msra.mxu0 0.0
    %1258 = vmatprep.subr.mxu0 0.0
    %1259 = vmatpush1.msra.mxu0 0.0
    %1260 = vmatprep.subr.mxu0 0.0
    %1261 = vmatpush1.msra.mxu0 0.0
    %1262 = vmatprep.subr.mxu0 0.0
    %1263 = vmatpush1.msra.mxu0 0.0
    %1264 = vmatprep.subr.mxu0 0.0
    %1265 = vmatpush1.msra.mxu0 0.0
    %1266 = vmatprep.subr.mxu0 0.0
    %1267 = vmatpush1.msra.mxu0 0.0
    %1268 = vmatprep.subr.mxu0 0.0
    %1269 = vmatpush1.msra.mxu0 0.0
    %1270 = vmatprep.subr.mxu0 0.0
    %1271 = vmatpush1.msra.mxu0 0.0
    %1272 = vmatprep.subr.mxu0 0.0
    %1273 = vmatpush1.msra.mxu0 0.0
    %1274 = vmatprep.subr.mxu0 0.0
    %1275 = vmatpush1.msra.mxu0 0.0
    %1276 = vmatprep.subr.mxu0 0.0
    %1277 = vmatpush1.msra.mxu0 0.0
    %1278 = vmatprep.subr.mxu0 0.0
    %1279 = vmatpush1.msra.mxu0 0.0
    %1280 = vmatprep.subr.mxu0 0.0
    %1281 = vmatpush1.msra.mxu0 0.0
    %1282 = vmatprep.subr.mxu0 0.0
    %1283 = vmatpush1.msra.mxu0 0.0
    %1284 = vmatprep.subr.mxu0 0.0
    %1285 = vmatpush1.msra.mxu0 0.0
    %1286 = vmatprep.subr.mxu0 0.0
    %1287 = vmatpush1.msra.mxu0 0.0
    %1288 = vmatprep.subr.mxu0 0.0
    %1289 = vmatpush1.msra.mxu0 0.0
    %1290 = vmatprep.subr.mxu0 0.0
    %1291 = vmatpush1.msra.mxu0 0.0
    %1292 = vmatprep.subr.mxu0 0.0
    %1293 = vmatpush1.msra.mxu0 0.0
    %1294 = vmatprep.mubr.f32.mxu0 0.0
    %1295 = vmatmul.mubr.f32.gmra.mrb[0].mxu0 %v296
    %v1296 = vpop.f32.mrb[0].mxu0
    %v1297 = vadd.f32 0.0, %v1296
    %v1298 = vpop.f32.mrb[0].mxu0
    %1299 = vdwg.mxu0
    %v1301 = vrot.slane %v1297, 2
    %v1303 = vadd.f32 %v1224, %v1301
    %v1304 = vxor.u32 %v1303, 2147483648
    %v1305 = vmul.f32 %v1304, 1.442695
    %v1306 = vpow.pop %v1305
    %v1307 = vadd.f32 %v1306, 1.0
    %v1308 = vrcp.pop %v1307
    %v1309 = vmul.f32 1.0, %v1308
    %v1310 = vtanh.pop %v1303
    %v1311 = vmul.f32 %v1309, 0.0
    %1313 = vrot.lane.b32.xlu0 %v1310, 108
    %v1314 = vpop.permute.xlu0 %1313
    %v1316 = vmul.f32 %v1309, %v1314
    %1318 = vrot.lane.b32.xlu0 %v1316, 10
    %v1319 = vpop.permute.xlu0 %1318
    %v1321 = vadd.f32 %v1311, %v1319
    %v1322 = vtanh.pop %v1321
    %1324 = vrot.lane.b32.xlu0 %v1322, 20
    %v1325 = vpop.permute.xlu0 %1324
    %v1327 = vmul.f32 %v1309, %v1325
    %v1329 = vrot.slane %v1327, 6
    %1330 = vrot.lane.b32.xlu0 %v1329, 98
    %v1331 = vpop.permute.xlu0 %1330
    %v1332 = vsel %vm294, %v1331, 0
    %1334 = vmatprep.subr.mxu0 0.0
    %1335 = vmatpush1.msra.mxu0 %v1143
    %1336 = vmatprep.subr.mxu0 0.0
    %1337 = vmatpush1.msra.mxu0 %v1228
    %1338 = vmatprep.subr.mxu0 0.0
    %1339 = vmatpush1.msra.mxu0 0.0
    %1340 = vmatprep.subr.mxu0 0.0
    %1341 = vmatpush1.msra.mxu0 0.0
    %1342 = vmatprep.subr.mxu0 0.0
    %1343 = vmatpush1.msra.mxu0 0.0
    %1344 = vmatprep.subr.mxu0 0.0
    %1345 = vmatpush1.msra.mxu0 0.0
    %1346 = vmatprep.subr.mxu0 0.0
    %1347 = vmatpush1.msra.mxu0 0.0
    %1348 = vmatprep.subr.mxu0 0.0
    %1349 = vmatpush1.msra.mxu0 0.0
    %1350 = vmatprep.subr.mxu0 0.0
    %1351 = vmatpush1.msra.mxu0 0.0
    %1352 = vmatprep.subr.mxu0 0.0
    %1353 = vmatpush1.msra.mxu0 0.0
    %1354 = vmatprep.subr.mxu0 0.0
    %1355 = vmatpush1.msra.mxu0 0.0
    %1356 = vmatprep.subr.mxu0 0.0
    %1357 = vmatpush1.msra.mxu0 0.0
    %1358 = vmatprep.subr.mxu0 0.0
    %1359 = vmatpush1.msra.mxu0 0.0
    %1360 = vmatprep.subr.mxu0 0.0
    %1361 = vmatpush1.msra.mxu0 0.0
    %1362 = vmatprep.subr.mxu0 0.0
    %1363 = vmatpush1.msra.mxu0 0.0
    %1364 = vmatprep.subr.mxu0 0.0
    %1365 = vmatpush1.msra.mxu0 0.0
    %1366 = vmatprep.subr.mxu0 0.0
    %1367 = vmatpush1.msra.mxu0 0.0
    %1368 = vmatprep.subr.mxu0 0.0
    %1369 = vmatpush1.msra.mxu0 0.0
    %1370 = vmatprep.subr.mxu0 0.0
    %1371 = vmatpush1.msra.mxu0 0.0
    %1372 = vmatprep.subr.mxu0 0.0
    %1373 = vmatpush1.msra.mxu0 0.0
    %1374 = vmatprep.subr.mxu0 0.0
    %1375 = vmatpush1.msra.mxu0 0.0
    %1376 = vmatprep.subr.mxu0 0.0
    %1377 = vmatpush1.msra.mxu0 0.0
    %1378 = vmatprep.subr.mxu0 0.0
    %1379 = vmatpush1.msra.mxu0 0.0
    %1380 = vmatprep.subr.mxu0 0.0
    %1381 = vmatpush1.msra.mxu0 0.0
    %1382 = vmatprep.subr.mxu0 0.0
    %1383 = vmatpush1.msra.mxu0 0.0
    %1384 = vmatprep.subr.mxu0 0.0
    %1385 = vmatpush1.msra.mxu0 0.0
    %1386 = vmatprep.subr.mxu0 0.0
    %1387 = vmatpush1.msra.mxu0 0.0
    %1388 = vmatprep.subr.mxu0 0.0
    %1389 = vmatpush1.msra.mxu0 0.0
    %1390 = vmatprep.subr.mxu0 0.0
    %1391 = vmatpush1.msra.mxu0 0.0
    %1392 = vmatprep.subr.mxu0 0.0
    %1393 = vmatpush1.msra.mxu0 0.0
    %1394 = vmatprep.subr.mxu0 0.0
    %1395 = vmatpush1.msra.mxu0 0.0
    %1396 = vmatprep.subr.mxu0 0.0
    %1397 = vmatpush1.msra.mxu0 0.0
    %1398 = vmatprep.mubr.f32.mxu0 0.0
    %1399 = vmatmul.mubr.f32.gmra.mrb[0].mxu0 %v1332
    %v1400 = vpop.f32.mrb[0].mxu0
    %v1401 = vadd.f32 0.0, %v1400
    %v1402 = vpop.f32.mrb[0].mxu0
    %1403 = vdwg.mxu0
    %v1405 = vrot.slane %v1401, 4
    %v1407 = vadd.f32 %v1224, %v1405
    %v1408 = vxor.u32 %v1407, 2147483648
    %v1409 = vmul.f32 %v1408, 1.442695
    %v1410 = vpow.pop %v1409
    %v1411 = vadd.f32 %v1410, 1.0
    %v1412 = vrcp.pop %v1411
    %v1413 = vmul.f32 1.0, %v1412
    %v1414 = vtanh.pop %v1407
    %v1416 = vrot.slane %v1321, 2
    %v1418 = vmul.f32 %v1413, %v1416
    %1420 = vrot.lane.b32.xlu0 %v1414, 108
    %v1421 = vpop.permute.xlu0 %1420
    %v1423 = vmul.f32 %v1413, %v1421
    %1425 = vrot.lane.b32.xlu0 %v1423, 10
    %v1426 = vpop.permute.xlu0 %1425
    %v1428 = vadd.f32 %v1418, %v1426
    %v1429 = vtanh.pop %v1428
    %1431 = vrot.lane.b32.xlu0 %v1429, 20
    %v1432 = vpop.permute.xlu0 %1431
    %v1434 = vmul.f32 %v1413, %v1432
    %v1436 = vrot.slane %v1434, 4
    %1437 = vrot.lane.b32.xlu0 %v1436, 98
    %v1438 = vpop.permute.xlu0 %1437
    %v1439 = vsel %vm294, %v1438, 0
    %1441 = vmatprep.subr.mxu0 0.0
    %1442 = vmatpush1.msra.mxu0 %v1143
    %1443 = vmatprep.subr.mxu0 0.0
    %1444 = vmatpush1.msra.mxu0 %v1228
    %1445 = vmatprep.subr.mxu0 0.0
    %1446 = vmatpush1.msra.mxu0 0.0
    %1447 = vmatprep.subr.mxu0 0.0
    %1448 = vmatpush1.msra.mxu0 0.0
    %1449 = vmatprep.subr.mxu0 0.0
    %1450 = vmatpush1.msra.mxu0 0.0
    %1451 = vmatprep.subr.mxu0 0.0
    %1452 = vmatpush1.msra.mxu0 0.0
    %1453 = vmatprep.subr.mxu0 0.0
    %1454 = vmatpush1.msra.mxu0 0.0
    %1455 = vmatprep.subr.mxu0 0.0
    %1456 = vmatpush1.msra.mxu0 0.0
    %1457 = vmatprep.subr.mxu0 0.0
    %1458 = vmatpush1.msra.mxu0 0.0
    %1459 = vmatprep.subr.mxu0 0.0
    %1460 = vmatpush1.msra.mxu0 0.0
    %1461 = vmatprep.subr.mxu0 0.0
    %1462 = vmatpush1.msra.mxu0 0.0
    %1463 = vmatprep.subr.mxu0 0.0
    %1464 = vmatpush1.msra.mxu0 0.0
    %1465 = vmatprep.subr.mxu0 0.0
    %1466 = vmatpush1.msra.mxu0 0.0
    %1467 = vmatprep.subr.mxu0 0.0
    %1468 = vmatpush1.msra.mxu0 0.0
    %1469 = vmatprep.subr.mxu0 0.0
    %1470 = vmatpush1.msra.mxu0 0.0
    %1471 = vmatprep.subr.mxu0 0.0
    %1472 = vmatpush1.msra.mxu0 0.0
    %1473 = vmatprep.subr.mxu0 0.0
    %1474 = vmatpush1.msra.mxu0 0.0
    %1475 = vmatprep.subr.mxu0 0.0
    %1476 = vmatpush1.msra.mxu0 0.0
    %1477 = vmatprep.subr.mxu0 0.0
    %1478 = vmatpush1.msra.mxu0 0.0
    %1479 = vmatprep.subr.mxu0 0.0
    %1480 = vmatpush1.msra.mxu0 0.0
    %1481 = vmatprep.subr.mxu0 0.0
    %1482 = vmatpush1.msra.mxu0 0.0
    %1483 = vmatprep.subr.mxu0 0.0
    %1484 = vmatpush1.msra.mxu0 0.0
    %1485 = vmatprep.subr.mxu0 0.0
    %1486 = vmatpush1.msra.mxu0 0.0
    %1487 = vmatprep.subr.mxu0 0.0
    %1488 = vmatpush1.msra.mxu0 0.0
    %1489 = vmatprep.subr.mxu0 0.0
    %1490 = vmatpush1.msra.mxu0 0.0
    %1491 = vmatprep.subr.mxu0 0.0
    %1492 = vmatpush1.msra.mxu0 0.0
    %1493 = vmatprep.subr.mxu0 0.0
    %1494 = vmatpush1.msra.mxu0 0.0
    %1495 = vmatprep.subr.mxu0 0.0
    %1496 = vmatpush1.msra.mxu0 0.0
    %1497 = vmatprep.subr.mxu0 0.0
    %1498 = vmatpush1.msra.mxu0 0.0
    %1499 = vmatprep.subr.mxu0 0.0
    %1500 = vmatpush1.msra.mxu0 0.0
    %1501 = vmatprep.subr.mxu0 0.0
    %1502 = vmatpush1.msra.mxu0 0.0
    %1503 = vmatprep.subr.mxu0 0.0
    %1504 = vmatpush1.msra.mxu0 0.0
    %1505 = vmatprep.mubr.f32.mxu0 0.0
    %1506 = vmatmul.mubr.f32.gmra.mrb[0].mxu0 %v1439
    %v1507 = vpop.f32.mrb[0].mxu0
    %v1508 = vadd.f32 0.0, %v1507
    %v1509 = vpop.f32.mrb[0].mxu0
    %1510 = vdwg.mxu0
    %v1512 = vrot.slane %v1508, 6
    %v1514 = vadd.f32 %v1224, %v1512
    %v1515 = vxor.u32 %v1514, 2147483648
    %v1516 = vmul.f32 %v1515, 1.442695
    %v1517 = vpow.pop %v1516
    %v1518 = vadd.f32 %v1517, 1.0
    %v1519 = vrcp.pop %v1518
    %v1520 = vmul.f32 1.0, %v1519
    %v1521 = vtanh.pop %v1514
    %v1523 = vrot.slane %v1428, 2
    %v1525 = vmul.f32 %v1520, %v1523
    %1527 = vrot.lane.b32.xlu0 %v1521, 108
    %v1528 = vpop.permute.xlu0 %1527
    %v1530 = vmul.f32 %v1520, %v1528
    %1532 = vrot.lane.b32.xlu0 %v1530, 10
    %v1533 = vpop.permute.xlu0 %1532
    %v1535 = vadd.f32 %v1525, %v1533
    %v1536 = vtanh.pop %v1535
    %1538 = vrot.lane.b32.xlu0 %v1536, 20
    %v1539 = vpop.permute.xlu0 %1538
    %v1541 = vmul.f32 %v1520, %v1539
    %v1543 = vrot.slane %v1541, 2
    %1544 = vrot.lane.b32.xlu0 %v1543, 98
    %v1545 = vpop.permute.xlu0 %1544
    %v1546 = vsel %vm294, %v1545, 0
    %1548 = vmatprep.subr.mxu0 0.0
    %1549 = vmatpush1.msra.mxu0 %v1143
    %1550 = vmatprep.subr.mxu0 0.0
    %1551 = vmatpush1.msra.mxu0 %v1228
    %1552 = vmatprep.subr.mxu0 0.0
    %1553 = vmatpush1.msra.mxu0 0.0
    %1554 = vmatprep.subr.mxu0 0.0
    %1555 = vmatpush1.msra.mxu0 0.0
    %1556 = vmatprep.subr.mxu0 0.0
    %1557 = vmatpush1.msra.mxu0 0.0
    %1558 = vmatprep.subr.mxu0 0.0
    %1559 = vmatpush1.msra.mxu0 0.0
    %1560 = vmatprep.subr.mxu0 0.0
    %1561 = vmatpush1.msra.mxu0 0.0
    %1562 = vmatprep.subr.mxu0 0.0
    %1563 = vmatpush1.msra.mxu0 0.0
    %1564 = vmatprep.subr.mxu0 0.0
    %1565 = vmatpush1.msra.mxu0 0.0
    %1566 = vmatprep.subr.mxu0 0.0
    %1567 = vmatpush1.msra.mxu0 0.0
    %1568 = vmatprep.subr.mxu0 0.0
    %1569 = vmatpush1.msra.mxu0 0.0
    %1570 = vmatprep.subr.mxu0 0.0
    %1571 = vmatpush1.msra.mxu0 0.0
    %1572 = vmatprep.subr.mxu0 0.0
    %1573 = vmatpush1.msra.mxu0 0.0
    %1574 = vmatprep.subr.mxu0 0.0
    %1575 = vmatpush1.msra.mxu0 0.0
    %1576 = vmatprep.subr.mxu0 0.0
    %1577 = vmatpush1.msra.mxu0 0.0
    %1578 = vmatprep.subr.mxu0 0.0
    %1579 = vmatpush1.msra.mxu0 0.0
    %1580 = vmatprep.subr.mxu0 0.0
    %1581 = vmatpush1.msra.mxu0 0.0
    %1582 = vmatprep.subr.mxu0 0.0
    %1583 = vmatpush1.msra.mxu0 0.0
    %1584 = vmatprep.subr.mxu0 0.0
    %1585 = vmatpush1.msra.mxu0 0.0
    %1586 = vmatprep.subr.mxu0 0.0
    %1587 = vmatpush1.msra.mxu0 0.0
    %1588 = vmatprep.subr.mxu0 0.0
    %1589 = vmatpush1.msra.mxu0 0.0
    %1590 = vmatprep.subr.mxu0 0.0
    %1591 = vmatpush1.msra.mxu0 0.0
    %1592 = vmatprep.subr.mxu0 0.0
    %1593 = vmatpush1.msra.mxu0 0.0
    %1594 = vmatprep.subr.mxu0 0.0
    %1595 = vmatpush1.msra.mxu0 0.0
    %1596 = vmatprep.subr.mxu0 0.0
    %1597 = vmatpush1.msra.mxu0 0.0
    %1598 = vmatprep.subr.mxu0 0.0
    %1599 = vmatpush1.msra.mxu0 0.0
    %1600 = vmatprep.subr.mxu0 0.0
    %1601 = vmatpush1.msra.mxu0 0.0
    %1602 = vmatprep.subr.mxu0 0.0
    %1603 = vmatpush1.msra.mxu0 0.0
    %1604 = vmatprep.subr.mxu0 0.0
    %1605 = vmatpush1.msra.mxu0 0.0
    %1606 = vmatprep.subr.mxu0 0.0
    %1607 = vmatpush1.msra.mxu0 0.0
    %1608 = vmatprep.subr.mxu0 0.0
    %1609 = vmatpush1.msra.mxu0 0.0
    %1610 = vmatprep.subr.mxu0 0.0
    %1611 = vmatpush1.msra.mxu0 0.0
    %1612 = vmatprep.mubr.f32.mxu0 0.0
    %1613 = vmatmul.mubr.f32.gmra.mrb[0].mxu0 %v1546
    %v1614 = vpop.f32.mrb[0].mxu0
    %v1615 = vadd.f32 0.0, %v1614
    %v1616 = vpop.f32.mrb[0].mxu0
    %1617 = vdwg.mxu0
    %v1618 = vadd.f32 %v1224, %v1615
    %v1619 = vxor.u32 %v1618, 2147483648
    %v1620 = vmul.f32 %v1619, 1.442695
    %v1621 = vpow.pop %v1620
    %v1622 = vadd.f32 %v1621, 1.0
    %v1623 = vrcp.pop %v1622
    %v1624 = vmul.f32 1.0, %v1623
    %v1625 = vtanh.pop %v1618
    %v1627 = vrot.slane %v1535, 2
    %v1629 = vmul.f32 %v1624, %v1627
    %1631 = vrot.lane.b32.xlu0 %v1625, 108
    %v1632 = vpop.permute.xlu0 %1631
    %v1634 = vmul.f32 %v1624, %v1632
    %1636 = vrot.lane.b32.xlu0 %v1634, 10
    %v1637 = vpop.permute.xlu0 %1636
    %v1639 = vadd.f32 %v1629, %v1637
    %v1640 = vtanh.pop %v1639
    %1642 = vrot.lane.b32.xlu0 %v1640, 20
    %v1643 = vpop.permute.xlu0 %1642
    %v1645 = vmul.f32 %v1624, %v1643
    %1647 = vrot.lane.b32.xlu0 %v1645, 98
    %v1648 = vpop.permute.xlu0 %1647
    %v1649 = vsel %vm294, %v1648, 0
    %1651 = vmatprep.subr.mxu0 0.0
    %1652 = vmatpush1.msra.mxu0 %v1143
    %1653 = vmatprep.subr.mxu0 0.0
    %1654 = vmatpush1.msra.mxu0 %v1228
    %1655 = vmatprep.subr.mxu0 0.0
    %1656 = vmatpush1.msra.mxu0 0.0
    %1657 = vmatprep.subr.mxu0 0.0
    %1658 = vmatpush1.msra.mxu0 0.0
    %1659 = vmatprep.subr.mxu0 0.0
    %1660 = vmatpush1.msra.mxu0 0.0
    %1661 = vmatprep.subr.mxu0 0.0
    %1662 = vmatpush1.msra.mxu0 0.0
    %1663 = vmatprep.subr.mxu0 0.0
    %1664 = vmatpush1.msra.mxu0 0.0
    %1665 = vmatprep.subr.mxu0 0.0
    %1666 = vmatpush1.msra.mxu0 0.0
    %1667 = vmatprep.subr.mxu0 0.0
    %1668 = vmatpush1.msra.mxu0 0.0
    %1669 = vmatprep.subr.mxu0 0.0
    %1670 = vmatpush1.msra.mxu0 0.0
    %1671 = vmatprep.subr.mxu0 0.0
    %1672 = vmatpush1.msra.mxu0 0.0
    %1673 = vmatprep.subr.mxu0 0.0
    %1674 = vmatpush1.msra.mxu0 0.0
    %1675 = vmatprep.subr.mxu0 0.0
    %1676 = vmatpush1.msra.mxu0 0.0
    %1677 = vmatprep.subr.mxu0 0.0
    %1678 = vmatpush1.msra.mxu0 0.0
    %1679 = vmatprep.subr.mxu0 0.0
    %1680 = vmatpush1.msra.mxu0 0.0
    %1681 = vmatprep.subr.mxu0 0.0
    %1682 = vmatpush1.msra.mxu0 0.0
    %1683 = vmatprep.subr.mxu0 0.0
    %1684 = vmatpush1.msra.mxu0 0.0
    %1685 = vmatprep.subr.mxu0 0.0
    %1686 = vmatpush1.msra.mxu0 0.0
    %1687 = vmatprep.subr.mxu0 0.0
    %1688 = vmatpush1.msra.mxu0 0.0
    %1689 = vmatprep.subr.mxu0 0.0
    %1690 = vmatpush1.msra.mxu0 0.0
    %1691 = vmatprep.subr.mxu0 0.0
    %1692 = vmatpush1.msra.mxu0 0.0
    %1693 = vmatprep.subr.mxu0 0.0
    %1694 = vmatpush1.msra.mxu0 0.0
    %1695 = vmatprep.subr.mxu0 0.0
    %1696 = vmatpush1.msra.mxu0 0.0
    %1697 = vmatprep.subr.mxu0 0.0
    %1698 = vmatpush1.msra.mxu0 0.0
    %1699 = vmatprep.subr.mxu0 0.0
    %1700 = vmatpush1.msra.mxu0 0.0
    %1701 = vmatprep.subr.mxu0 0.0
    %1702 = vmatpush1.msra.mxu0 0.0
    %1703 = vmatprep.subr.mxu0 0.0
    %1704 = vmatpush1.msra.mxu0 0.0
    %1705 = vmatprep.subr.mxu0 0.0
    %1706 = vmatpush1.msra.mxu0 0.0
    %1707 = vmatprep.subr.mxu0 0.0
    %1708 = vmatpush1.msra.mxu0 0.0
    %1709 = vmatprep.subr.mxu0 0.0
    %1710 = vmatpush1.msra.mxu0 0.0
    %1711 = vmatprep.subr.mxu0 0.0
    %1712 = vmatpush1.msra.mxu0 0.0
    %1713 = vmatprep.subr.mxu0 0.0
    %1714 = vmatpush1.msra.mxu0 0.0
    %1715 = vmatprep.mubr.f32.mxu0 0.0
    %1716 = vmatmul.mubr.f32.gmra.mrb[0].mxu0 %v1649
    %v1717 = vpop.f32.mrb[0].mxu0
    %v1718 = vadd.f32 0.0, %v1717
    %v1719 = vpop.f32.mrb[0].mxu0
    %1720 = vdwg.mxu0
    %v1722 = vrot.slane %v1718, 2
    %v1724 = vadd.f32 %v1219, %v1722
    %v1725 = vxor.u32 %v1724, 2147483648
    %v1726 = vmul.f32 %v1725, 1.442695
    %v1727 = vpow.pop %v1726
    %v1728 = vadd.f32 %v1727, 1.0
    %v1729 = vrcp.pop %v1728
    %v1730 = vmul.f32 1.0, %v1729
    %v1731 = vtanh.pop %v1724
    %v1733 = vrot.slane %v1639, 2
    %v1735 = vmul.f32 %v1730, %v1733
    %1737 = vrot.lane.b32.xlu0 %v1731, 108
    %v1738 = vpop.permute.xlu0 %1737
    %v1740 = vmul.f32 %v1730, %v1738
    %1742 = vrot.lane.b32.xlu0 %v1740, 10
    %v1743 = vpop.permute.xlu0 %1742
    %v1745 = vadd.f32 %v1735, %v1743
    %v1746 = vtanh.pop %v1745
    %1748 = vrot.lane.b32.xlu0 %v1746, 20
    %v1749 = vpop.permute.xlu0 %1748
    %v1751 = vmul.f32 %v1730, %v1749
    %v1753 = vrot.slane %v1751, 6
    %1754 = vrot.lane.b32.xlu0 %v1753, 98
    %v1755 = vpop.permute.xlu0 %1754
    %v1756 = vsel %vm294, %v1755, 0
    %1758 = vmatprep.subr.mxu0 0.0
    %1759 = vmatpush1.msra.mxu0 %v1143
    %1760 = vmatprep.subr.mxu0 0.0
    %1761 = vmatpush1.msra.mxu0 %v1228
    %1762 = vmatprep.subr.mxu0 0.0
    %1763 = vmatpush1.msra.mxu0 0.0
    %1764 = vmatprep.subr.mxu0 0.0
    %1765 = vmatpush1.msra.mxu0 0.0
    %1766 = vmatprep.subr.mxu0 0.0
    %1767 = vmatpush1.msra.mxu0 0.0
    %1768 = vmatprep.subr.mxu0 0.0
    %1769 = vmatpush1.msra.mxu0 0.0
    %1770 = vmatprep.subr.mxu0 0.0
    %1771 = vmatpush1.msra.mxu0 0.0
    %1772 = vmatprep.subr.mxu0 0.0
    %1773 = vmatpush1.msra.mxu0 0.0
    %1774 = vmatprep.subr.mxu0 0.0
    %1775 = vmatpush1.msra.mxu0 0.0
    %1776 = vmatprep.subr.mxu0 0.0
    %1777 = vmatpush1.msra.mxu0 0.0
    %1778 = vmatprep.subr.mxu0 0.0
    %1779 = vmatpush1.msra.mxu0 0.0
    %1780 = vmatprep.subr.mxu0 0.0
    %1781 = vmatpush1.msra.mxu0 0.0
    %1782 = vmatprep.subr.mxu0 0.0
    %1783 = vmatpush1.msra.mxu0 0.0
    %1784 = vmatprep.subr.mxu0 0.0
    %1785 = vmatpush1.msra.mxu0 0.0
    %1786 = vmatprep.subr.mxu0 0.0
    %1787 = vmatpush1.msra.mxu0 0.0
    %1788 = vmatprep.subr.mxu0 0.0
    %1789 = vmatpush1.msra.mxu0 0.0
    %1790 = vmatprep.subr.mxu0 0.0
    %1791 = vmatpush1.msra.mxu0 0.0
    %1792 = vmatprep.subr.mxu0 0.0
    %1793 = vmatpush1.msra.mxu0 0.0
    %1794 = vmatprep.subr.mxu0 0.0
    %1795 = vmatpush1.msra.mxu0 0.0
    %1796 = vmatprep.subr.mxu0 0.0
    %1797 = vmatpush1.msra.mxu0 0.0
    %1798 = vmatprep.subr.mxu0 0.0
    %1799 = vmatpush1.msra.mxu0 0.0
    %1800 = vmatprep.subr.mxu0 0.0
    %1801 = vmatpush1.msra.mxu0 0.0
    %1802 = vmatprep.subr.mxu0 0.0
    %1803 = vmatpush1.msra.mxu0 0.0
    %1804 = vmatprep.subr.mxu0 0.0
    %1805 = vmatpush1.msra.mxu0 0.0
    %1806 = vmatprep.subr.mxu0 0.0
    %1807 = vmatpush1.msra.mxu0 0.0
    %1808 = vmatprep.subr.mxu0 0.0
    %1809 = vmatpush1.msra.mxu0 0.0
    %1810 = vmatprep.subr.mxu0 0.0
    %1811 = vmatpush1.msra.mxu0 0.0
    %1812 = vmatprep.subr.mxu0 0.0
    %1813 = vmatpush1.msra.mxu0 0.0
    %1814 = vmatprep.subr.mxu0 0.0
    %1815 = vmatpush1.msra.mxu0 0.0
    %1816 = vmatprep.subr.mxu0 0.0
    %1817 = vmatpush1.msra.mxu0 0.0
    %1818 = vmatprep.subr.mxu0 0.0
    %1819 = vmatpush1.msra.mxu0 0.0
    %1820 = vmatprep.subr.mxu0 0.0
    %1821 = vmatpush1.msra.mxu0 0.0
    %1822 = vmatprep.mubr.f32.mxu0 0.0
    %1823 = vmatmul.mubr.f32.gmra.mrb[0].mxu0 %v1756
    %v1824 = vpop.f32.mrb[0].mxu0
    %v1825 = vadd.f32 0.0, %v1824
    %v1826 = vpop.f32.mrb[0].mxu0
    %1827 = vdwg.mxu0
    %v1829 = vrot.slane %v1825, 4
    %v1831 = vadd.f32 %v1219, %v1829
    %v1832 = vxor.u32 %v1831, 2147483648
    %v1833 = vmul.f32 %v1832, 1.442695
    %v1834 = vpow.pop %v1833
    %v1835 = vadd.f32 %v1834, 1.0
    %v1836 = vrcp.pop %v1835
    %v1837 = vmul.f32 1.0, %v1836
    %v1838 = vtanh.pop %v1831
    %v1840 = vrot.slane %v1745, 2
    %v1842 = vmul.f32 %v1837, %v1840
    %1844 = vrot.lane.b32.xlu0 %v1838, 108
    %v1845 = vpop.permute.xlu0 %1844
    %v1847 = vmul.f32 %v1837, %v1845
    %1849 = vrot.lane.b32.xlu0 %v1847, 10
    %v1850 = vpop.permute.xlu0 %1849
    %v1852 = vadd.f32 %v1842, %v1850
    %v1853 = vtanh.pop %v1852
    %1855 = vrot.lane.b32.xlu0 %v1853, 20
    %v1856 = vpop.permute.xlu0 %1855
    %v1858 = vmul.f32 %v1837, %v1856
    %v1860 = vrot.slane %v1858, 4
    %1861 = vrot.lane.b32.xlu0 %v1860, 98
    %v1862 = vpop.permute.xlu0 %1861
    %v1863 = vsel %vm294, %v1862, 0
    %1865 = vmatprep.subr.mxu0 0.0
    %1866 = vmatpush1.msra.mxu0 %v1143
    %1867 = vmatprep.subr.mxu0 0.0
    %1868 = vmatpush1.msra.mxu0 %v1228
    %1869 = vmatprep.subr.mxu0 0.0
    %1870 = vmatpush1.msra.mxu0 0.0
    %1871 = vmatprep.subr.mxu0 0.0
    %1872 = vmatpush1.msra.mxu0 0.0
    %1873 = vmatprep.subr.mxu0 0.0
    %1874 = vmatpush1.msra.mxu0 0.0
    %1875 = vmatprep.subr.mxu0 0.0
    %1876 = vmatpush1.msra.mxu0 0.0
    %1877 = vmatprep.subr.mxu0 0.0
    %1878 = vmatpush1.msra.mxu0 0.0
    %1879 = vmatprep.subr.mxu0 0.0
    %1880 = vmatpush1.msra.mxu0 0.0
    %1881 = vmatprep.subr.mxu0 0.0
    %1882 = vmatpush1.msra.mxu0 0.0
    %1883 = vmatprep.subr.mxu0 0.0
    %1884 = vmatpush1.msra.mxu0 0.0
    %1885 = vmatprep.subr.mxu0 0.0
    %1886 = vmatpush1.msra.mxu0 0.0
    %1887 = vmatprep.subr.mxu0 0.0
    %1888 = vmatpush1.msra.mxu0 0.0
    %1889 = vmatprep.subr.mxu0 0.0
    %1890 = vmatpush1.msra.mxu0 0.0
    %1891 = vmatprep.subr.mxu0 0.0
    %1892 = vmatpush1.msra.mxu0 0.0
    %1893 = vmatprep.subr.mxu0 0.0
    %1894 = vmatpush1.msra.mxu0 0.0
    %1895 = vmatprep.subr.mxu0 0.0
    %1896 = vmatpush1.msra.mxu0 0.0
    %1897 = vmatprep.subr.mxu0 0.0
    %1898 = vmatpush1.msra.mxu0 0.0
    %1899 = vmatprep.subr.mxu0 0.0
    %1900 = vmatpush1.msra.mxu0 0.0
    %1901 = vmatprep.subr.mxu0 0.0
    %1902 = vmatpush1.msra.mxu0 0.0
    %1903 = vmatprep.subr.mxu0 0.0
    %1904 = vmatpush1.msra.mxu0 0.0
    %1905 = vmatprep.subr.mxu0 0.0
    %1906 = vmatpush1.msra.mxu0 0.0
    %1907 = vmatprep.subr.mxu0 0.0
    %1908 = vmatpush1.msra.mxu0 0.0
    %1909 = vmatprep.subr.mxu0 0.0
    %1910 = vmatpush1.msra.mxu0 0.0
    %1911 = vmatprep.subr.mxu0 0.0
    %1912 = vmatpush1.msra.mxu0 0.0
    %1913 = vmatprep.subr.mxu0 0.0
    %1914 = vmatpush1.msra.mxu0 0.0
    %1915 = vmatprep.subr.mxu0 0.0
    %1916 = vmatpush1.msra.mxu0 0.0
    %1917 = vmatprep.subr.mxu0 0.0
    %1918 = vmatpush1.msra.mxu0 0.0
    %1919 = vmatprep.subr.mxu0 0.0
    %1920 = vmatpush1.msra.mxu0 0.0
    %1921 = vmatprep.subr.mxu0 0.0
    %1922 = vmatpush1.msra.mxu0 0.0
    %1923 = vmatprep.subr.mxu0 0.0
    %1924 = vmatpush1.msra.mxu0 0.0
    %1925 = vmatprep.subr.mxu0 0.0
    %1926 = vmatpush1.msra.mxu0 0.0
    %1927 = vmatprep.subr.mxu0 0.0
    %1928 = vmatpush1.msra.mxu0 0.0
    %1929 = vmatprep.mubr.f32.mxu0 0.0
    %1930 = vmatmul.mubr.f32.gmra.mrb[0].mxu0 %v1863
    %v1931 = vpop.f32.mrb[0].mxu0
    %v1932 = vadd.f32 0.0, %v1931
    %v1933 = vpop.f32.mrb[0].mxu0
    %1934 = vdwg.mxu0
    %v1936 = vrot.slane %v1932, 6
    %v1938 = vadd.f32 %v1219, %v1936
    %v1939 = vxor.u32 %v1938, 2147483648
    %v1940 = vmul.f32 %v1939, 1.442695
    %v1941 = vpow.pop %v1940
    %v1942 = vadd.f32 %v1941, 1.0
    %v1943 = vrcp.pop %v1942
    %v1944 = vmul.f32 1.0, %v1943
    %v1945 = vtanh.pop %v1938
    %v1947 = vrot.slane %v1852, 2
    %v1949 = vmul.f32 %v1944, %v1947
    %1951 = vrot.lane.b32.xlu0 %v1945, 108
    %v1952 = vpop.permute.xlu0 %1951
    %v1954 = vmul.f32 %v1944, %v1952
    %1956 = vrot.lane.b32.xlu0 %v1954, 10
    %v1957 = vpop.permute.xlu0 %1956
    %v1959 = vadd.f32 %v1949, %v1957
    %v1960 = vtanh.pop %v1959
    %1962 = vrot.lane.b32.xlu0 %v1960, 20
    %v1963 = vpop.permute.xlu0 %1962
    %v1965 = vmul.f32 %v1944, %v1963
    %v1967 = vrot.slane %v1965, 2
    %1968 = vrot.lane.b32.xlu0 %v1967, 98
    %v1969 = vpop.permute.xlu0 %1968
    %v1970 = vsel %vm294, %v1969, 0
    %1972 = vmatprep.subr.mxu0 0.0
    %1973 = vmatpush1.msra.mxu0 %v1143
    %1974 = vmatprep.subr.mxu0 0.0
    %1975 = vmatpush1.msra.mxu0 %v1228
    %1976 = vmatprep.subr.mxu0 0.0
    %1977 = vmatpush1.msra.mxu0 0.0
    %1978 = vmatprep.subr.mxu0 0.0
    %1979 = vmatpush1.msra.mxu0 0.0
    %1980 = vmatprep.subr.mxu0 0.0
    %1981 = vmatpush1.msra.mxu0 0.0
    %1982 = vmatprep.subr.mxu0 0.0
    %1983 = vmatpush1.msra.mxu0 0.0
    %1984 = vmatprep.subr.mxu0 0.0
    %1985 = vmatpush1.msra.mxu0 0.0
    %1986 = vmatprep.subr.mxu0 0.0
    %1987 = vmatpush1.msra.mxu0 0.0
    %1988 = vmatprep.subr.mxu0 0.0
    %1989 = vmatpush1.msra.mxu0 0.0
    %1990 = vmatprep.subr.mxu0 0.0
    %1991 = vmatpush1.msra.mxu0 0.0
    %1992 = vmatprep.subr.mxu0 0.0
    %1993 = vmatpush1.msra.mxu0 0.0
    %1994 = vmatprep.subr.mxu0 0.0
    %1995 = vmatpush1.msra.mxu0 0.0
    %1996 = vmatprep.subr.mxu0 0.0
    %1997 = vmatpush1.msra.mxu0 0.0
    %1998 = vmatprep.subr.mxu0 0.0
    %1999 = vmatpush1.msra.mxu0 0.0
    %2000 = vmatprep.subr.mxu0 0.0
    %2001 = vmatpush1.msra.mxu0 0.0
    %2002 = vmatprep.subr.mxu0 0.0
    %2003 = vmatpush1.msra.mxu0 0.0
    %2004 = vmatprep.subr.mxu0 0.0
    %2005 = vmatpush1.msra.mxu0 0.0
    %2006 = vmatprep.subr.mxu0 0.0
    %2007 = vmatpush1.msra.mxu0 0.0
    %2008 = vmatprep.subr.mxu0 0.0
    %2009 = vmatpush1.msra.mxu0 0.0
    %2010 = vmatprep.subr.mxu0 0.0
    %2011 = vmatpush1.msra.mxu0 0.0
    %2012 = vmatprep.subr.mxu0 0.0
    %2013 = vmatpush1.msra.mxu0 0.0
    %2014 = vmatprep.subr.mxu0 0.0
    %2015 = vmatpush1.msra.mxu0 0.0
    %2016 = vmatprep.subr.mxu0 0.0
    %2017 = vmatpush1.msra.mxu0 0.0
    %2018 = vmatprep.subr.mxu0 0.0
    %2019 = vmatpush1.msra.mxu0 0.0
    %2020 = vmatprep.subr.mxu0 0.0
    %2021 = vmatpush1.msra.mxu0 0.0
    %2022 = vmatprep.subr.mxu0 0.0
    %2023 = vmatpush1.msra.mxu0 0.0
    %2024 = vmatprep.subr.mxu0 0.0
    %2025 = vmatpush1.msra.mxu0 0.0
    %2026 = vmatprep.subr.mxu0 0.0
    %2027 = vmatpush1.msra.mxu0 0.0
    %2028 = vmatprep.subr.mxu0 0.0
    %2029 = vmatpush1.msra.mxu0 0.0
    %2030 = vmatprep.subr.mxu0 0.0
    %2031 = vmatpush1.msra.mxu0 0.0
    %2032 = vmatprep.subr.mxu0 0.0
    %2033 = vmatpush1.msra.mxu0 0.0
    %2034 = vmatprep.subr.mxu0 0.0
    %2035 = vmatpush1.msra.mxu0 0.0
    %2036 = vmatprep.mubr.f32.mxu0 0.0
    %2037 = vmatmul.mubr.f32.gmra.mrb[0].mxu0 %v1970
    %v2038 = vpop.f32.mrb[0].mxu0
    %v2039 = vadd.f32 0.0, %v2038
    %v2040 = vpop.f32.mrb[0].mxu0
    %2041 = vdwg.mxu0
    %v2042 = vadd.f32 %v1219, %v2039
    %v2043 = vxor.u32 %v2042, 2147483648
    %v2044 = vmul.f32 %v2043, 1.442695
    %v2045 = vpow.pop %v2044
    %v2046 = vadd.f32 %v2045, 1.0
    %v2047 = vrcp.pop %v2046
    %v2048 = vmul.f32 1.0, %v2047
    %v2049 = vtanh.pop %v2042
    %v2051 = vrot.slane %v1959, 2
    %v2053 = vmul.f32 %v2048, %v2051
    %2055 = vrot.lane.b32.xlu0 %v2049, 108
    %v2056 = vpop.permute.xlu0 %2055
    %v2058 = vmul.f32 %v2048, %v2056
    %2060 = vrot.lane.b32.xlu0 %v2058, 10
    %v2061 = vpop.permute.xlu0 %2060
    %v2063 = vadd.f32 %v2053, %v2061
    %v2064 = vtanh.pop %v2063
    %2066 = vrot.lane.b32.xlu0 %v2064, 20
    %v2067 = vpop.permute.xlu0 %2066
    %v2069 = vmul.f32 %v2048, %v2067
    %2072 = vrot.lane.b32.xlu0 %v2069, 108
    %v2073 = vpop.permute.xlu0 %2072
    %v2075 = vsel %vm294, %v399, %v2073
    %2076 = vrot.lane.b32.xlu0 %v502, 98
    %v2077 = vpop.permute.xlu0 %2076
    %2079 = vrot.lane.b32.xlu0 %v1965, 108
    %v2080 = vpop.permute.xlu0 %2079
    %v2082 = vsel %vm294, %v2077, %v2080
    %2083 = vrot.lane.b32.xlu0 %v609, 98
    %v2084 = vpop.permute.xlu0 %2083
    %2086 = vrot.lane.b32.xlu0 %v1858, 108
    %v2087 = vpop.permute.xlu0 %2086
    %v2089 = vsel %vm294, %v2084, %v2087
    %2090 = vrot.lane.b32.xlu0 %v716, 98
    %v2091 = vpop.permute.xlu0 %2090
    %2093 = vrot.lane.b32.xlu0 %v1751, 108
    %v2094 = vpop.permute.xlu0 %2093
    %v2096 = vsel %vm294, %v2091, %v2094
    %2098 = vrot.lane.b32.xlu0 %v1645, 108
    %v2099 = vpop.permute.xlu0 %2098
    %v2101 = vsel %vm294, %v823, %v2099
    %2102 = vrot.lane.b32.xlu0 %v926, 98
    %v2103 = vpop.permute.xlu0 %2102
    %2105 = vrot.lane.b32.xlu0 %v1541, 108
    %v2106 = vpop.permute.xlu0 %2105
    %v2108 = vsel %vm294, %v2103, %v2106
    %2109 = vrot.lane.b32.xlu0 %v1033, 98
    %v2110 = vpop.permute.xlu0 %2109
    %2112 = vrot.lane.b32.xlu0 %v1434, 108
    %v2113 = vpop.permute.xlu0 %2112
    %v2115 = vsel %vm294, %v2110, %v2113
    %2117 = vrot.lane.b32.xlu0 %v1140, 98
    %v2118 = vpop.permute.xlu0 %2117
    %2120 = vrot.lane.b32.xlu0 %v1327, 108
    %v2121 = vpop.permute.xlu0 %2120
    %v2123 = vsel %vm294, %v2118, %v2121
    %v2124 = vsel %vm298, %v2075, %v2082
    %vm2125 = vcmask 1043456
    %v2126 = vsel %vm2125, %v2124, %v2089
    %vm2127 = vcmask 1045504
    %v2128 = vsel %vm2127, %v2126, %v2096
    %v2129 = vsel %vm298, %v2101, %v2108
    %v2130 = vsel %vm2125, %v2129, %v2115
    %v2131 = vsel %vm2127, %v2130, %v2123
    %v2132 = vld [vmem:[%s8] sm:$0xff]
    %v2133 = vld [vmem:[%s8 + $0x8] sm:$0xff]
    %v2134 = vld [vmem:[%s8 + $0x10] sm:$0xf]
    %v2135 = vld [vmem:[%s9] sm:$0xff]
    %v2136 = vld [vmem:[%s9 + $0x8] sm:$0x3]
    %v2137 = vld [vmem:[%s10] sm:$0x1]
    %v2139 = vlaneseq
    %v2140 = vshrl.u32 %v2139, 7
    %v2141 = vsub.s32 0, %v2140
    %v2142 = vrot.slane %v2137, %v2141
    %vm2144 = vcmask 162816
    %v2146 = vsel %vm2144, %v2128, 0
    %v2149 = vsel %vm2144, %v2131, 0
    %v2152 = vsel %vm2125, %v2134, 0
    %2154 = vmatprep.subr.mxu0 0.0
    %2155 = vmatpush1.msra.mxu0 %v2132
    %2156 = vmatprep.subr.mxu0 0.0
    %2157 = vmatpush1.msra.mxu0 %v2133
    %2158 = vmatprep.subr.mxu0 0.0
    %2159 = vmatpush1.msra.mxu0 %v2152
    %2160 = vmatprep.subr.mxu0 0.0
    %2161 = vmatpush1.msra.mxu0 0.0
    %2162 = vmatprep.subr.mxu0 0.0
    %2163 = vmatpush1.msra.mxu0 0.0
    %2164 = vmatprep.subr.mxu0 0.0
    %2165 = vmatpush1.msra.mxu0 0.0
    %2166 = vmatprep.subr.mxu0 0.0
    %2167 = vmatpush1.msra.mxu0 0.0
    %2168 = vmatprep.subr.mxu0 0.0
    %2169 = vmatpush1.msra.mxu0 0.0
    %2170 = vmatprep.subr.mxu0 0.0
    %2171 = vmatpush1.msra.mxu0 0.0
    %2172 = vmatprep.subr.mxu0 0.0
    %2173 = vmatpush1.msra.mxu0 0.0
    %2174 = vmatprep.subr.mxu0 0.0
    %2175 = vmatpush1.msra.mxu0 0.0
    %2176 = vmatprep.subr.mxu0 0.0
    %2177 = vmatpush1.msra.mxu0 0.0
    %2178 = vmatprep.subr.mxu0 0.0
    %2179 = vmatpush1.msra.mxu0 0.0
    %2180 = vmatprep.subr.mxu0 0.0
    %2181 = vmatpush1.msra.mxu0 0.0
    %2182 = vmatprep.subr.mxu0 0.0
    %2183 = vmatpush1.msra.mxu0 0.0
    %2184 = vmatprep.subr.mxu0 0.0
    %2185 = vmatpush1.msra.mxu0 0.0
    %2186 = vmatprep.subr.mxu0 0.0
    %2187 = vmatpush1.msra.mxu0 0.0
    %2188 = vmatprep.subr.mxu0 0.0
    %2189 = vmatpush1.msra.mxu0 0.0
    %2190 = vmatprep.subr.mxu0 0.0
    %2191 = vmatpush1.msra.mxu0 0.0
    %2192 = vmatprep.subr.mxu0 0.0
    %2193 = vmatpush1.msra.mxu0 0.0
    %2194 = vmatprep.subr.mxu0 0.0
    %2195 = vmatpush1.msra.mxu0 0.0
    %2196 = vmatprep.subr.mxu0 0.0
    %2197 = vmatpush1.msra.mxu0 0.0
    %2198 = vmatprep.subr.mxu0 0.0
    %2199 = vmatpush1.msra.mxu0 0.0
    %2200 = vmatprep.subr.mxu0 0.0
    %2201 = vmatpush1.msra.mxu0 0.0
    %2202 = vmatprep.subr.mxu0 0.0
    %2203 = vmatpush1.msra.mxu0 0.0
    %2204 = vmatprep.subr.mxu0 0.0
    %2205 = vmatpush1.msra.mxu0 0.0
    %2206 = vmatprep.subr.mxu0 0.0
    %2207 = vmatpush1.msra.mxu0 0.0
    %2208 = vmatprep.subr.mxu0 0.0
    %2209 = vmatpush1.msra.mxu0 0.0
    %2210 = vmatprep.subr.mxu0 0.0
    %2211 = vmatpush1.msra.mxu0 0.0
    %2212 = vmatprep.subr.mxu0 0.0
    %2213 = vmatpush1.msra.mxu0 0.0
    %2214 = vmatprep.subr.mxu0 0.0
    %2215 = vmatpush1.msra.mxu0 0.0
    %2216 = vmatprep.subr.mxu0 0.0
    %2217 = vmatpush1.msra.mxu0 0.0
    %2218 = vmatprep.mubr.f32.mxu0 0.0
    %2219 = vmatmul.mubr.f32.gmra.mrb[0].mxu0 %v2146
    %v2220 = vpop.f32.mrb[0].mxu0
    %v2221 = vadd.f32 %v2142, %v2220
    %v2222 = vpop.f32.mrb[0].mxu0
    %2223 = vmatprep.mubr.f32.mxu0 0.0
    %2224 = vmatmul.mubr.f32.gmra.mrb[0].mxu0 %v2149
    %v2225 = vpop.f32.mrb[0].mxu0
    %v2226 = vadd.f32 %v2142, %v2225
    %v2227 = vpop.f32.mrb[0].mxu0
    %2228 = vdwg.mxu0
    %v2230 = vsel %vm298, %v2136, 0
    %2232 = vmatprep.subr.mxu0 0.0
    %2233 = vmatpush1.msra.mxu0 %v2135
    %2234 = vmatprep.subr.mxu0 0.0
    %2235 = vmatpush1.msra.mxu0 %v2230
    %2236 = vmatprep.subr.mxu0 0.0
    %2237 = vmatpush1.msra.mxu0 0.0
    %2238 = vmatprep.subr.mxu0 0.0
    %2239 = vmatpush1.msra.mxu0 0.0
    %2240 = vmatprep.subr.mxu0 0.0
    %2241 = vmatpush1.msra.mxu0 0.0
    %2242 = vmatprep.subr.mxu0 0.0
    %2243 = vmatpush1.msra.mxu0 0.0
    %2244 = vmatprep.subr.mxu0 0.0
    %2245 = vmatpush1.msra.mxu0 0.0
    %2246 = vmatprep.subr.mxu0 0.0
    %2247 = vmatpush1.msra.mxu0 0.0
    %2248 = vmatprep.subr.mxu0 0.0
    %2249 = vmatpush1.msra.mxu0 0.0
    %2250 = vmatprep.subr.mxu0 0.0
    %2251 = vmatpush1.msra.mxu0 0.0
    %2252 = vmatprep.subr.mxu0 0.0
    %2253 = vmatpush1.msra.mxu0 0.0
    %2254 = vmatprep.subr.mxu0 0.0
    %2255 = vmatpush1.msra.mxu0 0.0
    %2256 = vmatprep.subr.mxu0 0.0
    %2257 = vmatpush1.msra.mxu0 0.0
    %2258 = vmatprep.subr.mxu0 0.0
    %2259 = vmatpush1.msra.mxu0 0.0
    %2260 = vmatprep.subr.mxu0 0.0
    %2261 = vmatpush1.msra.mxu0 0.0
    %2262 = vmatprep.subr.mxu0 0.0
    %2263 = vmatpush1.msra.mxu0 0.0
    %2264 = vmatprep.subr.mxu0 0.0
    %2265 = vmatpush1.msra.mxu0 0.0
    %2266 = vmatprep.subr.mxu0 0.0
    %2267 = vmatpush1.msra.mxu0 0.0
    %2268 = vmatprep.subr.mxu0 0.0
    %2269 = vmatpush1.msra.mxu0 0.0
    %2270 = vmatprep.subr.mxu0 0.0
    %2271 = vmatpush1.msra.mxu0 0.0
    %2272 = vmatprep.subr.mxu0 0.0
    %2273 = vmatpush1.msra.mxu0 0.0
    %2274 = vmatprep.subr.mxu0 0.0
    %2275 = vmatpush1.msra.mxu0 0.0
    %2276 = vmatprep.subr.mxu0 0.0
    %2277 = vmatpush1.msra.mxu0 0.0
    %2278 = vmatprep.subr.mxu0 0.0
    %2279 = vmatpush1.msra.mxu0 0.0
    %2280 = vmatprep.subr.mxu0 0.0
    %2281 = vmatpush1.msra.mxu0 0.0
    %2282 = vmatprep.subr.mxu0 0.0
    %2283 = vmatpush1.msra.mxu0 0.0
    %2284 = vmatprep.subr.mxu0 0.0
    %2285 = vmatpush1.msra.mxu0 0.0
    %2286 = vmatprep.subr.mxu0 0.0
    %2287 = vmatpush1.msra.mxu0 0.0
    %2288 = vmatprep.subr.mxu0 0.0
    %2289 = vmatpush1.msra.mxu0 0.0
    %2290 = vmatprep.subr.mxu0 0.0
    %2291 = vmatpush1.msra.mxu0 0.0
    %2292 = vmatprep.subr.mxu0 0.0
    %2293 = vmatpush1.msra.mxu0 0.0
    %2294 = vmatprep.subr.mxu0 0.0
    %2295 = vmatpush1.msra.mxu0 0.0
    %2296 = vmatprep.mubr.f32.mxu0 0.0
    %2297 = vmatmul.mubr.f32.gmra.mrb[0].mxu0 %v296
    %v2298 = vpop.f32.mrb[0].mxu0
    %v2299 = vadd.f32 0.0, %v2298
    %v2300 = vpop.f32.mrb[0].mxu0
    %2301 = vdwg.mxu0
    %v2302 = vadd.f32 %v2221, %v2299
    %v2303 = vxor.u32 %v2302, 2147483648
    %v2304 = vmul.f32 %v2303, 1.442695
    %v2305 = vpow.pop %v2304
    %v2306 = vadd.f32 %v2305, 1.0
    %v2307 = vrcp.pop %v2306
    %v2308 = vmul.f32 1.0, %v2307
    %v2309 = vtanh.pop %v2302
    %v2310 = vmul.f32 %v2308, 0.0
    %2312 = vrot.lane.b32.xlu0 %v2309, 108
    %v2313 = vpop.permute.xlu0 %2312
    %v2315 = vmul.f32 %v2308, %v2313
    %2317 = vrot.lane.b32.xlu0 %v2315, 10
    %v2318 = vpop.permute.xlu0 %2317
    %v2320 = vadd.f32 %v2310, %v2318
    %v2321 = vtanh.pop %v2320
    %2323 = vrot.lane.b32.xlu0 %v2321, 20
    %v2324 = vpop.permute.xlu0 %2323
    %v2326 = vmul.f32 %v2308, %v2324
    %2328 = vrot.lane.b32.xlu0 %v2326, 98
    %v2329 = vpop.permute.xlu0 %2328
    %v2330 = vsel %vm294, %v2329, 0
    %2332 = vmatprep.subr.mxu0 0.0
    %2333 = vmatpush1.msra.mxu0 %v2135
    %2334 = vmatprep.subr.mxu0 0.0
    %2335 = vmatpush1.msra.mxu0 %v2230
    %2336 = vmatprep.subr.mxu0 0.0
    %2337 = vmatpush1.msra.mxu0 0.0
    %2338 = vmatprep.subr.mxu0 0.0
    %2339 = vmatpush1.msra.mxu0 0.0
    %2340 = vmatprep.subr.mxu0 0.0
    %2341 = vmatpush1.msra.mxu0 0.0
    %2342 = vmatprep.subr.mxu0 0.0
    %2343 = vmatpush1.msra.mxu0 0.0
    %2344 = vmatprep.subr.mxu0 0.0
    %2345 = vmatpush1.msra.mxu0 0.0
    %2346 = vmatprep.subr.mxu0 0.0
    %2347 = vmatpush1.msra.mxu0 0.0
    %2348 = vmatprep.subr.mxu0 0.0
    %2349 = vmatpush1.msra.mxu0 0.0
    %2350 = vmatprep.subr.mxu0 0.0
    %2351 = vmatpush1.msra.mxu0 0.0
    %2352 = vmatprep.subr.mxu0 0.0
    %2353 = vmatpush1.msra.mxu0 0.0
    %2354 = vmatprep.subr.mxu0 0.0
    %2355 = vmatpush1.msra.mxu0 0.0
    %2356 = vmatprep.subr.mxu0 0.0
    %2357 = vmatpush1.msra.mxu0 0.0
    %2358 = vmatprep.subr.mxu0 0.0
    %2359 = vmatpush1.msra.mxu0 0.0
    %2360 = vmatprep.subr.mxu0 0.0
    %2361 = vmatpush1.msra.mxu0 0.0
    %2362 = vmatprep.subr.mxu0 0.0
    %2363 = vmatpush1.msra.mxu0 0.0
    %2364 = vmatprep.subr.mxu0 0.0
    %2365 = vmatpush1.msra.mxu0 0.0
    %2366 = vmatprep.subr.mxu0 0.0
    %2367 = vmatpush1.msra.mxu0 0.0
    %2368 = vmatprep.subr.mxu0 0.0
    %2369 = vmatpush1.msra.mxu0 0.0
    %2370 = vmatprep.subr.mxu0 0.0
    %2371 = vmatpush1.msra.mxu0 0.0
    %2372 = vmatprep.subr.mxu0 0.0
    %2373 = vmatpush1.msra.mxu0 0.0
    %2374 = vmatprep.subr.mxu0 0.0
    %2375 = vmatpush1.msra.mxu0 0.0
    %2376 = vmatprep.subr.mxu0 0.0
    %2377 = vmatpush1.msra.mxu0 0.0
    %2378 = vmatprep.subr.mxu0 0.0
    %2379 = vmatpush1.msra.mxu0 0.0
    %2380 = vmatprep.subr.mxu0 0.0
    %2381 = vmatpush1.msra.mxu0 0.0
    %2382 = vmatprep.subr.mxu0 0.0
    %2383 = vmatpush1.msra.mxu0 0.0
    %2384 = vmatprep.subr.mxu0 0.0
    %2385 = vmatpush1.msra.mxu0 0.0
    %2386 = vmatprep.subr.mxu0 0.0
    %2387 = vmatpush1.msra.mxu0 0.0
    %2388 = vmatprep.subr.mxu0 0.0
    %2389 = vmatpush1.msra.mxu0 0.0
    %2390 = vmatprep.subr.mxu0 0.0
    %2391 = vmatpush1.msra.mxu0 0.0
    %2392 = vmatprep.subr.mxu0 0.0
    %2393 = vmatpush1.msra.mxu0 0.0
    %2394 = vmatprep.subr.mxu0 0.0
    %2395 = vmatpush1.msra.mxu0 0.0
    %2396 = vmatprep.mubr.f32.mxu0 0.0
    %2397 = vmatmul.mubr.f32.gmra.mrb[0].mxu0 %v2330
    %v2398 = vpop.f32.mrb[0].mxu0
    %v2399 = vadd.f32 0.0, %v2398
    %v2400 = vpop.f32.mrb[0].mxu0
    %2401 = vdwg.mxu0
    %v2403 = vrot.slane %v2399, 6
    %v2405 = vadd.f32 %v2221, %v2403
    %v2406 = vxor.u32 %v2405, 2147483648
    %v2407 = vmul.f32 %v2406, 1.442695
    %v2408 = vpow.pop %v2407
    %v2409 = vadd.f32 %v2408, 1.0
    %v2410 = vrcp.pop %v2409
    %v2411 = vmul.f32 1.0, %v2410
    %v2412 = vtanh.pop %v2405
    %v2414 = vrot.slane %v2320, 6
    %v2416 = vmul.f32 %v2411, %v2414
    %2418 = vrot.lane.b32.xlu0 %v2412, 108
    %v2419 = vpop.permute.xlu0 %2418
    %v2421 = vmul.f32 %v2411, %v2419
    %2423 = vrot.lane.b32.xlu0 %v2421, 10
    %v2424 = vpop.permute.xlu0 %2423
    %v2426 = vadd.f32 %v2416, %v2424
    %v2427 = vtanh.pop %v2426
    %2429 = vrot.lane.b32.xlu0 %v2427, 20
    %v2430 = vpop.permute.xlu0 %2429
    %v2432 = vmul.f32 %v2411, %v2430
    %v2434 = vrot.slane %v2432, 2
    %2435 = vrot.lane.b32.xlu0 %v2434, 98
    %v2436 = vpop.permute.xlu0 %2435
    %v2437 = vsel %vm294, %v2436, 0
    %2439 = vmatprep.subr.mxu0 0.0
    %2440 = vmatpush1.msra.mxu0 %v2135
    %2441 = vmatprep.subr.mxu0 0.0
    %2442 = vmatpush1.msra.mxu0 %v2230
    %2443 = vmatprep.subr.mxu0 0.0
    %2444 = vmatpush1.msra.mxu0 0.0
    %2445 = vmatprep.subr.mxu0 0.0
    %2446 = vmatpush1.msra.mxu0 0.0
    %2447 = vmatprep.subr.mxu0 0.0
    %2448 = vmatpush1.msra.mxu0 0.0
    %2449 = vmatprep.subr.mxu0 0.0
    %2450 = vmatpush1.msra.mxu0 0.0
    %2451 = vmatprep.subr.mxu0 0.0
    %2452 = vmatpush1.msra.mxu0 0.0
    %2453 = vmatprep.subr.mxu0 0.0
    %2454 = vmatpush1.msra.mxu0 0.0
    %2455 = vmatprep.subr.mxu0 0.0
    %2456 = vmatpush1.msra.mxu0 0.0
    %2457 = vmatprep.subr.mxu0 0.0
    %2458 = vmatpush1.msra.mxu0 0.0
    %2459 = vmatprep.subr.mxu0 0.0
    %2460 = vmatpush1.msra.mxu0 0.0
    %2461 = vmatprep.subr.mxu0 0.0
    %2462 = vmatpush1.msra.mxu0 0.0
    %2463 = vmatprep.subr.mxu0 0.0
    %2464 = vmatpush1.msra.mxu0 0.0
    %2465 = vmatprep.subr.mxu0 0.0
    %2466 = vmatpush1.msra.mxu0 0.0
    %2467 = vmatprep.subr.mxu0 0.0
    %2468 = vmatpush1.msra.mxu0 0.0
    %2469 = vmatprep.subr.mxu0 0.0
    %2470 = vmatpush1.msra.mxu0 0.0
    %2471 = vmatprep.subr.mxu0 0.0
    %2472 = vmatpush1.msra.mxu0 0.0
    %2473 = vmatprep.subr.mxu0 0.0
    %2474 = vmatpush1.msra.mxu0 0.0
    %2475 = vmatprep.subr.mxu0 0.0
    %2476 = vmatpush1.msra.mxu0 0.0
    %2477 = vmatprep.subr.mxu0 0.0
    %2478 = vmatpush1.msra.mxu0 0.0
    %2479 = vmatprep.subr.mxu0 0.0
    %2480 = vmatpush1.msra.mxu0 0.0
    %2481 = vmatprep.subr.mxu0 0.0
    %2482 = vmatpush1.msra.mxu0 0.0
    %2483 = vmatprep.subr.mxu0 0.0
    %2484 = vmatpush1.msra.mxu0 0.0
    %2485 = vmatprep.subr.mxu0 0.0
    %2486 = vmatpush1.msra.mxu0 0.0
    %2487 = vmatprep.subr.mxu0 0.0
    %2488 = vmatpush1.msra.mxu0 0.0
    %2489 = vmatprep.subr.mxu0 0.0
    %2490 = vmatpush1.msra.mxu0 0.0
    %2491 = vmatprep.subr.mxu0 0.0
    %2492 = vmatpush1.msra.mxu0 0.0
    %2493 = vmatprep.subr.mxu0 0.0
    %2494 = vmatpush1.msra.mxu0 0.0
    %2495 = vmatprep.subr.mxu0 0.0
    %2496 = vmatpush1.msra.mxu0 0.0
    %2497 = vmatprep.subr.mxu0 0.0
    %2498 = vmatpush1.msra.mxu0 0.0
    %2499 = vmatprep.subr.mxu0 0.0
    %2500 = vmatpush1.msra.mxu0 0.0
    %2501 = vmatprep.subr.mxu0 0.0
    %2502 = vmatpush1.msra.mxu0 0.0
    %2503 = vmatprep.mubr.f32.mxu0 0.0
    %2504 = vmatmul.mubr.f32.gmra.mrb[0].mxu0 %v2437
    %v2505 = vpop.f32.mrb[0].mxu0
    %v2506 = vadd.f32 0.0, %v2505
    %v2507 = vpop.f32.mrb[0].mxu0
    %2508 = vdwg.mxu0
    %v2510 = vrot.slane %v2506, 4
    %v2512 = vadd.f32 %v2221, %v2510
    %v2513 = vxor.u32 %v2512, 2147483648
    %v2514 = vmul.f32 %v2513, 1.442695
    %v2515 = vpow.pop %v2514
    %v2516 = vadd.f32 %v2515, 1.0
    %v2517 = vrcp.pop %v2516
    %v2518 = vmul.f32 1.0, %v2517
    %v2519 = vtanh.pop %v2512
    %v2521 = vrot.slane %v2426, 6
    %v2523 = vmul.f32 %v2518, %v2521
    %2525 = vrot.lane.b32.xlu0 %v2519, 108
    %v2526 = vpop.permute.xlu0 %2525
    %v2528 = vmul.f32 %v2518, %v2526
    %2530 = vrot.lane.b32.xlu0 %v2528, 10
    %v2531 = vpop.permute.xlu0 %2530
    %v2533 = vadd.f32 %v2523, %v2531
    %v2534 = vtanh.pop %v2533
    %2536 = vrot.lane.b32.xlu0 %v2534, 20
    %v2537 = vpop.permute.xlu0 %2536
    %v2539 = vmul.f32 %v2518, %v2537
    %v2541 = vrot.slane %v2539, 4
    %2542 = vrot.lane.b32.xlu0 %v2541, 98
    %v2543 = vpop.permute.xlu0 %2542
    %v2544 = vsel %vm294, %v2543, 0
    %2546 = vmatprep.subr.mxu0 0.0
    %2547 = vmatpush1.msra.mxu0 %v2135
    %2548 = vmatprep.subr.mxu0 0.0
    %2549 = vmatpush1.msra.mxu0 %v2230
    %2550 = vmatprep.subr.mxu0 0.0
    %2551 = vmatpush1.msra.mxu0 0.0
    %2552 = vmatprep.subr.mxu0 0.0
    %2553 = vmatpush1.msra.mxu0 0.0
    %2554 = vmatprep.subr.mxu0 0.0
    %2555 = vmatpush1.msra.mxu0 0.0
    %2556 = vmatprep.subr.mxu0 0.0
    %2557 = vmatpush1.msra.mxu0 0.0
    %2558 = vmatprep.subr.mxu0 0.0
    %2559 = vmatpush1.msra.mxu0 0.0
    %2560 = vmatprep.subr.mxu0 0.0
    %2561 = vmatpush1.msra.mxu0 0.0
    %2562 = vmatprep.subr.mxu0 0.0
    %2563 = vmatpush1.msra.mxu0 0.0
    %2564 = vmatprep.subr.mxu0 0.0
    %2565 = vmatpush1.msra.mxu0 0.0
    %2566 = vmatprep.subr.mxu0 0.0
    %2567 = vmatpush1.msra.mxu0 0.0
    %2568 = vmatprep.subr.mxu0 0.0
    %2569 = vmatpush1.msra.mxu0 0.0
    %2570 = vmatprep.subr.mxu0 0.0
    %2571 = vmatpush1.msra.mxu0 0.0
    %2572 = vmatprep.subr.mxu0 0.0
    %2573 = vmatpush1.msra.mxu0 0.0
    %2574 = vmatprep.subr.mxu0 0.0
    %2575 = vmatpush1.msra.mxu0 0.0
    %2576 = vmatprep.subr.mxu0 0.0
    %2577 = vmatpush1.msra.mxu0 0.0
    %2578 = vmatprep.subr.mxu0 0.0
    %2579 = vmatpush1.msra.mxu0 0.0
    %2580 = vmatprep.subr.mxu0 0.0
    %2581 = vmatpush1.msra.mxu0 0.0
    %2582 = vmatprep.subr.mxu0 0.0
    %2583 = vmatpush1.msra.mxu0 0.0
    %2584 = vmatprep.subr.mxu0 0.0
    %2585 = vmatpush1.msra.mxu0 0.0
    %2586 = vmatprep.subr.mxu0 0.0
    %2587 = vmatpush1.msra.mxu0 0.0
    %2588 = vmatprep.subr.mxu0 0.0
    %2589 = vmatpush1.msra.mxu0 0.0
    %2590 = vmatprep.subr.mxu0 0.0
    %2591 = vmatpush1.msra.mxu0 0.0
    %2592 = vmatprep.subr.mxu0 0.0
    %2593 = vmatpush1.msra.mxu0 0.0
    %2594 = vmatprep.subr.mxu0 0.0
    %2595 = vmatpush1.msra.mxu0 0.0
    %2596 = vmatprep.subr.mxu0 0.0
    %2597 = vmatpush1.msra.mxu0 0.0
    %2598 = vmatprep.subr.mxu0 0.0
    %2599 = vmatpush1.msra.mxu0 0.0
    %2600 = vmatprep.subr.mxu0 0.0
    %2601 = vmatpush1.msra.mxu0 0.0
    %2602 = vmatprep.subr.mxu0 0.0
    %2603 = vmatpush1.msra.mxu0 0.0
    %2604 = vmatprep.subr.mxu0 0.0
    %2605 = vmatpush1.msra.mxu0 0.0
    %2606 = vmatprep.subr.mxu0 0.0
    %2607 = vmatpush1.msra.mxu0 0.0
    %2608 = vmatprep.subr.mxu0 0.0
    %2609 = vmatpush1.msra.mxu0 0.0
    %2610 = vmatprep.mubr.f32.mxu0 0.0
    %2611 = vmatmul.mubr.f32.gmra.mrb[0].mxu0 %v2544
    %v2612 = vpop.f32.mrb[0].mxu0
    %v2613 = vadd.f32 0.0, %v2612
    %v2614 = vpop.f32.mrb[0].mxu0
    %2615 = vdwg.mxu0
    %v2617 = vrot.slane %v2613, 2
    %v2619 = vadd.f32 %v2221, %v2617
    %v2620 = vxor.u32 %v2619, 2147483648
    %v2621 = vmul.f32 %v2620, 1.442695
    %v2622 = vpow.pop %v2621
    %v2623 = vadd.f32 %v2622, 1.0
    %v2624 = vrcp.pop %v2623
    %v2625 = vmul.f32 1.0, %v2624
    %v2626 = vtanh.pop %v2619
    %v2628 = vrot.slane %v2533, 6
    %v2630 = vmul.f32 %v2625, %v2628
    %2632 = vrot.lane.b32.xlu0 %v2626, 108
    %v2633 = vpop.permute.xlu0 %2632
    %v2635 = vmul.f32 %v2625, %v2633
    %2637 = vrot.lane.b32.xlu0 %v2635, 10
    %v2638 = vpop.permute.xlu0 %2637
    %v2640 = vadd.f32 %v2630, %v2638
    %v2641 = vtanh.pop %v2640
    %2643 = vrot.lane.b32.xlu0 %v2641, 20
    %v2644 = vpop.permute.xlu0 %2643
    %v2646 = vmul.f32 %v2625, %v2644
    %v2648 = vrot.slane %v2646, 6
    %2649 = vrot.lane.b32.xlu0 %v2648, 98
    %v2650 = vpop.permute.xlu0 %2649
    %v2651 = vsel %vm294, %v2650, 0
    %2653 = vmatprep.subr.mxu0 0.0
    %2654 = vmatpush1.msra.mxu0 %v2135
    %2655 = vmatprep.subr.mxu0 0.0
    %2656 = vmatpush1.msra.mxu0 %v2230
    %2657 = vmatprep.subr.mxu0 0.0
    %2658 = vmatpush1.msra.mxu0 0.0
    %2659 = vmatprep.subr.mxu0 0.0
    %2660 = vmatpush1.msra.mxu0 0.0
    %2661 = vmatprep.subr.mxu0 0.0
    %2662 = vmatpush1.msra.mxu0 0.0
    %2663 = vmatprep.subr.mxu0 0.0
    %2664 = vmatpush1.msra.mxu0 0.0
    %2665 = vmatprep.subr.mxu0 0.0
    %2666 = vmatpush1.msra.mxu0 0.0
    %2667 = vmatprep.subr.mxu0 0.0
    %2668 = vmatpush1.msra.mxu0 0.0
    %2669 = vmatprep.subr.mxu0 0.0
    %2670 = vmatpush1.msra.mxu0 0.0
    %2671 = vmatprep.subr.mxu0 0.0
    %2672 = vmatpush1.msra.mxu0 0.0
    %2673 = vmatprep.subr.mxu0 0.0
    %2674 = vmatpush1.msra.mxu0 0.0
    %2675 = vmatprep.subr.mxu0 0.0
    %2676 = vmatpush1.msra.mxu0 0.0
    %2677 = vmatprep.subr.mxu0 0.0
    %2678 = vmatpush1.msra.mxu0 0.0
    %2679 = vmatprep.subr.mxu0 0.0
    %2680 = vmatpush1.msra.mxu0 0.0
    %2681 = vmatprep.subr.mxu0 0.0
    %2682 = vmatpush1.msra.mxu0 0.0
    %2683 = vmatprep.subr.mxu0 0.0
    %2684 = vmatpush1.msra.mxu0 0.0
    %2685 = vmatprep.subr.mxu0 0.0
    %2686 = vmatpush1.msra.mxu0 0.0
    %2687 = vmatprep.subr.mxu0 0.0
    %2688 = vmatpush1.msra.mxu0 0.0
    %2689 = vmatprep.subr.mxu0 0.0
    %2690 = vmatpush1.msra.mxu0 0.0
    %2691 = vmatprep.subr.mxu0 0.0
    %2692 = vmatpush1.msra.mxu0 0.0
    %2693 = vmatprep.subr.mxu0 0.0
    %2694 = vmatpush1.msra.mxu0 0.0
    %2695 = vmatprep.subr.mxu0 0.0
    %2696 = vmatpush1.msra.mxu0 0.0
    %2697 = vmatprep.subr.mxu0 0.0
    %2698 = vmatpush1.msra.mxu0 0.0
    %2699 = vmatprep.subr.mxu0 0.0
    %2700 = vmatpush1.msra.mxu0 0.0
    %2701 = vmatprep.subr.mxu0 0.0
    %2702 = vmatpush1.msra.mxu0 0.0
    %2703 = vmatprep.subr.mxu0 0.0
    %2704 = vmatpush1.msra.mxu0 0.0
    %2705 = vmatprep.subr.mxu0 0.0
    %2706 = vmatpush1.msra.mxu0 0.0
    %2707 = vmatprep.subr.mxu0 0.0
    %2708 = vmatpush1.msra.mxu0 0.0
    %2709 = vmatprep.subr.mxu0 0.0
    %2710 = vmatpush1.msra.mxu0 0.0
    %2711 = vmatprep.subr.mxu0 0.0
    %2712 = vmatpush1.msra.mxu0 0.0
    %2713 = vmatprep.subr.mxu0 0.0
    %2714 = vmatpush1.msra.mxu0 0.0
    %2715 = vmatprep.subr.mxu0 0.0
    %2716 = vmatpush1.msra.mxu0 0.0
    %2717 = vmatprep.mubr.f32.mxu0 0.0
    %2718 = vmatmul.mubr.f32.gmra.mrb[0].mxu0 %v2651
    %v2719 = vpop.f32.mrb[0].mxu0
    %v2720 = vadd.f32 0.0, %v2719
    %v2721 = vpop.f32.mrb[0].mxu0
    %2722 = vdwg.mxu0
    %v2723 = vadd.f32 %v2226, %v2720
    %v2724 = vxor.u32 %v2723, 2147483648
    %v2725 = vmul.f32 %v2724, 1.442695
    %v2726 = vpow.pop %v2725
    %v2727 = vadd.f32 %v2726, 1.0
    %v2728 = vrcp.pop %v2727
    %v2729 = vmul.f32 1.0, %v2728
    %v2730 = vtanh.pop %v2723
    %v2732 = vrot.slane %v2640, 6
    %v2734 = vmul.f32 %v2729, %v2732
    %2736 = vrot.lane.b32.xlu0 %v2730, 108
    %v2737 = vpop.permute.xlu0 %2736
    %v2739 = vmul.f32 %v2729, %v2737
    %2741 = vrot.lane.b32.xlu0 %v2739, 10
    %v2742 = vpop.permute.xlu0 %2741
    %v2744 = vadd.f32 %v2734, %v2742
    %v2745 = vtanh.pop %v2744
    %2747 = vrot.lane.b32.xlu0 %v2745, 20
    %v2748 = vpop.permute.xlu0 %2747
    %v2750 = vmul.f32 %v2729, %v2748
    %2752 = vrot.lane.b32.xlu0 %v2750, 98
    %v2753 = vpop.permute.xlu0 %2752
    %v2754 = vsel %vm294, %v2753, 0
    %2756 = vmatprep.subr.mxu0 0.0
    %2757 = vmatpush1.msra.mxu0 %v2135
    %2758 = vmatprep.subr.mxu0 0.0
    %2759 = vmatpush1.msra.mxu0 %v2230
    %2760 = vmatprep.subr.mxu0 0.0
    %2761 = vmatpush1.msra.mxu0 0.0
    %2762 = vmatprep.subr.mxu0 0.0
    %2763 = vmatpush1.msra.mxu0 0.0
    %2764 = vmatprep.subr.mxu0 0.0
    %2765 = vmatpush1.msra.mxu0 0.0
    %2766 = vmatprep.subr.mxu0 0.0
    %2767 = vmatpush1.msra.mxu0 0.0
    %2768 = vmatprep.subr.mxu0 0.0
    %2769 = vmatpush1.msra.mxu0 0.0
    %2770 = vmatprep.subr.mxu0 0.0
    %2771 = vmatpush1.msra.mxu0 0.0
    %2772 = vmatprep.subr.mxu0 0.0
    %2773 = vmatpush1.msra.mxu0 0.0
    %2774 = vmatprep.subr.mxu0 0.0
    %2775 = vmatpush1.msra.mxu0 0.0
    %2776 = vmatprep.subr.mxu0 0.0
    %2777 = vmatpush1.msra.mxu0 0.0
    %2778 = vmatprep.subr.mxu0 0.0
    %2779 = vmatpush1.msra.mxu0 0.0
    %2780 = vmatprep.subr.mxu0 0.0
    %2781 = vmatpush1.msra.mxu0 0.0
    %2782 = vmatprep.subr.mxu0 0.0
    %2783 = vmatpush1.msra.mxu0 0.0
    %2784 = vmatprep.subr.mxu0 0.0
    %2785 = vmatpush1.msra.mxu0 0.0
    %2786 = vmatprep.subr.mxu0 0.0
    %2787 = vmatpush1.msra.mxu0 0.0
    %2788 = vmatprep.subr.mxu0 0.0
    %2789 = vmatpush1.msra.mxu0 0.0
    %2790 = vmatprep.subr.mxu0 0.0
    %2791 = vmatpush1.msra.mxu0 0.0
    %2792 = vmatprep.subr.mxu0 0.0
    %2793 = vmatpush1.msra.mxu0 0.0
    %2794 = vmatprep.subr.mxu0 0.0
    %2795 = vmatpush1.msra.mxu0 0.0
    %2796 = vmatprep.subr.mxu0 0.0
    %2797 = vmatpush1.msra.mxu0 0.0
    %2798 = vmatprep.subr.mxu0 0.0
    %2799 = vmatpush1.msra.mxu0 0.0
    %2800 = vmatprep.subr.mxu0 0.0
    %2801 = vmatpush1.msra.mxu0 0.0
    %2802 = vmatprep.subr.mxu0 0.0
    %2803 = vmatpush1.msra.mxu0 0.0
    %2804 = vmatprep.subr.mxu0 0.0
    %2805 = vmatpush1.msra.mxu0 0.0
    %2806 = vmatprep.subr.mxu0 0.0
    %2807 = vmatpush1.msra.mxu0 0.0
    %2808 = vmatprep.subr.mxu0 0.0
    %2809 = vmatpush1.msra.mxu0 0.0
    %2810 = vmatprep.subr.mxu0 0.0
    %2811 = vmatpush1.msra.mxu0 0.0
    %2812 = vmatprep.subr.mxu0 0.0
    %2813 = vmatpush1.msra.mxu0 0.0
    %2814 = vmatprep.subr.mxu0 0.0
    %2815 = vmatpush1.msra.mxu0 0.0
    %2816 = vmatprep.subr.mxu0 0.0
    %2817 = vmatpush1.msra.mxu0 0.0
    %2818 = vmatprep.subr.mxu0 0.0
    %2819 = vmatpush1.msra.mxu0 0.0
    %2820 = vmatprep.mubr.f32.mxu0 0.0
    %2821 = vmatmul.mubr.f32.gmra.mrb[0].mxu0 %v2754
    %v2822 = vpop.f32.mrb[0].mxu0
    %v2823 = vadd.f32 0.0, %v2822
    %v2824 = vpop.f32.mrb[0].mxu0
    %2825 = vdwg.mxu0
    %v2827 = vrot.slane %v2823, 6
    %v2829 = vadd.f32 %v2226, %v2827
    %v2830 = vxor.u32 %v2829, 2147483648
    %v2831 = vmul.f32 %v2830, 1.442695
    %v2832 = vpow.pop %v2831
    %v2833 = vadd.f32 %v2832, 1.0
    %v2834 = vrcp.pop %v2833
    %v2835 = vmul.f32 1.0, %v2834
    %v2836 = vtanh.pop %v2829
    %v2838 = vrot.slane %v2744, 6
    %v2840 = vmul.f32 %v2835, %v2838
    %2842 = vrot.lane.b32.xlu0 %v2836, 108
    %v2843 = vpop.permute.xlu0 %2842
    %v2845 = vmul.f32 %v2835, %v2843
    %2847 = vrot.lane.b32.xlu0 %v2845, 10
    %v2848 = vpop.permute.xlu0 %2847
    %v2850 = vadd.f32 %v2840, %v2848
    %v2851 = vtanh.pop %v2850
    %2853 = vrot.lane.b32.xlu0 %v2851, 20
    %v2854 = vpop.permute.xlu0 %2853
    %v2856 = vmul.f32 %v2835, %v2854
    %v2858 = vrot.slane %v2856, 2
    %2859 = vrot.lane.b32.xlu0 %v2858, 98
    %v2860 = vpop.permute.xlu0 %2859
    %v2861 = vsel %vm294, %v2860, 0
    %2863 = vmatprep.subr.mxu0 0.0
    %2864 = vmatpush1.msra.mxu0 %v2135
    %2865 = vmatprep.subr.mxu0 0.0
    %2866 = vmatpush1.msra.mxu0 %v2230
    %2867 = vmatprep.subr.mxu0 0.0
    %2868 = vmatpush1.msra.mxu0 0.0
    %2869 = vmatprep.subr.mxu0 0.0
    %2870 = vmatpush1.msra.mxu0 0.0
    %2871 = vmatprep.subr.mxu0 0.0
    %2872 = vmatpush1.msra.mxu0 0.0
    %2873 = vmatprep.subr.mxu0 0.0
    %2874 = vmatpush1.msra.mxu0 0.0
    %2875 = vmatprep.subr.mxu0 0.0
    %2876 = vmatpush1.msra.mxu0 0.0
    %2877 = vmatprep.subr.mxu0 0.0
    %2878 = vmatpush1.msra.mxu0 0.0
    %2879 = vmatprep.subr.mxu0 0.0
    %2880 = vmatpush1.msra.mxu0 0.0
    %2881 = vmatprep.subr.mxu0 0.0
    %2882 = vmatpush1.msra.mxu0 0.0
    %2883 = vmatprep.subr.mxu0 0.0
    %2884 = vmatpush1.msra.mxu0 0.0
    %2885 = vmatprep.subr.mxu0 0.0
    %2886 = vmatpush1.msra.mxu0 0.0
    %2887 = vmatprep.subr.mxu0 0.0
    %2888 = vmatpush1.msra.mxu0 0.0
    %2889 = vmatprep.subr.mxu0 0.0
    %2890 = vmatpush1.msra.mxu0 0.0
    %2891 = vmatprep.subr.mxu0 0.0
    %2892 = vmatpush1.msra.mxu0 0.0
    %2893 = vmatprep.subr.mxu0 0.0
    %2894 = vmatpush1.msra.mxu0 0.0
    %2895 = vmatprep.subr.mxu0 0.0
    %2896 = vmatpush1.msra.mxu0 0.0
    %2897 = vmatprep.subr.mxu0 0.0
    %2898 = vmatpush1.msra.mxu0 0.0
    %2899 = vmatprep.subr.mxu0 0.0
    %2900 = vmatpush1.msra.mxu0 0.0
    %2901 = vmatprep.subr.mxu0 0.0
    %2902 = vmatpush1.msra.mxu0 0.0
    %2903 = vmatprep.subr.mxu0 0.0
    %2904 = vmatpush1.msra.mxu0 0.0
    %2905 = vmatprep.subr.mxu0 0.0
    %2906 = vmatpush1.msra.mxu0 0.0
    %2907 = vmatprep.subr.mxu0 0.0
    %2908 = vmatpush1.msra.mxu0 0.0
    %2909 = vmatprep.subr.mxu0 0.0
    %2910 = vmatpush1.msra.mxu0 0.0
    %2911 = vmatprep.subr.mxu0 0.0
    %2912 = vmatpush1.msra.mxu0 0.0
    %2913 = vmatprep.subr.mxu0 0.0
    %2914 = vmatpush1.msra.mxu0 0.0
    %2915 = vmatprep.subr.mxu0 0.0
    %2916 = vmatpush1.msra.mxu0 0.0
    %2917 = vmatprep.subr.mxu0 0.0
    %2918 = vmatpush1.msra.mxu0 0.0
    %2919 = vmatprep.subr.mxu0 0.0
    %2920 = vmatpush1.msra.mxu0 0.0
    %2921 = vmatprep.subr.mxu0 0.0
    %2922 = vmatpush1.msra.mxu0 0.0
    %2923 = vmatprep.subr.mxu0 0.0
    %2924 = vmatpush1.msra.mxu0 0.0
    %2925 = vmatprep.subr.mxu0 0.0
    %2926 = vmatpush1.msra.mxu0 0.0
    %2927 = vmatprep.mubr.f32.mxu0 0.0
    %2928 = vmatmul.mubr.f32.gmra.mrb[0].mxu0 %v2861
    %v2929 = vpop.f32.mrb[0].mxu0
    %v2930 = vadd.f32 0.0, %v2929
    %v2931 = vpop.f32.mrb[0].mxu0
    %2932 = vdwg.mxu0
    %v2934 = vrot.slane %v2930, 4
    %v2936 = vadd.f32 %v2226, %v2934
    %v2937 = vxor.u32 %v2936, 2147483648
    %v2938 = vmul.f32 %v2937, 1.442695
    %v2939 = vpow.pop %v2938
    %v2940 = vadd.f32 %v2939, 1.0
    %v2941 = vrcp.pop %v2940
    %v2942 = vmul.f32 1.0, %v2941
    %v2943 = vtanh.pop %v2936
    %v2945 = vrot.slane %v2850, 6
    %v2947 = vmul.f32 %v2942, %v2945
    %2949 = vrot.lane.b32.xlu0 %v2943, 108
    %v2950 = vpop.permute.xlu0 %2949
    %v2952 = vmul.f32 %v2942, %v2950
    %2954 = vrot.lane.b32.xlu0 %v2952, 10
    %v2955 = vpop.permute.xlu0 %2954
    %v2957 = vadd.f32 %v2947, %v2955
    %v2958 = vtanh.pop %v2957
    %2960 = vrot.lane.b32.xlu0 %v2958, 20
    %v2961 = vpop.permute.xlu0 %2960
    %v2963 = vmul.f32 %v2942, %v2961
    %v2965 = vrot.slane %v2963, 4
    %2966 = vrot.lane.b32.xlu0 %v2965, 98
    %v2967 = vpop.permute.xlu0 %2966
    %v2968 = vsel %vm294, %v2967, 0
    %2970 = vmatprep.subr.mxu0 0.0
    %2971 = vmatpush1.msra.mxu0 %v2135
    %2972 = vmatprep.subr.mxu0 0.0
    %2973 = vmatpush1.msra.mxu0 %v2230
    %2974 = vmatprep.subr.mxu0 0.0
    %2975 = vmatpush1.msra.mxu0 0.0
    %2976 = vmatprep.subr.mxu0 0.0
    %2977 = vmatpush1.msra.mxu0 0.0
    %2978 = vmatprep.subr.mxu0 0.0
    %2979 = vmatpush1.msra.mxu0 0.0
    %2980 = vmatprep.subr.mxu0 0.0
    %2981 = vmatpush1.msra.mxu0 0.0
    %2982 = vmatprep.subr.mxu0 0.0
    %2983 = vmatpush1.msra.mxu0 0.0
    %2984 = vmatprep.subr.mxu0 0.0
    %2985 = vmatpush1.msra.mxu0 0.0
    %2986 = vmatprep.subr.mxu0 0.0
    %2987 = vmatpush1.msra.mxu0 0.0
    %2988 = vmatprep.subr.mxu0 0.0
    %2989 = vmatpush1.msra.mxu0 0.0
    %2990 = vmatprep.subr.mxu0 0.0
    %2991 = vmatpush1.msra.mxu0 0.0
    %2992 = vmatprep.subr.mxu0 0.0
    %2993 = vmatpush1.msra.mxu0 0.0
    %2994 = vmatprep.subr.mxu0 0.0
    %2995 = vmatpush1.msra.mxu0 0.0
    %2996 = vmatprep.subr.mxu0 0.0
    %2997 = vmatpush1.msra.mxu0 0.0
    %2998 = vmatprep.subr.mxu0 0.0
    %2999 = vmatpush1.msra.mxu0 0.0
    %3000 = vmatprep.subr.mxu0 0.0
    %3001 = vmatpush1.msra.mxu0 0.0
    %3002 = vmatprep.subr.mxu0 0.0
    %3003 = vmatpush1.msra.mxu0 0.0
    %3004 = vmatprep.subr.mxu0 0.0
    %3005 = vmatpush1.msra.mxu0 0.0
    %3006 = vmatprep.subr.mxu0 0.0
    %3007 = vmatpush1.msra.mxu0 0.0
    %3008 = vmatprep.subr.mxu0 0.0
    %3009 = vmatpush1.msra.mxu0 0.0
    %3010 = vmatprep.subr.mxu0 0.0
    %3011 = vmatpush1.msra.mxu0 0.0
    %3012 = vmatprep.subr.mxu0 0.0
    %3013 = vmatpush1.msra.mxu0 0.0
    %3014 = vmatprep.subr.mxu0 0.0
    %3015 = vmatpush1.msra.mxu0 0.0
    %3016 = vmatprep.subr.mxu0 0.0
    %3017 = vmatpush1.msra.mxu0 0.0
    %3018 = vmatprep.subr.mxu0 0.0
    %3019 = vmatpush1.msra.mxu0 0.0
    %3020 = vmatprep.subr.mxu0 0.0
    %3021 = vmatpush1.msra.mxu0 0.0
    %3022 = vmatprep.subr.mxu0 0.0
    %3023 = vmatpush1.msra.mxu0 0.0
    %3024 = vmatprep.subr.mxu0 0.0
    %3025 = vmatpush1.msra.mxu0 0.0
    %3026 = vmatprep.subr.mxu0 0.0
    %3027 = vmatpush1.msra.mxu0 0.0
    %3028 = vmatprep.subr.mxu0 0.0
    %3029 = vmatpush1.msra.mxu0 0.0
    %3030 = vmatprep.subr.mxu0 0.0
    %3031 = vmatpush1.msra.mxu0 0.0
    %3032 = vmatprep.subr.mxu0 0.0
    %3033 = vmatpush1.msra.mxu0 0.0
    %3034 = vmatprep.mubr.f32.mxu0 0.0
    %3035 = vmatmul.mubr.f32.gmra.mrb[0].mxu0 %v2968
    %v3036 = vpop.f32.mrb[0].mxu0
    %v3037 = vadd.f32 0.0, %v3036
    %v3038 = vpop.f32.mrb[0].mxu0
    %3039 = vdwg.mxu0
    %v3041 = vrot.slane %v3037, 2
    %v3043 = vadd.f32 %v2226, %v3041
    %v3044 = vxor.u32 %v3043, 2147483648
    %v3045 = vmul.f32 %v3044, 1.442695
    %v3046 = vpow.pop %v3045
    %v3047 = vadd.f32 %v3046, 1.0
    %v3048 = vrcp.pop %v3047
    %v3049 = vmul.f32 1.0, %v3048
    %v3050 = vtanh.pop %v3043
    %v3052 = vrot.slane %v2957, 6
    %v3054 = vmul.f32 %v3049, %v3052
    %3056 = vrot.lane.b32.xlu0 %v3050, 108
    %v3057 = vpop.permute.xlu0 %3056
    %v3059 = vmul.f32 %v3049, %v3057
    %3061 = vrot.lane.b32.xlu0 %v3059, 10
    %v3062 = vpop.permute.xlu0 %3061
    %v3064 = vadd.f32 %v3054, %v3062
    %v3065 = vtanh.pop %v3064
    %3067 = vrot.lane.b32.xlu0 %v3065, 20
    %v3068 = vpop.permute.xlu0 %3067
    %v3070 = vmul.f32 %v3049, %v3068
    %v3071 = vld [vmem:[%s11] sm:$0xff]
    %v3072 = vld [vmem:[%s11 + $0x8] sm:$0xff]
    %v3073 = vld [vmem:[%s11 + $0x10] sm:$0xf]
    %v3074 = vld [vmem:[#allocation17] sm:$0xff]
    %v3075 = vld [vmem:[#allocation17 + $0x8] sm:$0x3]
    %v3076 = vld [vmem:[%s13] sm:$0x1]
    %v3078 = vlaneseq
    %v3079 = vshrl.u32 %v3078, 7
    %v3080 = vsub.s32 0, %v3079
    %v3081 = vrot.slane %v3076, %v3080
    %v3084 = vsel %vm2125, %v3073, 0
    %3086 = vmatprep.subr.mxu0 0.0
    %3087 = vmatpush1.msra.mxu0 %v3071
    %3088 = vmatprep.subr.mxu0 0.0
    %3089 = vmatpush1.msra.mxu0 %v3072
    %3090 = vmatprep.subr.mxu0 0.0
    %3091 = vmatpush1.msra.mxu0 %v3084
    %3092 = vmatprep.subr.mxu0 0.0
    %3093 = vmatpush1.msra.mxu0 0.0
    %3094 = vmatprep.subr.mxu0 0.0
    %3095 = vmatpush1.msra.mxu0 0.0
    %3096 = vmatprep.subr.mxu0 0.0
    %3097 = vmatpush1.msra.mxu0 0.0
    %3098 = vmatprep.subr.mxu0 0.0
    %3099 = vmatpush1.msra.mxu0 0.0
    %3100 = vmatprep.subr.mxu0 0.0
    %3101 = vmatpush1.msra.mxu0 0.0
    %3102 = vmatprep.subr.mxu0 0.0
    %3103 = vmatpush1.msra.mxu0 0.0
    %3104 = vmatprep.subr.mxu0 0.0
    %3105 = vmatpush1.msra.mxu0 0.0
    %3106 = vmatprep.subr.mxu0 0.0
    %3107 = vmatpush1.msra.mxu0 0.0
    %3108 = vmatprep.subr.mxu0 0.0
    %3109 = vmatpush1.msra.mxu0 0.0
    %3110 = vmatprep.subr.mxu0 0.0
    %3111 = vmatpush1.msra.mxu0 0.0
    %3112 = vmatprep.subr.mxu0 0.0
    %3113 = vmatpush1.msra.mxu0 0.0
    %3114 = vmatprep.subr.mxu0 0.0
    %3115 = vmatpush1.msra.mxu0 0.0
    %3116 = vmatprep.subr.mxu0 0.0
    %3117 = vmatpush1.msra.mxu0 0.0
    %3118 = vmatprep.subr.mxu0 0.0
    %3119 = vmatpush1.msra.mxu0 0.0
    %3120 = vmatprep.subr.mxu0 0.0
    %3121 = vmatpush1.msra.mxu0 0.0
    %3122 = vmatprep.subr.mxu0 0.0
    %3123 = vmatpush1.msra.mxu0 0.0
    %3124 = vmatprep.subr.mxu0 0.0
    %3125 = vmatpush1.msra.mxu0 0.0
    %3126 = vmatprep.subr.mxu0 0.0
    %3127 = vmatpush1.msra.mxu0 0.0
    %3128 = vmatprep.subr.mxu0 0.0
    %3129 = vmatpush1.msra.mxu0 0.0
    %3130 = vmatprep.subr.mxu0 0.0
    %3131 = vmatpush1.msra.mxu0 0.0
    %3132 = vmatprep.subr.mxu0 0.0
    %3133 = vmatpush1.msra.mxu0 0.0
    %3134 = vmatprep.subr.mxu0 0.0
    %3135 = vmatpush1.msra.mxu0 0.0
    %3136 = vmatprep.subr.mxu0 0.0
    %3137 = vmatpush1.msra.mxu0 0.0
    %3138 = vmatprep.subr.mxu0 0.0
    %3139 = vmatpush1.msra.mxu0 0.0
    %3140 = vmatprep.subr.mxu0 0.0
    %3141 = vmatpush1.msra.mxu0 0.0
    %3142 = vmatprep.subr.mxu0 0.0
    %3143 = vmatpush1.msra.mxu0 0.0
    %3144 = vmatprep.subr.mxu0 0.0
    %3145 = vmatpush1.msra.mxu0 0.0
    %3146 = vmatprep.subr.mxu0 0.0
    %3147 = vmatpush1.msra.mxu0 0.0
    %3148 = vmatprep.subr.mxu0 0.0
    %3149 = vmatpush1.msra.mxu0 0.0
    %3150 = vmatprep.mubr.f32.mxu0 0.0
    %3151 = vmatmul.mubr.f32.gmra.mrb[0].mxu0 %v2146
    %v3152 = vpop.f32.mrb[0].mxu0
    %v3153 = vadd.f32 %v3081, %v3152
    %v3154 = vpop.f32.mrb[0].mxu0
    %3155 = vmatprep.mubr.f32.mxu0 0.0
    %3156 = vmatmul.mubr.f32.gmra.mrb[0].mxu0 %v2149
    %v3157 = vpop.f32.mrb[0].mxu0
    %v3158 = vadd.f32 %v3081, %v3157
    %v3159 = vpop.f32.mrb[0].mxu0
    %3160 = vdwg.mxu0
    %v3162 = vsel %vm298, %v3075, 0
    %3164 = vmatprep.subr.mxu0 0.0
    %3165 = vmatpush1.msra.mxu0 %v3074
    %3166 = vmatprep.subr.mxu0 0.0
    %3167 = vmatpush1.msra.mxu0 %v3162
    %3168 = vmatprep.subr.mxu0 0.0
    %3169 = vmatpush1.msra.mxu0 0.0
    %3170 = vmatprep.subr.mxu0 0.0
    %3171 = vmatpush1.msra.mxu0 0.0
    %3172 = vmatprep.subr.mxu0 0.0
    %3173 = vmatpush1.msra.mxu0 0.0
    %3174 = vmatprep.subr.mxu0 0.0
    %3175 = vmatpush1.msra.mxu0 0.0
    %3176 = vmatprep.subr.mxu0 0.0
    %3177 = vmatpush1.msra.mxu0 0.0
    %3178 = vmatprep.subr.mxu0 0.0
    %3179 = vmatpush1.msra.mxu0 0.0
    %3180 = vmatprep.subr.mxu0 0.0
    %3181 = vmatpush1.msra.mxu0 0.0
    %3182 = vmatprep.subr.mxu0 0.0
    %3183 = vmatpush1.msra.mxu0 0.0
    %3184 = vmatprep.subr.mxu0 0.0
    %3185 = vmatpush1.msra.mxu0 0.0
    %3186 = vmatprep.subr.mxu0 0.0
    %3187 = vmatpush1.msra.mxu0 0.0
    %3188 = vmatprep.subr.mxu0 0.0
    %3189 = vmatpush1.msra.mxu0 0.0
    %3190 = vmatprep.subr.mxu0 0.0
    %3191 = vmatpush1.msra.mxu0 0.0
    %3192 = vmatprep.subr.mxu0 0.0
    %3193 = vmatpush1.msra.mxu0 0.0
    %3194 = vmatprep.subr.mxu0 0.0
    %3195 = vmatpush1.msra.mxu0 0.0
    %3196 = vmatprep.subr.mxu0 0.0
    %3197 = vmatpush1.msra.mxu0 0.0
    %3198 = vmatprep.subr.mxu0 0.0
    %3199 = vmatpush1.msra.mxu0 0.0
    %3200 = vmatprep.subr.mxu0 0.0
    %3201 = vmatpush1.msra.mxu0 0.0
    %3202 = vmatprep.subr.mxu0 0.0
    %3203 = vmatpush1.msra.mxu0 0.0
    %3204 = vmatprep.subr.mxu0 0.0
    %3205 = vmatpush1.msra.mxu0 0.0
    %3206 = vmatprep.subr.mxu0 0.0
    %3207 = vmatpush1.msra.mxu0 0.0
    %3208 = vmatprep.subr.mxu0 0.0
    %3209 = vmatpush1.msra.mxu0 0.0
    %3210 = vmatprep.subr.mxu0 0.0
    %3211 = vmatpush1.msra.mxu0 0.0
    %3212 = vmatprep.subr.mxu0 0.0
    %3213 = vmatpush1.msra.mxu0 0.0
    %3214 = vmatprep.subr.mxu0 0.0
    %3215 = vmatpush1.msra.mxu0 0.0
    %3216 = vmatprep.subr.mxu0 0.0
    %3217 = vmatpush1.msra.mxu0 0.0
    %3218 = vmatprep.subr.mxu0 0.0
    %3219 = vmatpush1.msra.mxu0 0.0
    %3220 = vmatprep.subr.mxu0 0.0
    %3221 = vmatpush1.msra.mxu0 0.0
    %3222 = vmatprep.subr.mxu0 0.0
    %3223 = vmatpush1.msra.mxu0 0.0
    %3224 = vmatprep.subr.mxu0 0.0
    %3225 = vmatpush1.msra.mxu0 0.0
    %3226 = vmatprep.subr.mxu0 0.0
    %3227 = vmatpush1.msra.mxu0 0.0
    %3228 = vmatprep.mubr.f32.mxu0 0.0
    %3229 = vmatmul.mubr.f32.gmra.mrb[0].mxu0 %v296
    %v3230 = vpop.f32.mrb[0].mxu0
    %v3231 = vadd.f32 0.0, %v3230
    %v3232 = vpop.f32.mrb[0].mxu0
    %3233 = vdwg.mxu0
    %v3235 = vrot.slane %v3231, 2
    %v3237 = vadd.f32 %v3158, %v3235
    %v3238 = vxor.u32 %v3237, 2147483648
    %v3239 = vmul.f32 %v3238, 1.442695
    %v3240 = vpow.pop %v3239
    %v3241 = vadd.f32 %v3240, 1.0
    %v3242 = vrcp.pop %v3241
    %v3243 = vmul.f32 1.0, %v3242
    %v3244 = vtanh.pop %v3237
    %v3245 = vmul.f32 %v3243, 0.0
    %3247 = vrot.lane.b32.xlu0 %v3244, 108
    %v3248 = vpop.permute.xlu0 %3247
    %v3250 = vmul.f32 %v3243, %v3248
    %3252 = vrot.lane.b32.xlu0 %v3250, 10
    %v3253 = vpop.permute.xlu0 %3252
    %v3255 = vadd.f32 %v3245, %v3253
    %v3256 = vtanh.pop %v3255
    %3258 = vrot.lane.b32.xlu0 %v3256, 20
    %v3259 = vpop.permute.xlu0 %3258
    %v3261 = vmul.f32 %v3243, %v3259
    %v3263 = vrot.slane %v3261, 6
    %3264 = vrot.lane.b32.xlu0 %v3263, 98
    %v3265 = vpop.permute.xlu0 %3264
    %v3266 = vsel %vm294, %v3265, 0
    %3268 = vmatprep.subr.mxu0 0.0
    %3269 = vmatpush1.msra.mxu0 %v3074
    %3270 = vmatprep.subr.mxu0 0.0
    %3271 = vmatpush1.msra.mxu0 %v3162
    %3272 = vmatprep.subr.mxu0 0.0
    %3273 = vmatpush1.msra.mxu0 0.0
    %3274 = vmatprep.subr.mxu0 0.0
    %3275 = vmatpush1.msra.mxu0 0.0
    %3276 = vmatprep.subr.mxu0 0.0
    %3277 = vmatpush1.msra.mxu0 0.0
    %3278 = vmatprep.subr.mxu0 0.0
    %3279 = vmatpush1.msra.mxu0 0.0
    %3280 = vmatprep.subr.mxu0 0.0
    %3281 = vmatpush1.msra.mxu0 0.0
    %3282 = vmatprep.subr.mxu0 0.0
    %3283 = vmatpush1.msra.mxu0 0.0
    %3284 = vmatprep.subr.mxu0 0.0
    %3285 = vmatpush1.msra.mxu0 0.0
    %3286 = vmatprep.subr.mxu0 0.0
    %3287 = vmatpush1.msra.mxu0 0.0
    %3288 = vmatprep.subr.mxu0 0.0
    %3289 = vmatpush1.msra.mxu0 0.0
    %3290 = vmatprep.subr.mxu0 0.0
    %3291 = vmatpush1.msra.mxu0 0.0
    %3292 = vmatprep.subr.mxu0 0.0
    %3293 = vmatpush1.msra.mxu0 0.0
    %3294 = vmatprep.subr.mxu0 0.0
    %3295 = vmatpush1.msra.mxu0 0.0
    %3296 = vmatprep.subr.mxu0 0.0
    %3297 = vmatpush1.msra.mxu0 0.0
    %3298 = vmatprep.subr.mxu0 0.0
    %3299 = vmatpush1.msra.mxu0 0.0
    %3300 = vmatprep.subr.mxu0 0.0
    %3301 = vmatpush1.msra.mxu0 0.0
    %3302 = vmatprep.subr.mxu0 0.0
    %3303 = vmatpush1.msra.mxu0 0.0
    %3304 = vmatprep.subr.mxu0 0.0
    %3305 = vmatpush1.msra.mxu0 0.0
    %3306 = vmatprep.subr.mxu0 0.0
    %3307 = vmatpush1.msra.mxu0 0.0
    %3308 = vmatprep.subr.mxu0 0.0
    %3309 = vmatpush1.msra.mxu0 0.0
    %3310 = vmatprep.subr.mxu0 0.0
    %3311 = vmatpush1.msra.mxu0 0.0
    %3312 = vmatprep.subr.mxu0 0.0
    %3313 = vmatpush1.msra.mxu0 0.0
    %3314 = vmatprep.subr.mxu0 0.0
    %3315 = vmatpush1.msra.mxu0 0.0
    %3316 = vmatprep.subr.mxu0 0.0
    %3317 = vmatpush1.msra.mxu0 0.0
    %3318 = vmatprep.subr.mxu0 0.0
    %3319 = vmatpush1.msra.mxu0 0.0
    %3320 = vmatprep.subr.mxu0 0.0
    %3321 = vmatpush1.msra.mxu0 0.0
    %3322 = vmatprep.subr.mxu0 0.0
    %3323 = vmatpush1.msra.mxu0 0.0
    %3324 = vmatprep.subr.mxu0 0.0
    %3325 = vmatpush1.msra.mxu0 0.0
    %3326 = vmatprep.subr.mxu0 0.0
    %3327 = vmatpush1.msra.mxu0 0.0
    %3328 = vmatprep.subr.mxu0 0.0
    %3329 = vmatpush1.msra.mxu0 0.0
    %3330 = vmatprep.subr.mxu0 0.0
    %3331 = vmatpush1.msra.mxu0 0.0
    %3332 = vmatprep.mubr.f32.mxu0 0.0
    %3333 = vmatmul.mubr.f32.gmra.mrb[0].mxu0 %v3266
    %v3334 = vpop.f32.mrb[0].mxu0
    %v3335 = vadd.f32 0.0, %v3334
    %v3336 = vpop.f32.mrb[0].mxu0
    %3337 = vdwg.mxu0
    %v3339 = vrot.slane %v3335, 4
    %v3341 = vadd.f32 %v3158, %v3339
    %v3342 = vxor.u32 %v3341, 2147483648
    %v3343 = vmul.f32 %v3342, 1.442695
    %v3344 = vpow.pop %v3343
    %v3345 = vadd.f32 %v3344, 1.0
    %v3346 = vrcp.pop %v3345
    %v3347 = vmul.f32 1.0, %v3346
    %v3348 = vtanh.pop %v3341
    %v3350 = vrot.slane %v3255, 2
    %v3352 = vmul.f32 %v3347, %v3350
    %3354 = vrot.lane.b32.xlu0 %v3348, 108
    %v3355 = vpop.permute.xlu0 %3354
    %v3357 = vmul.f32 %v3347, %v3355
    %3359 = vrot.lane.b32.xlu0 %v3357, 10
    %v3360 = vpop.permute.xlu0 %3359
    %v3362 = vadd.f32 %v3352, %v3360
    %v3363 = vtanh.pop %v3362
    %3365 = vrot.lane.b32.xlu0 %v3363, 20
    %v3366 = vpop.permute.xlu0 %3365
    %v3368 = vmul.f32 %v3347, %v3366
    %v3370 = vrot.slane %v3368, 4
    %3371 = vrot.lane.b32.xlu0 %v3370, 98
    %v3372 = vpop.permute.xlu0 %3371
    %v3373 = vsel %vm294, %v3372, 0
    %3375 = vmatprep.subr.mxu0 0.0
    %3376 = vmatpush1.msra.mxu0 %v3074
    %3377 = vmatprep.subr.mxu0 0.0
    %3378 = vmatpush1.msra.mxu0 %v3162
    %3379 = vmatprep.subr.mxu0 0.0
    %3380 = vmatpush1.msra.mxu0 0.0
    %3381 = vmatprep.subr.mxu0 0.0
    %3382 = vmatpush1.msra.mxu0 0.0
    %3383 = vmatprep.subr.mxu0 0.0
    %3384 = vmatpush1.msra.mxu0 0.0
    %3385 = vmatprep.subr.mxu0 0.0
    %3386 = vmatpush1.msra.mxu0 0.0
    %3387 = vmatprep.subr.mxu0 0.0
    %3388 = vmatpush1.msra.mxu0 0.0
    %3389 = vmatprep.subr.mxu0 0.0
    %3390 = vmatpush1.msra.mxu0 0.0
    %3391 = vmatprep.subr.mxu0 0.0
    %3392 = vmatpush1.msra.mxu0 0.0
    %3393 = vmatprep.subr.mxu0 0.0
    %3394 = vmatpush1.msra.mxu0 0.0
    %3395 = vmatprep.subr.mxu0 0.0
    %3396 = vmatpush1.msra.mxu0 0.0
    %3397 = vmatprep.subr.mxu0 0.0
    %3398 = vmatpush1.msra.mxu0 0.0
    %3399 = vmatprep.subr.mxu0 0.0
    %3400 = vmatpush1.msra.mxu0 0.0
    %3401 = vmatprep.subr.mxu0 0.0
    %3402 = vmatpush1.msra.mxu0 0.0
    %3403 = vmatprep.subr.mxu0 0.0
    %3404 = vmatpush1.msra.mxu0 0.0
    %3405 = vmatprep.subr.mxu0 0.0
    %3406 = vmatpush1.msra.mxu0 0.0
    %3407 = vmatprep.subr.mxu0 0.0
    %3408 = vmatpush1.msra.mxu0 0.0
    %3409 = vmatprep.subr.mxu0 0.0
    %3410 = vmatpush1.msra.mxu0 0.0
    %3411 = vmatprep.subr.mxu0 0.0
    %3412 = vmatpush1.msra.mxu0 0.0
    %3413 = vmatprep.subr.mxu0 0.0
    %3414 = vmatpush1.msra.mxu0 0.0
    %3415 = vmatprep.subr.mxu0 0.0
    %3416 = vmatpush1.msra.mxu0 0.0
    %3417 = vmatprep.subr.mxu0 0.0
    %3418 = vmatpush1.msra.mxu0 0.0
    %3419 = vmatprep.subr.mxu0 0.0
    %3420 = vmatpush1.msra.mxu0 0.0
    %3421 = vmatprep.subr.mxu0 0.0
    %3422 = vmatpush1.msra.mxu0 0.0
    %3423 = vmatprep.subr.mxu0 0.0
    %3424 = vmatpush1.msra.mxu0 0.0
    %3425 = vmatprep.subr.mxu0 0.0
    %3426 = vmatpush1.msra.mxu0 0.0
    %3427 = vmatprep.subr.mxu0 0.0
    %3428 = vmatpush1.msra.mxu0 0.0
    %3429 = vmatprep.subr.mxu0 0.0
    %3430 = vmatpush1.msra.mxu0 0.0
    %3431 = vmatprep.subr.mxu0 0.0
    %3432 = vmatpush1.msra.mxu0 0.0
    %3433 = vmatprep.subr.mxu0 0.0
    %3434 = vmatpush1.msra.mxu0 0.0
    %3435 = vmatprep.subr.mxu0 0.0
    %3436 = vmatpush1.msra.mxu0 0.0
    %3437 = vmatprep.subr.mxu0 0.0
    %3438 = vmatpush1.msra.mxu0 0.0
    %3439 = vmatprep.mubr.f32.mxu0 0.0
    %3440 = vmatmul.mubr.f32.gmra.mrb[0].mxu0 %v3373
    %v3441 = vpop.f32.mrb[0].mxu0
    %v3442 = vadd.f32 0.0, %v3441
    %v3443 = vpop.f32.mrb[0].mxu0
    %3444 = vdwg.mxu0
    %v3446 = vrot.slane %v3442, 6
    %v3448 = vadd.f32 %v3158, %v3446
    %v3449 = vxor.u32 %v3448, 2147483648
    %v3450 = vmul.f32 %v3449, 1.442695
    %v3451 = vpow.pop %v3450
    %v3452 = vadd.f32 %v3451, 1.0
    %v3453 = vrcp.pop %v3452
    %v3454 = vmul.f32 1.0, %v3453
    %v3455 = vtanh.pop %v3448
    %v3457 = vrot.slane %v3362, 2
    %v3459 = vmul.f32 %v3454, %v3457
    %3461 = vrot.lane.b32.xlu0 %v3455, 108
    %v3462 = vpop.permute.xlu0 %3461
    %v3464 = vmul.f32 %v3454, %v3462
    %3466 = vrot.lane.b32.xlu0 %v3464, 10
    %v3467 = vpop.permute.xlu0 %3466
    %v3469 = vadd.f32 %v3459, %v3467
    %v3470 = vtanh.pop %v3469
    %3472 = vrot.lane.b32.xlu0 %v3470, 20
    %v3473 = vpop.permute.xlu0 %3472
    %v3475 = vmul.f32 %v3454, %v3473
    %v3477 = vrot.slane %v3475, 2
    %3478 = vrot.lane.b32.xlu0 %v3477, 98
    %v3479 = vpop.permute.xlu0 %3478
    %v3480 = vsel %vm294, %v3479, 0
    %3482 = vmatprep.subr.mxu0 0.0
    %3483 = vmatpush1.msra.mxu0 %v3074
    %3484 = vmatprep.subr.mxu0 0.0
    %3485 = vmatpush1.msra.mxu0 %v3162
    %3486 = vmatprep.subr.mxu0 0.0
    %3487 = vmatpush1.msra.mxu0 0.0
    %3488 = vmatprep.subr.mxu0 0.0
    %3489 = vmatpush1.msra.mxu0 0.0
    %3490 = vmatprep.subr.mxu0 0.0
    %3491 = vmatpush1.msra.mxu0 0.0
    %3492 = vmatprep.subr.mxu0 0.0
    %3493 = vmatpush1.msra.mxu0 0.0
    %3494 = vmatprep.subr.mxu0 0.0
    %3495 = vmatpush1.msra.mxu0 0.0
    %3496 = vmatprep.subr.mxu0 0.0
    %3497 = vmatpush1.msra.mxu0 0.0
    %3498 = vmatprep.subr.mxu0 0.0
    %3499 = vmatpush1.msra.mxu0 0.0
    %3500 = vmatprep.subr.mxu0 0.0
    %3501 = vmatpush1.msra.mxu0 0.0
    %3502 = vmatprep.subr.mxu0 0.0
    %3503 = vmatpush1.msra.mxu0 0.0
    %3504 = vmatprep.subr.mxu0 0.0
    %3505 = vmatpush1.msra.mxu0 0.0
    %3506 = vmatprep.subr.mxu0 0.0
    %3507 = vmatpush1.msra.mxu0 0.0
    %3508 = vmatprep.subr.mxu0 0.0
    %3509 = vmatpush1.msra.mxu0 0.0
    %3510 = vmatprep.subr.mxu0 0.0
    %3511 = vmatpush1.msra.mxu0 0.0
    %3512 = vmatprep.subr.mxu0 0.0
    %3513 = vmatpush1.msra.mxu0 0.0
    %3514 = vmatprep.subr.mxu0 0.0
    %3515 = vmatpush1.msra.mxu0 0.0
    %3516 = vmatprep.subr.mxu0 0.0
    %3517 = vmatpush1.msra.mxu0 0.0
    %3518 = vmatprep.subr.mxu0 0.0
    %3519 = vmatpush1.msra.mxu0 0.0
    %3520 = vmatprep.subr.mxu0 0.0
    %3521 = vmatpush1.msra.mxu0 0.0
    %3522 = vmatprep.subr.mxu0 0.0
    %3523 = vmatpush1.msra.mxu0 0.0
    %3524 = vmatprep.subr.mxu0 0.0
    %3525 = vmatpush1.msra.mxu0 0.0
    %3526 = vmatprep.subr.mxu0 0.0
    %3527 = vmatpush1.msra.mxu0 0.0
    %3528 = vmatprep.subr.mxu0 0.0
    %3529 = vmatpush1.msra.mxu0 0.0
    %3530 = vmatprep.subr.mxu0 0.0
    %3531 = vmatpush1.msra.mxu0 0.0
    %3532 = vmatprep.subr.mxu0 0.0
    %3533 = vmatpush1.msra.mxu0 0.0
    %3534 = vmatprep.subr.mxu0 0.0
    %3535 = vmatpush1.msra.mxu0 0.0
    %3536 = vmatprep.subr.mxu0 0.0
    %3537 = vmatpush1.msra.mxu0 0.0
    %3538 = vmatprep.subr.mxu0 0.0
    %3539 = vmatpush1.msra.mxu0 0.0
    %3540 = vmatprep.subr.mxu0 0.0
    %3541 = vmatpush1.msra.mxu0 0.0
    %3542 = vmatprep.subr.mxu0 0.0
    %3543 = vmatpush1.msra.mxu0 0.0
    %3544 = vmatprep.subr.mxu0 0.0
    %3545 = vmatpush1.msra.mxu0 0.0
    %3546 = vmatprep.mubr.f32.mxu0 0.0
    %3547 = vmatmul.mubr.f32.gmra.mrb[0].mxu0 %v3480
    %v3548 = vpop.f32.mrb[0].mxu0
    %v3549 = vadd.f32 0.0, %v3548
    %v3550 = vpop.f32.mrb[0].mxu0
    %3551 = vdwg.mxu0
    %v3552 = vadd.f32 %v3158, %v3549
    %v3553 = vxor.u32 %v3552, 2147483648
    %v3554 = vmul.f32 %v3553, 1.442695
    %v3555 = vpow.pop %v3554
    %v3556 = vadd.f32 %v3555, 1.0
    %v3557 = vrcp.pop %v3556
    %v3558 = vmul.f32 1.0, %v3557
    %v3559 = vtanh.pop %v3552
    %v3561 = vrot.slane %v3469, 2
    %v3563 = vmul.f32 %v3558, %v3561
    %3565 = vrot.lane.b32.xlu0 %v3559, 108
    %v3566 = vpop.permute.xlu0 %3565
    %v3568 = vmul.f32 %v3558, %v3566
    %3570 = vrot.lane.b32.xlu0 %v3568, 10
    %v3571 = vpop.permute.xlu0 %3570
    %v3573 = vadd.f32 %v3563, %v3571
    %v3574 = vtanh.pop %v3573
    %3576 = vrot.lane.b32.xlu0 %v3574, 20
    %v3577 = vpop.permute.xlu0 %3576
    %v3579 = vmul.f32 %v3558, %v3577
    %3581 = vrot.lane.b32.xlu0 %v3579, 98
    %v3582 = vpop.permute.xlu0 %3581
    %v3583 = vsel %vm294, %v3582, 0
    %3585 = vmatprep.subr.mxu0 0.0
    %3586 = vmatpush1.msra.mxu0 %v3074
    %3587 = vmatprep.subr.mxu0 0.0
    %3588 = vmatpush1.msra.mxu0 %v3162
    %3589 = vmatprep.subr.mxu0 0.0
    %3590 = vmatpush1.msra.mxu0 0.0
    %3591 = vmatprep.subr.mxu0 0.0
    %3592 = vmatpush1.msra.mxu0 0.0
    %3593 = vmatprep.subr.mxu0 0.0
    %3594 = vmatpush1.msra.mxu0 0.0
    %3595 = vmatprep.subr.mxu0 0.0
    %3596 = vmatpush1.msra.mxu0 0.0
    %3597 = vmatprep.subr.mxu0 0.0
    %3598 = vmatpush1.msra.mxu0 0.0
    %3599 = vmatprep.subr.mxu0 0.0
    %3600 = vmatpush1.msra.mxu0 0.0
    %3601 = vmatprep.subr.mxu0 0.0
    %3602 = vmatpush1.msra.mxu0 0.0
    %3603 = vmatprep.subr.mxu0 0.0
    %3604 = vmatpush1.msra.mxu0 0.0
    %3605 = vmatprep.subr.mxu0 0.0
    %3606 = vmatpush1.msra.mxu0 0.0
    %3607 = vmatprep.subr.mxu0 0.0
    %3608 = vmatpush1.msra.mxu0 0.0
    %3609 = vmatprep.subr.mxu0 0.0
    %3610 = vmatpush1.msra.mxu0 0.0
    %3611 = vmatprep.subr.mxu0 0.0
    %3612 = vmatpush1.msra.mxu0 0.0
    %3613 = vmatprep.subr.mxu0 0.0
    %3614 = vmatpush1.msra.mxu0 0.0
    %3615 = vmatprep.subr.mxu0 0.0
    %3616 = vmatpush1.msra.mxu0 0.0
    %3617 = vmatprep.subr.mxu0 0.0
    %3618 = vmatpush1.msra.mxu0 0.0
    %3619 = vmatprep.subr.mxu0 0.0
    %3620 = vmatpush1.msra.mxu0 0.0
    %3621 = vmatprep.subr.mxu0 0.0
    %3622 = vmatpush1.msra.mxu0 0.0
    %3623 = vmatprep.subr.mxu0 0.0
    %3624 = vmatpush1.msra.mxu0 0.0
    %3625 = vmatprep.subr.mxu0 0.0
    %3626 = vmatpush1.msra.mxu0 0.0
    %3627 = vmatprep.subr.mxu0 0.0
    %3628 = vmatpush1.msra.mxu0 0.0
    %3629 = vmatprep.subr.mxu0 0.0
    %3630 = vmatpush1.msra.mxu0 0.0
    %3631 = vmatprep.subr.mxu0 0.0
    %3632 = vmatpush1.msra.mxu0 0.0
    %3633 = vmatprep.subr.mxu0 0.0
    %3634 = vmatpush1.msra.mxu0 0.0
    %3635 = vmatprep.subr.mxu0 0.0
    %3636 = vmatpush1.msra.mxu0 0.0
    %3637 = vmatprep.subr.mxu0 0.0
    %3638 = vmatpush1.msra.mxu0 0.0
    %3639 = vmatprep.subr.mxu0 0.0
    %3640 = vmatpush1.msra.mxu0 0.0
    %3641 = vmatprep.subr.mxu0 0.0
    %3642 = vmatpush1.msra.mxu0 0.0
    %3643 = vmatprep.subr.mxu0 0.0
    %3644 = vmatpush1.msra.mxu0 0.0
    %3645 = vmatprep.subr.mxu0 0.0
    %3646 = vmatpush1.msra.mxu0 0.0
    %3647 = vmatprep.subr.mxu0 0.0
    %3648 = vmatpush1.msra.mxu0 0.0
    %3649 = vmatprep.mubr.f32.mxu0 0.0
    %3650 = vmatmul.mubr.f32.gmra.mrb[0].mxu0 %v3583
    %v3651 = vpop.f32.mrb[0].mxu0
    %v3652 = vadd.f32 0.0, %v3651
    %v3653 = vpop.f32.mrb[0].mxu0
    %3654 = vdwg.mxu0
    %v3656 = vrot.slane %v3652, 2
    %v3658 = vadd.f32 %v3153, %v3656
    %v3659 = vxor.u32 %v3658, 2147483648
    %v3660 = vmul.f32 %v3659, 1.442695
    %v3661 = vpow.pop %v3660
    %v3662 = vadd.f32 %v3661, 1.0
    %v3663 = vrcp.pop %v3662
    %v3664 = vmul.f32 1.0, %v3663
    %v3665 = vtanh.pop %v3658
    %v3667 = vrot.slane %v3573, 2
    %v3669 = vmul.f32 %v3664, %v3667
    %3671 = vrot.lane.b32.xlu0 %v3665, 108
    %v3672 = vpop.permute.xlu0 %3671
    %v3674 = vmul.f32 %v3664, %v3672
    %3676 = vrot.lane.b32.xlu0 %v3674, 10
    %v3677 = vpop.permute.xlu0 %3676
    %v3679 = vadd.f32 %v3669, %v3677
    %v3680 = vtanh.pop %v3679
    %3682 = vrot.lane.b32.xlu0 %v3680, 20
    %v3683 = vpop.permute.xlu0 %3682
    %v3685 = vmul.f32 %v3664, %v3683
    %v3687 = vrot.slane %v3685, 6
    %3688 = vrot.lane.b32.xlu0 %v3687, 98
    %v3689 = vpop.permute.xlu0 %3688
    %v3690 = vsel %vm294, %v3689, 0
    %3692 = vmatprep.subr.mxu0 0.0
    %3693 = vmatpush1.msra.mxu0 %v3074
    %3694 = vmatprep.subr.mxu0 0.0
    %3695 = vmatpush1.msra.mxu0 %v3162
    %3696 = vmatprep.subr.mxu0 0.0
    %3697 = vmatpush1.msra.mxu0 0.0
    %3698 = vmatprep.subr.mxu0 0.0
    %3699 = vmatpush1.msra.mxu0 0.0
    %3700 = vmatprep.subr.mxu0 0.0
    %3701 = vmatpush1.msra.mxu0 0.0
    %3702 = vmatprep.subr.mxu0 0.0
    %3703 = vmatpush1.msra.mxu0 0.0
    %3704 = vmatprep.subr.mxu0 0.0
    %3705 = vmatpush1.msra.mxu0 0.0
    %3706 = vmatprep.subr.mxu0 0.0
    %3707 = vmatpush1.msra.mxu0 0.0
    %3708 = vmatprep.subr.mxu0 0.0
    %3709 = vmatpush1.msra.mxu0 0.0
    %3710 = vmatprep.subr.mxu0 0.0
    %3711 = vmatpush1.msra.mxu0 0.0
    %3712 = vmatprep.subr.mxu0 0.0
    %3713 = vmatpush1.msra.mxu0 0.0
    %3714 = vmatprep.subr.mxu0 0.0
    %3715 = vmatpush1.msra.mxu0 0.0
    %3716 = vmatprep.subr.mxu0 0.0
    %3717 = vmatpush1.msra.mxu0 0.0
    %3718 = vmatprep.subr.mxu0 0.0
    %3719 = vmatpush1.msra.mxu0 0.0
    %3720 = vmatprep.subr.mxu0 0.0
    %3721 = vmatpush1.msra.mxu0 0.0
    %3722 = vmatprep.subr.mxu0 0.0
    %3723 = vmatpush1.msra.mxu0 0.0
    %3724 = vmatprep.subr.mxu0 0.0
    %3725 = vmatpush1.msra.mxu0 0.0
    %3726 = vmatprep.subr.mxu0 0.0
    %3727 = vmatpush1.msra.mxu0 0.0
    %3728 = vmatprep.subr.mxu0 0.0
    %3729 = vmatpush1.msra.mxu0 0.0
    %3730 = vmatprep.subr.mxu0 0.0
    %3731 = vmatpush1.msra.mxu0 0.0
    %3732 = vmatprep.subr.mxu0 0.0
    %3733 = vmatpush1.msra.mxu0 0.0
    %3734 = vmatprep.subr.mxu0 0.0
    %3735 = vmatpush1.msra.mxu0 0.0
    %3736 = vmatprep.subr.mxu0 0.0
    %3737 = vmatpush1.msra.mxu0 0.0
    %3738 = vmatprep.subr.mxu0 0.0
    %3739 = vmatpush1.msra.mxu0 0.0
    %3740 = vmatprep.subr.mxu0 0.0
    %3741 = vmatpush1.msra.mxu0 0.0
    %3742 = vmatprep.subr.mxu0 0.0
    %3743 = vmatpush1.msra.mxu0 0.0
    %3744 = vmatprep.subr.mxu0 0.0
    %3745 = vmatpush1.msra.mxu0 0.0
    %3746 = vmatprep.subr.mxu0 0.0
    %3747 = vmatpush1.msra.mxu0 0.0
    %3748 = vmatprep.subr.mxu0 0.0
    %3749 = vmatpush1.msra.mxu0 0.0
    %3750 = vmatprep.subr.mxu0 0.0
    %3751 = vmatpush1.msra.mxu0 0.0
    %3752 = vmatprep.subr.mxu0 0.0
    %3753 = vmatpush1.msra.mxu0 0.0
    %3754 = vmatprep.subr.mxu0 0.0
    %3755 = vmatpush1.msra.mxu0 0.0
    %3756 = vmatprep.mubr.f32.mxu0 0.0
    %3757 = vmatmul.mubr.f32.gmra.mrb[0].mxu0 %v3690
    %v3758 = vpop.f32.mrb[0].mxu0
    %v3759 = vadd.f32 0.0, %v3758
    %v3760 = vpop.f32.mrb[0].mxu0
    %3761 = vdwg.mxu0
    %v3763 = vrot.slane %v3759, 4
    %v3765 = vadd.f32 %v3153, %v3763
    %v3766 = vxor.u32 %v3765, 2147483648
    %v3767 = vmul.f32 %v3766, 1.442695
    %v3768 = vpow.pop %v3767
    %v3769 = vadd.f32 %v3768, 1.0
    %v3770 = vrcp.pop %v3769
    %v3771 = vmul.f32 1.0, %v3770
    %v3772 = vtanh.pop %v3765
    %v3774 = vrot.slane %v3679, 2
    %v3776 = vmul.f32 %v3771, %v3774
    %3778 = vrot.lane.b32.xlu0 %v3772, 108
    %v3779 = vpop.permute.xlu0 %3778
    %v3781 = vmul.f32 %v3771, %v3779
    %3783 = vrot.lane.b32.xlu0 %v3781, 10
    %v3784 = vpop.permute.xlu0 %3783
    %v3786 = vadd.f32 %v3776, %v3784
    %v3787 = vtanh.pop %v3786
    %3789 = vrot.lane.b32.xlu0 %v3787, 20
    %v3790 = vpop.permute.xlu0 %3789
    %v3792 = vmul.f32 %v3771, %v3790
    %v3794 = vrot.slane %v3792, 4
    %3795 = vrot.lane.b32.xlu0 %v3794, 98
    %v3796 = vpop.permute.xlu0 %3795
    %v3797 = vsel %vm294, %v3796, 0
    %3799 = vmatprep.subr.mxu0 0.0
    %3800 = vmatpush1.msra.mxu0 %v3074
    %3801 = vmatprep.subr.mxu0 0.0
    %3802 = vmatpush1.msra.mxu0 %v3162
    %3803 = vmatprep.subr.mxu0 0.0
    %3804 = vmatpush1.msra.mxu0 0.0
    %3805 = vmatprep.subr.mxu0 0.0
    %3806 = vmatpush1.msra.mxu0 0.0
    %3807 = vmatprep.subr.mxu0 0.0
    %3808 = vmatpush1.msra.mxu0 0.0
    %3809 = vmatprep.subr.mxu0 0.0
    %3810 = vmatpush1.msra.mxu0 0.0
    %3811 = vmatprep.subr.mxu0 0.0
    %3812 = vmatpush1.msra.mxu0 0.0
    %3813 = vmatprep.subr.mxu0 0.0
    %3814 = vmatpush1.msra.mxu0 0.0
    %3815 = vmatprep.subr.mxu0 0.0
    %3816 = vmatpush1.msra.mxu0 0.0
    %3817 = vmatprep.subr.mxu0 0.0
    %3818 = vmatpush1.msra.mxu0 0.0
    %3819 = vmatprep.subr.mxu0 0.0
    %3820 = vmatpush1.msra.mxu0 0.0
    %3821 = vmatprep.subr.mxu0 0.0
    %3822 = vmatpush1.msra.mxu0 0.0
    %3823 = vmatprep.subr.mxu0 0.0
    %3824 = vmatpush1.msra.mxu0 0.0
    %3825 = vmatprep.subr.mxu0 0.0
    %3826 = vmatpush1.msra.mxu0 0.0
    %3827 = vmatprep.subr.mxu0 0.0
    %3828 = vmatpush1.msra.mxu0 0.0
    %3829 = vmatprep.subr.mxu0 0.0
    %3830 = vmatpush1.msra.mxu0 0.0
    %3831 = vmatprep.subr.mxu0 0.0
    %3832 = vmatpush1.msra.mxu0 0.0
    %3833 = vmatprep.subr.mxu0 0.0
    %3834 = vmatpush1.msra.mxu0 0.0
    %3835 = vmatprep.subr.mxu0 0.0
    %3836 = vmatpush1.msra.mxu0 0.0
    %3837 = vmatprep.subr.mxu0 0.0
    %3838 = vmatpush1.msra.mxu0 0.0
    %3839 = vmatprep.subr.mxu0 0.0
    %3840 = vmatpush1.msra.mxu0 0.0
    %3841 = vmatprep.subr.mxu0 0.0
    %3842 = vmatpush1.msra.mxu0 0.0
    %3843 = vmatprep.subr.mxu0 0.0
    %3844 = vmatpush1.msra.mxu0 0.0
    %3845 = vmatprep.subr.mxu0 0.0
    %3846 = vmatpush1.msra.mxu0 0.0
    %3847 = vmatprep.subr.mxu0 0.0
    %3848 = vmatpush1.msra.mxu0 0.0
    %3849 = vmatprep.subr.mxu0 0.0
    %3850 = vmatpush1.msra.mxu0 0.0
    %3851 = vmatprep.subr.mxu0 0.0
    %3852 = vmatpush1.msra.mxu0 0.0
    %3853 = vmatprep.subr.mxu0 0.0
    %3854 = vmatpush1.msra.mxu0 0.0
    %3855 = vmatprep.subr.mxu0 0.0
    %3856 = vmatpush1.msra.mxu0 0.0
    %3857 = vmatprep.subr.mxu0 0.0
    %3858 = vmatpush1.msra.mxu0 0.0
    %3859 = vmatprep.subr.mxu0 0.0
    %3860 = vmatpush1.msra.mxu0 0.0
    %3861 = vmatprep.subr.mxu0 0.0
    %3862 = vmatpush1.msra.mxu0 0.0
    %3863 = vmatprep.mubr.f32.mxu0 0.0
    %3864 = vmatmul.mubr.f32.gmra.mrb[0].mxu0 %v3797
    %v3865 = vpop.f32.mrb[0].mxu0
    %v3866 = vadd.f32 0.0, %v3865
    %v3867 = vpop.f32.mrb[0].mxu0
    %3868 = vdwg.mxu0
    %v3870 = vrot.slane %v3866, 6
    %v3872 = vadd.f32 %v3153, %v3870
    %v3873 = vxor.u32 %v3872, 2147483648
    %v3874 = vmul.f32 %v3873, 1.442695
    %v3875 = vpow.pop %v3874
    %v3876 = vadd.f32 %v3875, 1.0
    %v3877 = vrcp.pop %v3876
    %v3878 = vmul.f32 1.0, %v3877
    %v3879 = vtanh.pop %v3872
    %v3881 = vrot.slane %v3786, 2
    %v3883 = vmul.f32 %v3878, %v3881
    %3885 = vrot.lane.b32.xlu0 %v3879, 108
    %v3886 = vpop.permute.xlu0 %3885
    %v3888 = vmul.f32 %v3878, %v3886
    %3890 = vrot.lane.b32.xlu0 %v3888, 10
    %v3891 = vpop.permute.xlu0 %3890
    %v3893 = vadd.f32 %v3883, %v3891
    %v3894 = vtanh.pop %v3893
    %3896 = vrot.lane.b32.xlu0 %v3894, 20
    %v3897 = vpop.permute.xlu0 %3896
    %v3899 = vmul.f32 %v3878, %v3897
    %v3901 = vrot.slane %v3899, 2
    %3902 = vrot.lane.b32.xlu0 %v3901, 98
    %v3903 = vpop.permute.xlu0 %3902
    %v3904 = vsel %vm294, %v3903, 0
    %3906 = vmatprep.subr.mxu0 0.0
    %3907 = vmatpush1.msra.mxu0 %v3074
    %3908 = vmatprep.subr.mxu0 0.0
    %3909 = vmatpush1.msra.mxu0 %v3162
    %3910 = vmatprep.subr.mxu0 0.0
    %3911 = vmatpush1.msra.mxu0 0.0
    %3912 = vmatprep.subr.mxu0 0.0
    %3913 = vmatpush1.msra.mxu0 0.0
    %3914 = vmatprep.subr.mxu0 0.0
    %3915 = vmatpush1.msra.mxu0 0.0
    %3916 = vmatprep.subr.mxu0 0.0
    %3917 = vmatpush1.msra.mxu0 0.0
    %3918 = vmatprep.subr.mxu0 0.0
    %3919 = vmatpush1.msra.mxu0 0.0
    %3920 = vmatprep.subr.mxu0 0.0
    %3921 = vmatpush1.msra.mxu0 0.0
    %3922 = vmatprep.subr.mxu0 0.0
    %3923 = vmatpush1.msra.mxu0 0.0
    %3924 = vmatprep.subr.mxu0 0.0
    %3925 = vmatpush1.msra.mxu0 0.0
    %3926 = vmatprep.subr.mxu0 0.0
    %3927 = vmatpush1.msra.mxu0 0.0
    %3928 = vmatprep.subr.mxu0 0.0
    %3929 = vmatpush1.msra.mxu0 0.0
    %3930 = vmatprep.subr.mxu0 0.0
    %3931 = vmatpush1.msra.mxu0 0.0
    %3932 = vmatprep.subr.mxu0 0.0
    %3933 = vmatpush1.msra.mxu0 0.0
    %3934 = vmatprep.subr.mxu0 0.0
    %3935 = vmatpush1.msra.mxu0 0.0
    %3936 = vmatprep.subr.mxu0 0.0
    %3937 = vmatpush1.msra.mxu0 0.0
    %3938 = vmatprep.subr.mxu0 0.0
    %3939 = vmatpush1.msra.mxu0 0.0
    %3940 = vmatprep.subr.mxu0 0.0
    %3941 = vmatpush1.msra.mxu0 0.0
    %3942 = vmatprep.subr.mxu0 0.0
    %3943 = vmatpush1.msra.mxu0 0.0
    %3944 = vmatprep.subr.mxu0 0.0
    %3945 = vmatpush1.msra.mxu0 0.0
    %3946 = vmatprep.subr.mxu0 0.0
    %3947 = vmatpush1.msra.mxu0 0.0
    %3948 = vmatprep.subr.mxu0 0.0
    %3949 = vmatpush1.msra.mxu0 0.0
    %3950 = vmatprep.subr.mxu0 0.0
    %3951 = vmatpush1.msra.mxu0 0.0
    %3952 = vmatprep.subr.mxu0 0.0
    %3953 = vmatpush1.msra.mxu0 0.0
    %3954 = vmatprep.subr.mxu0 0.0
    %3955 = vmatpush1.msra.mxu0 0.0
    %3956 = vmatprep.subr.mxu0 0.0
    %3957 = vmatpush1.msra.mxu0 0.0
    %3958 = vmatprep.subr.mxu0 0.0
    %3959 = vmatpush1.msra.mxu0 0.0
    %3960 = vmatprep.subr.mxu0 0.0
    %3961 = vmatpush1.msra.mxu0 0.0
    %3962 = vmatprep.subr.mxu0 0.0
    %3963 = vmatpush1.msra.mxu0 0.0
    %3964 = vmatprep.subr.mxu0 0.0
    %3965 = vmatpush1.msra.mxu0 0.0
    %3966 = vmatprep.subr.mxu0 0.0
    %3967 = vmatpush1.msra.mxu0 0.0
    %3968 = vmatprep.subr.mxu0 0.0
    %3969 = vmatpush1.msra.mxu0 0.0
    %3970 = vmatprep.mubr.f32.mxu0 0.0
    %3971 = vmatmul.mubr.f32.gmra.mrb[0].mxu0 %v3904
    %v3972 = vpop.f32.mrb[0].mxu0
    %v3973 = vadd.f32 0.0, %v3972
    %v3974 = vpop.f32.mrb[0].mxu0
    %3975 = vdwg.mxu0
    %v3976 = vadd.f32 %v3153, %v3973
    %v3977 = vxor.u32 %v3976, 2147483648
    %v3978 = vmul.f32 %v3977, 1.442695
    %v3979 = vpow.pop %v3978
    %v3980 = vadd.f32 %v3979, 1.0
    %v3981 = vrcp.pop %v3980
    %v3982 = vmul.f32 1.0, %v3981
    %v3983 = vtanh.pop %v3976
    %v3985 = vrot.slane %v3893, 2
    %v3987 = vmul.f32 %v3982, %v3985
    %3989 = vrot.lane.b32.xlu0 %v3983, 108
    %v3990 = vpop.permute.xlu0 %3989
    %v3992 = vmul.f32 %v3982, %v3990
    %3994 = vrot.lane.b32.xlu0 %v3992, 10
    %v3995 = vpop.permute.xlu0 %3994
    %v3997 = vadd.f32 %v3987, %v3995
    %v3998 = vtanh.pop %v3997
    %4000 = vrot.lane.b32.xlu0 %v3998, 20
    %v4001 = vpop.permute.xlu0 %4000
    %v4003 = vmul.f32 %v3982, %v4001
    %4006 = vrot.lane.b32.xlu0 %v4003, 108
    %v4007 = vpop.permute.xlu0 %4006
    %v4009 = vsel %vm294, %v2329, %v4007
    %4010 = vrot.lane.b32.xlu0 %v2432, 98
    %v4011 = vpop.permute.xlu0 %4010
    %4013 = vrot.lane.b32.xlu0 %v3899, 108
    %v4014 = vpop.permute.xlu0 %4013
    %v4016 = vsel %vm294, %v4011, %v4014
    %4017 = vrot.lane.b32.xlu0 %v2539, 98
    %v4018 = vpop.permute.xlu0 %4017
    %4020 = vrot.lane.b32.xlu0 %v3792, 108
    %v4021 = vpop.permute.xlu0 %4020
    %v4023 = vsel %vm294, %v4018, %v4021
    %4024 = vrot.lane.b32.xlu0 %v2646, 98
    %v4025 = vpop.permute.xlu0 %4024
    %4027 = vrot.lane.b32.xlu0 %v3685, 108
    %v4028 = vpop.permute.xlu0 %4027
    %v4030 = vsel %vm294, %v4025, %v4028
    %4032 = vrot.lane.b32.xlu0 %v3579, 108
    %v4033 = vpop.permute.xlu0 %4032
    %v4035 = vsel %vm294, %v2753, %v4033
    %4036 = vrot.lane.b32.xlu0 %v2856, 98
    %v4037 = vpop.permute.xlu0 %4036
    %4039 = vrot.lane.b32.xlu0 %v3475, 108
    %v4040 = vpop.permute.xlu0 %4039
    %v4042 = vsel %vm294, %v4037, %v4040
    %4043 = vrot.lane.b32.xlu0 %v2963, 98
    %v4044 = vpop.permute.xlu0 %4043
    %4046 = vrot.lane.b32.xlu0 %v3368, 108
    %v4047 = vpop.permute.xlu0 %4046
    %v4049 = vsel %vm294, %v4044, %v4047
    %4051 = vrot.lane.b32.xlu0 %v3070, 98
    %v4052 = vpop.permute.xlu0 %4051
    %4054 = vrot.lane.b32.xlu0 %v3261, 108
    %v4055 = vpop.permute.xlu0 %4054
    %v4057 = vsel %vm294, %v4052, %v4055
    %v4058 = vsel %vm298, %v4009, %v4016
    %v4059 = vsel %vm2125, %v4058, %v4023
    %v4060 = vsel %vm2127, %v4059, %v4030
    %v4061 = vsel %vm298, %v4035, %v4042
    %v4062 = vsel %vm2125, %v4061, %v4049
    %v4063 = vsel %vm2127, %v4062, %v4057
    %v4064 = vld [vmem:[%s14] sm:$0x1]
    %v4065 = vld [vmem:[%s17] sm:$0x1]
    %v4066 = vadd.f32 %v4065, 1e-05
    %v4067 = vrsqrt.pop %v4066
    %v4068 = vmul.f32 %v4064, %v4067
    %v4069 = vld [vmem:[%s15] sm:$0x1]
    %v4070 = vld [vmem:[%s16] sm:$0x1]
    %v4071 = vmul.f32 %v4070, %v4068
    %v4072 = vsub.f32 %v4069, %v4071
    %v4074 = vlaneseq
    %v4075 = vshrl.u32 %v4074, 7
    %v4076 = vsub.s32 0, %v4075
    %v4077 = vrot.slane %v4068, %v4076
    %v4079 = vmul.f32 %v4060, %v4077
    %v4080 = vmul.f32 %v4063, %v4077
    %v4082 = vlaneseq
    %v4083 = vshrl.u32 %v4082, 7
    %v4084 = vsub.s32 0, %v4083
    %v4085 = vrot.slane %v4072, %v4084
    %v4087 = vadd.f32 %v4079, %v4085
    %v4088 = vadd.f32 %v4080, %v4085
    %v4089 = vmax.f32 %v4087, 0.0
    %v4090 = vmax.f32 %v4088, 0.0
    %v4091 = vld [vmem:[%s18] sm:$0xff]
    %v4092 = vld [vmem:[%s18 + $0x8] sm:$0xff]
    %v4093 = vld [vmem:[%s18 + $0x10] sm:$0xf]
    %v4095 = vsel %vm2144, %v4089, 0
    %v4098 = vsel %vm2144, %v4090, 0
    %v4101 = vsel %vm2125, %v4093, 0
    %4103 = vmatprep.subr.mxu0 0.0
    %4104 = vmatpush1.msra.mxu0 %v4091
    %4105 = vmatprep.subr.mxu0 0.0
    %4106 = vmatpush1.msra.mxu0 %v4092
    %4107 = vmatprep.subr.mxu0 0.0
    %4108 = vmatpush1.msra.mxu0 %v4101
    %4109 = vmatprep.subr.mxu0 0.0
    %4110 = vmatpush1.msra.mxu0 0.0
    %4111 = vmatprep.subr.mxu0 0.0
    %4112 = vmatpush1.msra.mxu0 0.0
    %4113 = vmatprep.subr.mxu0 0.0
    %4114 = vmatpush1.msra.mxu0 0.0
    %4115 = vmatprep.subr.mxu0 0.0
    %4116 = vmatpush1.msra.mxu0 0.0
    %4117 = vmatprep.subr.mxu0 0.0
    %4118 = vmatpush1.msra.mxu0 0.0
    %4119 = vmatprep.subr.mxu0 0.0
    %4120 = vmatpush1.msra.mxu0 0.0
    %4121 = vmatprep.subr.mxu0 0.0
    %4122 = vmatpush1.msra.mxu0 0.0
    %4123 = vmatprep.subr.mxu0 0.0
    %4124 = vmatpush1.msra.mxu0 0.0
    %4125 = vmatprep.subr.mxu0 0.0
    %4126 = vmatpush1.msra.mxu0 0.0
    %4127 = vmatprep.subr.mxu0 0.0
    %4128 = vmatpush1.msra.mxu0 0.0
    %4129 = vmatprep.subr.mxu0 0.0
    %4130 = vmatpush1.msra.mxu0 0.0
    %4131 = vmatprep.subr.mxu0 0.0
    %4132 = vmatpush1.msra.mxu0 0.0
    %4133 = vmatprep.subr.mxu0 0.0
    %4134 = vmatpush1.msra.mxu0 0.0
    %4135 = vmatprep.subr.mxu0 0.0
    %4136 = vmatpush1.msra.mxu0 0.0
    %4137 = vmatprep.subr.mxu0 0.0
    %4138 = vmatpush1.msra.mxu0 0.0
    %4139 = vmatprep.subr.mxu0 0.0
    %4140 = vmatpush1.msra.mxu0 0.0
    %4141 = vmatprep.subr.mxu0 0.0
    %4142 = vmatpush1.msra.mxu0 0.0
    %4143 = vmatprep.subr.mxu0 0.0
    %4144 = vmatpush1.msra.mxu0 0.0
    %4145 = vmatprep.subr.mxu0 0.0
    %4146 = vmatpush1.msra.mxu0 0.0
    %4147 = vmatprep.subr.mxu0 0.0
    %4148 = vmatpush1.msra.mxu0 0.0
    %4149 = vmatprep.subr.mxu0 0.0
    %4150 = vmatpush1.msra.mxu0 0.0
    %4151 = vmatprep.subr.mxu0 0.0
    %4152 = vmatpush1.msra.mxu0 0.0
    %4153 = vmatprep.subr.mxu0 0.0
    %4154 = vmatpush1.msra.mxu0 0.0
    %4155 = vmatprep.subr.mxu0 0.0
    %4156 = vmatpush1.msra.mxu0 0.0
    %4157 = vmatprep.subr.mxu0 0.0
    %4158 = vmatpush1.msra.mxu0 0.0
    %4159 = vmatprep.subr.mxu0 0.0
    %4160 = vmatpush1.msra.mxu0 0.0
    %4161 = vmatprep.subr.mxu0 0.0
    %4162 = vmatpush1.msra.mxu0 0.0
    %4163 = vmatprep.subr.mxu0 0.0
    %4164 = vmatpush1.msra.mxu0 0.0
    %4165 = vmatprep.subr.mxu0 0.0
    %4166 = vmatpush1.msra.mxu0 0.0
    %4167 = vmatprep.mubr.f32.mxu0 0.0
    %4168 = vmatmul.mubr.f32.gmra.mrb[0].mxu0 %v4095
    %v4169 = vpop.f32.mrb[0].mxu0
    %v4170 = vadd.f32 0.0, %v4169
    %v4171 = vpop.f32.mrb[0].mxu0
    %4172 = vmatprep.mubr.f32.mxu0 0.0
    %4173 = vmatmul.mubr.f32.gmra.mrb[0].mxu0 %v4098
    %v4174 = vpop.f32.mrb[0].mxu0
    %v4175 = vadd.f32 0.0, %v4174
    %v4176 = vpop.f32.mrb[0].mxu0
    %4177 = vdwg.mxu0
    %v4178 = vld [vmem:[%s19] sm:$0x1]
    %v4179 = vld [vmem:[%s22] sm:$0x1]
    %v4180 = vadd.f32 %v4179, 1e-05
    %v4181 = vrsqrt.pop %v4180
    %v4182 = vmul.f32 %v4178, %v4181
    %v4183 = vld [vmem:[%s20] sm:$0x1]
    %v4184 = vld [vmem:[%s21] sm:$0x1]
    %v4185 = vmul.f32 %v4184, %v4182
    %v4186 = vsub.f32 %v4183, %v4185
    %v4187 = vld [vmem:[#allocation6] sm:$0x3]
    %v4189 = vlaneseq
    %v4190 = vshrl.u32 %v4189, 7
    %v4191 = vsub.s32 0, %v4190
    %v4192 = vrot.slane %v4182, %v4191
    %v4194 = vmul.f32 %v4187, %v4192
    %v4196 = vlaneseq
    %v4197 = vshrl.u32 %v4196, 7
    %v4198 = vsub.s32 0, %v4197
    %v4199 = vrot.slane %v4186, %v4198
    %v4201 = vadd.f32 %v4194, %v4199
    %v4202 = vmax.f32 %v4201, 0.0
    %v4203 = vld [vmem:[%s23] sm:$0xf]
    %vm4204 = vcmask 31744
    %v4206 = vsel %vm4204, %v4202, 0
    %v4209 = vsel %vm2125, %v4203, 0
    %4211 = vmatprep.subr.mxu0 0.0
    %4212 = vmatpush1.msra.mxu0 %v4209
    %4213 = vmatprep.subr.mxu0 0.0
    %4214 = vmatpush1.msra.mxu0 0.0
    %4215 = vmatprep.subr.mxu0 0.0
    %4216 = vmatpush1.msra.mxu0 0.0
    %4217 = vmatprep.subr.mxu0 0.0
    %4218 = vmatpush1.msra.mxu0 0.0
    %4219 = vmatprep.subr.mxu0 0.0
    %4220 = vmatpush1.msra.mxu0 0.0
    %4221 = vmatprep.subr.mxu0 0.0
    %4222 = vmatpush1.msra.mxu0 0.0
    %4223 = vmatprep.subr.mxu0 0.0
    %4224 = vmatpush1.msra.mxu0 0.0
    %4225 = vmatprep.subr.mxu0 0.0
    %4226 = vmatpush1.msra.mxu0 0.0
    %4227 = vmatprep.subr.mxu0 0.0
    %4228 = vmatpush1.msra.mxu0 0.0
    %4229 = vmatprep.subr.mxu0 0.0
    %4230 = vmatpush1.msra.mxu0 0.0
    %4231 = vmatprep.subr.mxu0 0.0
    %4232 = vmatpush1.msra.mxu0 0.0
    %4233 = vmatprep.subr.mxu0 0.0
    %4234 = vmatpush1.msra.mxu0 0.0
    %4235 = vmatprep.subr.mxu0 0.0
    %4236 = vmatpush1.msra.mxu0 0.0
    %4237 = vmatprep.subr.mxu0 0.0
    %4238 = vmatpush1.msra.mxu0 0.0
    %4239 = vmatprep.subr.mxu0 0.0
    %4240 = vmatpush1.msra.mxu0 0.0
    %4241 = vmatprep.subr.mxu0 0.0
    %4242 = vmatpush1.msra.mxu0 0.0
    %4243 = vmatprep.subr.mxu0 0.0
    %4244 = vmatpush1.msra.mxu0 0.0
    %4245 = vmatprep.subr.mxu0 0.0
    %4246 = vmatpush1.msra.mxu0 0.0
    %4247 = vmatprep.subr.mxu0 0.0
    %4248 = vmatpush1.msra.mxu0 0.0
    %4249 = vmatprep.subr.mxu0 0.0
    %4250 = vmatpush1.msra.mxu0 0.0
    %4251 = vmatprep.subr.mxu0 0.0
    %4252 = vmatpush1.msra.mxu0 0.0
    %4253 = vmatprep.subr.mxu0 0.0
    %4254 = vmatpush1.msra.mxu0 0.0
    %4255 = vmatprep.subr.mxu0 0.0
    %4256 = vmatpush1.msra.mxu0 0.0
    %4257 = vmatprep.subr.mxu0 0.0
    %4258 = vmatpush1.msra.mxu0 0.0
    %4259 = vmatprep.subr.mxu0 0.0
    %4260 = vmatpush1.msra.mxu0 0.0
    %4261 = vmatprep.subr.mxu0 0.0
    %4262 = vmatpush1.msra.mxu0 0.0
    %4263 = vmatprep.subr.mxu0 0.0
    %4264 = vmatpush1.msra.mxu0 0.0
    %4265 = vmatprep.subr.mxu0 0.0
    %4266 = vmatpush1.msra.mxu0 0.0
    %4267 = vmatprep.subr.mxu0 0.0
    %4268 = vmatpush1.msra.mxu0 0.0
    %4269 = vmatprep.subr.mxu0 0.0
    %4270 = vmatpush1.msra.mxu0 0.0
    %4271 = vmatprep.subr.mxu0 0.0
    %4272 = vmatpush1.msra.mxu0 0.0
    %4273 = vmatprep.subr.mxu0 0.0
    %4274 = vmatpush1.msra.mxu0 0.0
    %4275 = vmatprep.mubr.f32.mxu0 0.0
    %4276 = vmatmul.mubr.f32.gmra.mrb[0].mxu0 %v4206
    %v4277 = vpop.f32.mrb[0].mxu0
    %v4278 = vadd.f32 0.0, %v4277
    %v4279 = vpop.f32.mrb[0].mxu0
    %4280 = vdwg.mxu0
    %v4281 = vadd.f32 %v4170, %v4278
    %v4282 = vld [vmem:[#allocation2] sm:$0x1]
    %v4284 = vlaneseq
    %v4285 = vshrl.u32 %v4284, 7
    %v4286 = vsub.s32 0, %v4285
    %v4287 = vrot.slane %v4282, %v4286
    %v4289 = vadd.f32 %v4281, %v4287
    %v4290 = vmax.f32 %v4289, 0.0
    %v4292 = vrot.slane %v4278, 6
    %v4294 = vadd.f32 %v4170, %v4292
    %v4295 = vadd.f32 %v4294, %v4287
    %v4296 = vmax.f32 %v4295, 0.0
    %v4297 = vrot.slane %v4278, 4
    %v4299 = vadd.f32 %v4170, %v4297
    %v4300 = vadd.f32 %v4299, %v4287
    %v4301 = vmax.f32 %v4300, 0.0
    %v4302 = vrot.slane %v4278, 2
    %v4304 = vadd.f32 %v4170, %v4302
    %v4305 = vadd.f32 %v4304, %v4287
    %v4306 = vmax.f32 %v4305, 0.0
    %v4307 = vadd.f32 %v4175, %v4278
    %v4308 = vadd.f32 %v4307, %v4287
    %v4309 = vmax.f32 %v4308, 0.0
    %v4310 = vadd.f32 %v4175, %v4292
    %v4311 = vadd.f32 %v4310, %v4287
    %v4312 = vmax.f32 %v4311, 0.0
    %v4313 = vadd.f32 %v4175, %v4297
    %v4314 = vadd.f32 %v4313, %v4287
    %v4315 = vmax.f32 %v4314, 0.0
    %v4316 = vadd.f32 %v4175, %v4302
    %v4317 = vadd.f32 %v4316, %v4287
    %v4318 = vmax.f32 %v4317, 0.0
    %v4320 = vrot.slane %v4296, 2
    %4321 = vrot.lane.b32.xlu0 %v4320, 1
    %v4322 = vpop.permute.xlu0 %4321
    %v4325 = vrot.slane %v4301, 4
    %4326 = vrot.lane.b32.xlu0 %v4325, 2
    %v4327 = vpop.permute.xlu0 %4326
    %v4330 = vrot.slane %v4306, 6
    %4331 = vrot.lane.b32.xlu0 %v4330, 3
    %v4332 = vpop.permute.xlu0 %4331
    %4335 = vrot.lane.b32.xlu0 %v4309, 4
    %v4336 = vpop.permute.xlu0 %4335
    %v4339 = vrot.slane %v4312, 2
    %4340 = vrot.lane.b32.xlu0 %v4339, 5
    %v4341 = vpop.permute.xlu0 %4340
    %v4344 = vrot.slane %v4315, 4
    %4345 = vrot.lane.b32.xlu0 %v4344, 6
    %v4346 = vpop.permute.xlu0 %4345
    %v4349 = vrot.slane %v4318, 6
    %4350 = vrot.lane.b32.xlu0 %v4349, 7
    %v4351 = vpop.permute.xlu0 %4350
    %vm4353 = vcmask 7168
    %v4354 = vsel %vm4353, %v4290, %v4322
    %vm4355 = vcmask 15360
    %v4356 = vsel %vm4355, %v4354, %v4327
    %vm4357 = vcmask 23552
    %v4358 = vsel %vm4357, %v4356, %v4332
    %v4359 = vsel %vm4204, %v4358, %v4336
    %vm4360 = vcmask 39936
    %v4361 = vsel %vm4360, %v4359, %v4341
    %vm4362 = vcmask 48128
    %v4363 = vsel %vm4362, %v4361, %v4346
    %vm4364 = vcmask 56320
    %v4365 = vsel %vm4364, %v4363, %v4351
    %vm4366 = vcmask 58368
    %4367 = vst.msk [vmem:[#allocation18] sm:$0x3] %vm4366, %v4365
    // Predicated region
    $region138: #{tpu_custom_call.1} parent=1 // pred_check
      _
    $region139: #{tpu_custom_call.1} parent=1 // pred_check_branch
      %4369 = sbr.rel (0) target = $region141
    $region140: #{tpu_custom_call.1} parent=1 // pred_region
      %s4371 = ssub.s32 32, 32
      %4372 = vsyncadd [#allocation5], %s4371
      %s4374 = sshll.u32 [#allocation18], 4
      %s4375 = int_to_ptr.vmem [resolvable:$true] %s4374
      %4377 = dma.vmem_to_hbm [thread:$0]  %s4375, 32, %s25, [#allocation5]
    $region141: #{tpu_custom_call.1} parent=1 // pred_fallthru
      _
    // Predicated region
    $region142: #{tpu_custom_call.1} parent=1 // pred_check
      _
    $region143: #{tpu_custom_call.1} parent=1 // pred_check_branch
      %4379 = sbr.rel (0) target = $region145
    $region144: #{tpu_custom_call.1} parent=1 // pred_region
      %4380 = dma.done [#allocation5], 32
    $region145: #{tpu_custom_call.1} parent=1 // pred_fallthru
      _
    %4381 = vsyncpa [#allocation4], 1
    %4382 = vsyncpa [#allocation7], 1
    %4383 = vsyncpa [#allocation10], 1
    %4384 = vsyncpa [#allocation13], 1
    %4385 = vsyncpa [#allocation16], 1
    %4386 = vsyncpa [#allocation5], 1

</llo_original>
